<compile_context>
chip_gen: v5e
topology: v5e:2x2
jax: 0.10.0
libtpu: 0.0.40
codegen_flags: <defaults>
</compile_context>

<pallas_src>
import math

import jax
import jax.numpy as jnp
from jax import lax
from jax.experimental import pallas as pl
from jax.experimental.pallas import tpu as pltpu

# ----------------------------- configuration --------------------------------
IMAGE_SIZE = 16
PATCH_SIZE = 4
NUM_CLASSES = 10
DIM = 32
DEPTH = 2
HEADS = 4
DIM_HEAD = 8
MLP_DIM = 64
CHANNELS = 3
BATCH = 2

INNER_DIM = HEADS * DIM_HEAD                      # 32
PATCH_DIM = CHANNELS * PATCH_SIZE * PATCH_SIZE    # 48
NUM_PATCHES = (IMAGE_SIZE // PATCH_SIZE) ** 2     # 16
SEQ_LEN = NUM_PATCHES + 1                         # 17 (cls + patches)
SEQ_PAD = 24                                      # sequence rows padded to 8-multiple
TOKENS_PAD = BATCH * SEQ_PAD                      # 48 (batch folded into rows)
LN_EPS = 1e-5
NEG_INF = -1e30
NUM_CLASSES_PAD = 128                             # lane-dense output store

# packed-weight slab layout ----------------------------------------------------
# wide slab (DIM rows): per layer [wq|wk|wv|wo|w1] = 192 cols, then head_w (128)
LAYER_WCOLS = 3 * INNER_DIM + DIM + MLP_DIM       # 192
HEAD_W_COL = DEPTH * LAYER_WCOLS                  # 384
WIDE_COLS = HEAD_W_COL + NUM_CLASSES_PAD          # 512
# tall slab (DIM cols): pe_w rows [0,48), w2 of layer i rows [48+64i, 48+64(i+1))
TALL_ROWS = PATCH_DIM + DEPTH * MLP_DIM           # 176
# vector slab (width 128): 5 patch-embed rows, 7 rows per layer, 3 head rows
N_PE_VEC = 5
N_LAYER_VEC = 7
HEAD_VEC = N_PE_VEC + DEPTH * N_LAYER_VEC         # 19
VEC_ROWS = 24                                     # 22 used + 2 pad
VEC_W = 128


# ----------------------------- shared helpers --------------------------------
def _layernorm(x, gamma, beta):
    mu = jnp.mean(x, axis=-1, keepdims=True)
    var = jnp.mean((x - mu) ** 2, axis=-1, keepdims=True)
    return (x - mu) * lax.rsqrt(var + LN_EPS) * gamma + beta


def _gelu(x):
    # TODO(synk): PyTorch nn.GELU defaults to exact erf; tanh approx differs ~1e-3.
    c = math.sqrt(2.0 / math.pi)
    return 0.5 * x * (1.0 + jnp.tanh(c * (x + 0.044715 * (x * x * x))))


# contract last dims of both operands (A @ B^T) without materializing a transpose
_NT = (((1,), (1,)), ((), ()))


# ----------------------------- fused Pallas kernel ----------------------------
def vit_fused_kernel(patches_ref, tokbase_ref, wide_ref, tall_ref, vec_ref, o_ref):
    f32 = jnp.float32

    # ---- masks / attention bias generated in-kernel (no HBM traffic) ---------
    lane = lax.broadcasted_iota(jnp.int32, (1, INNER_DIM), 1)
    head_masks = [
        jnp.where((lane >= h * DIM_HEAD) & (lane < (h + 1) * DIM_HEAD), 1.0, 0.0
                  ).astype(f32)
        for h in range(HEADS)]

    row = lax.broadcasted_iota(jnp.int32, (TOKENS_PAD, TOKENS_PAD), 0)
    col = lax.broadcasted_iota(jnp.int32, (TOKENS_PAD, TOKENS_PAD), 1)
    valid = row < 0                                           # all-False
    for b in range(BATCH):
        in_r = (row >= b * SEQ_PAD) & (row < (b + 1) * SEQ_PAD)
        real_c = (col >= b * SEQ_PAD) & (col < b * SEQ_PAD + SEQ_LEN)
        valid = valid | (in_r & real_c)
    attn_bias = jnp.where(valid, 0.0, NEG_INF).astype(f32)    # (48, 48)

    rid = lax.broadcasted_iota(jnp.int32, (TOKENS_PAD, 1), 0)
    patch_row = jnp.zeros((TOKENS_PAD, 1), f32)
    for b in range(BATCH):
        sel = (rid >= b * SEQ_PAD + 1) & (rid < b * SEQ_PAD + SEQ_LEN)
        patch_row = jnp.where(sel, 1.0, patch_row)

    # ---- patch embedding: LN -> Linear -> LN (pad/cls rows masked off) -------
    p = patches_ref[...]                                              # (48, 48)
    h = _layernorm(p, vec_ref[0:1, :PATCH_DIM], vec_ref[1:2, :PATCH_DIM])
    emb = jnp.dot(h, tall_ref[0:PATCH_DIM, :], preferred_element_type=f32)
    emb = emb + vec_ref[2:3, :DIM]
    emb = _layernorm(emb, vec_ref[3:4, :DIM], vec_ref[4:5, :DIM])     # (48, 32)

    # tokens: cls+pos[0] on rows 0/24, emb+pos on patch rows, zeros on pad rows
    x = emb * patch_row + tokbase_ref[...]                            # (48, 32)

    scale = DIM_HEAD ** -0.5

    # ---- transformer: DEPTH x (pre-LN attention, pre-LN MLP), unrolled -------
    for li in range(DEPTH):
        cb = li * LAYER_WCOLS
        vb = N_PE_VEC + li * N_LAYER_VEC

        # attention block (residual)
        hln = _layernorm(x, vec_ref[vb:vb + 1, :DIM], vec_ref[vb + 1:vb + 2, :DIM])
        q = jnp.dot(hln, wide_ref[:, cb:cb + INNER_DIM],
                    preferred_element_type=f32)
        k = jnp.dot(hln, wide_ref[:, cb + INNER_DIM:cb + 2 * INNER_DIM],
                    preferred_element_type=f32)
        v = jnp.dot(hln, wide_ref[:, cb + 2 * INNER_DIM:cb + 3 * INNER_DIM],
                    preferred_element_type=f32)

        heads_out = jnp.zeros((TOKENS_PAD, INNER_DIM), f32)
        for hm in head_masks:
            # per-head scores via a lane mask on q: no head restaging / scratch
            dots = lax.dot_general(q * hm, k, _NT, preferred_element_type=f32)
            dots = dots * scale + attn_bias
            dots = dots - jnp.max(dots, axis=-1, keepdims=True)
            e = jnp.exp(dots)
            attn = e * pl.reciprocal(jnp.sum(e, axis=-1, keepdims=True), approx=True)
            # (v * hm) keeps only this head's lanes, so the per-head output
            # lands in its natural lane position; summing over heads gives the
            # '(h d)'-concatenated layout with no gather/concat.
            heads_out = heads_out + jnp.dot(attn, v * hm, preferred_element_type=f32)

        wo = wide_ref[:, cb + 3 * INNER_DIM:cb + 3 * INNER_DIM + DIM]
        x = x + jnp.dot(heads_out, wo, preferred_element_type=f32) \
              + vec_ref[vb + 2:vb + 3, :DIM]

        # feed-forward block (residual)
        hln = _layernorm(x, vec_ref[vb + 3:vb + 4, :DIM], vec_ref[vb + 4:vb + 5, :DIM])
        w1 = wide_ref[:, cb + 3 * INNER_DIM + DIM:cb + LAYER_WCOLS]
        w2 = tall_ref[PATCH_DIM + li * MLP_DIM:PATCH_DIM + (li + 1) * MLP_DIM, :]
        a = jnp.dot(hln, w1, preferred_element_type=f32) + vec_ref[vb + 5:vb + 6, :MLP_DIM]
        x = x + jnp.dot(_gelu(a), w2, preferred_element_type=f32) \
              + vec_ref[vb + 6:vb + 7, :DIM]

    # ---- cls pooling + mlp head (lane-dense 128-wide store) ------------------
    pooled = jnp.concatenate(
        [x[b * SEQ_PAD:b * SEQ_PAD + 1, :] for b in range(BATCH)], axis=0)   # (B, DIM)
    pooled = _layernorm(pooled, vec_ref[HEAD_VEC:HEAD_VEC + 1, :DIM],
                        vec_ref[HEAD_VEC + 1:HEAD_VEC + 2, :DIM])
    logits = jnp.dot(pooled, wide_ref[:, HEAD_W_COL:HEAD_W_COL + NUM_CLASSES_PAD],
                     preferred_element_type=f32)
    o_ref[...] = logits + vec_ref[HEAD_VEC + 2:HEAD_VEC + 3, :]


# ----------------------------- parameters ------------------------------------
def init_params(key):
    keys = iter(jax.random.split(key, 64))

    def nrm(shape, scale=0.02):
        return jax.random.normal(next(keys), shape, jnp.float32) * scale

    params = {
        "pe_ln1_g": jnp.ones((1, PATCH_DIM), jnp.float32),
        "pe_ln1_b": jnp.zeros((1, PATCH_DIM), jnp.float32),
        "pe_w": nrm((PATCH_DIM, DIM)),
        "pe_b": jnp.zeros((1, DIM), jnp.float32),
        "pe_ln2_g": jnp.ones((1, DIM), jnp.float32),
        "pe_ln2_b": jnp.zeros((1, DIM), jnp.float32),
        "pos_embedding": jax.random.normal(next(keys), (1, SEQ_LEN, DIM), jnp.float32),
        "cls_token": jax.random.normal(next(keys), (1, 1, DIM), jnp.float32),
        "head_ln_g": jnp.ones((1, DIM), jnp.float32),
        "head_ln_b": jnp.zeros((1, DIM), jnp.float32),
        "head_w": nrm((DIM, NUM_CLASSES)),
        "head_b": jnp.zeros((1, NUM_CLASSES), jnp.float32),
        "layers": [],
    }
    for _ in range(DEPTH):
        params["layers"].append({
            "attn_ln_g": jnp.ones((1, DIM), jnp.float32),
            "attn_ln_b": jnp.zeros((1, DIM), jnp.float32),
            "wqkv": nrm((DIM, 3 * INNER_DIM)),          # to_qkv (bias=False)
            "wo": nrm((INNER_DIM, DIM)),                # to_out Linear
            "bo": jnp.zeros((1, DIM), jnp.float32),
            "ff_ln_g": jnp.ones((1, DIM), jnp.float32),
            "ff_ln_b": jnp.zeros((1, DIM), jnp.float32),
            "w1": nrm((DIM, MLP_DIM)),
            "b1": jnp.zeros((1, MLP_DIM), jnp.float32),
            "w2": nrm((MLP_DIM, DIM)),
            "b2": jnp.zeros((1, DIM), jnp.float32),
        })
    return params


# ----------------------------- weight packing ---------------------------------
def pack_params(params):
    # wide slab (DIM, WIDE_COLS): per layer [wq|wk|wv|wo|w1], then head_w padded
    cols = []
    for layer in params["layers"]:
        cols += [layer["wqkv"], layer["wo"], layer["w1"]]
    cols.append(jnp.pad(params["head_w"],
                        ((0, 0), (0, NUM_CLASSES_PAD - NUM_CLASSES))))
    wide = jnp.concatenate(cols, axis=1)                               # (32, 512)

    # tall slab (TALL_ROWS, DIM): pe_w then per-layer w2 (row-aligned to 8)
    tall = jnp.concatenate([params["pe_w"]] + [l["w2"] for l in params["layers"]],
                           axis=0)                                     # (176, 32)

    # vector slab (VEC_ROWS, 128): one padded row per (1, X) parameter
    def vrow(v):
        v = v.reshape(1, -1)
        return jnp.pad(v, ((0, 0), (0, VEC_W - v.shape[1])))

    rows = [vrow(params["pe_ln1_g"]), vrow(params["pe_ln1_b"]), vrow(params["pe_b"]),
            vrow(params["pe_ln2_g"]), vrow(params["pe_ln2_b"])]
    for layer in params["layers"]:
        rows += [vrow(layer["attn_ln_g"]), vrow(layer["attn_ln_b"]), vrow(layer["bo"]),
                 vrow(layer["ff_ln_g"]), vrow(layer["ff_ln_b"]),
                 vrow(layer["b1"]), vrow(layer["b2"])]
    rows += [vrow(params["head_ln_g"]), vrow(params["head_ln_b"]),
             vrow(params["head_b"])]
    vecs = jnp.concatenate(rows, axis=0)
    vecs = jnp.pad(vecs, ((0, VEC_ROWS - vecs.shape[0]), (0, 0)))      # (24, 128)

    # token base: [cls+pos0, pos1..pos16, zeros x7] per padded sequence, tiled
    cls2 = params["cls_token"].reshape(1, DIM)
    pos2 = params["pos_embedding"].reshape(SEQ_LEN, DIM)
    seq_base = jnp.concatenate([cls2 + pos2[0:1], pos2[1:]], axis=0)   # (17, 32)
    seq_base = jnp.pad(seq_base, ((0, SEQ_PAD - SEQ_LEN), (0, 0)))     # (24, 32)
    tok_base = jnp.tile(seq_base, (BATCH, 1))                          # (48, 32)

    return tok_base, wide, tall, vecs


# ----------------------------- forward pass -----------------------------------
def vit_forward(img, params):
    b, c, hgt, wdt = img.shape
    p = PATCH_SIZE
    hp, wp = hgt // p, wdt // p

    # 'b c (h p1) (w p2) -> b (h w) (p1 p2 c)'
    # TODO(synk): kept as plain-JAX glue; the 6-D NCHW transpose has no clean
    # lane-layout-friendly in-kernel form.
    x = img.reshape(b, c, hp, p, wp, p)
    x = jnp.transpose(x, (0, 2, 4, 3, 5, 1))
    patches = x.reshape(b, hp * wp, p * p * c)                         # (B, NP, PD)
    # pad each sequence group to SEQ_PAD rows (cls slot at row 0, pad rows 17..23)
    patches_pad = jnp.pad(patches, ((0, 0), (1, SEQ_PAD - 1 - NUM_PATCHES), (0, 0)))
    patches_pad = patches_pad.reshape(b * SEQ_PAD, PATCH_DIM)          # (48, 48)

    tok_base, wide, tall, vecs = pack_params(params)
    inputs = [patches_pad, tok_base, wide, tall, vecs]
    in_specs = [pl.BlockSpec(a.shape, lambda i: (0, 0)) for a in inputs]

    # advisory cost estimate for the XLA scheduler
    mm = lambda m, k, n: 2 * m * k * n
    flops = (mm(TOKENS_PAD, PATCH_DIM, DIM) + mm(BATCH, DIM, NUM_CLASSES_PAD)
             + DEPTH * (3 * mm(TOKENS_PAD, DIM, INNER_DIM)
                        + HEADS * (mm(TOKENS_PAD, DIM, TOKENS_PAD)
                                   + mm(TOKENS_PAD, TOKENS_PAD, INNER_DIM))
                        + mm(TOKENS_PAD, INNER_DIM, DIM)
                        + mm(TOKENS_PAD, DIM, MLP_DIM)
                        + mm(TOKENS_PAD, MLP_DIM, DIM)))
    trans = DEPTH * (HEADS * TOKENS_PAD * TOKENS_PAD + TOKENS_PAD * MLP_DIM) \
            + 8 * TOKENS_PAD
    bytes_acc = sum(a.size * a.dtype.itemsize for a in inputs) \
                + BATCH * NUM_CLASSES_PAD * 4

    out = pl.pallas_call(
        vit_fused_kernel,
        out_shape=jax.ShapeDtypeStruct((BATCH, NUM_CLASSES_PAD), jnp.float32),
        grid=(1,),
        in_specs=in_specs,
        out_specs=pl.BlockSpec((BATCH, NUM_CLASSES_PAD), lambda i: (0, 0)),
        compiler_params=pltpu.CompilerParams(dimension_semantics=("arbitrary",)),
        cost_estimate=pl.CostEstimate(flops=flops, transcendentals=trans,
                                      bytes_accessed=bytes_acc),
    )(*inputs)
    return out[:, :NUM_CLASSES]


# ----------------------------- pure-JAX reference -----------------------------
def vit_reference(img, params):
    b = img.shape[0]
    p = PATCH_SIZE
    hp = IMAGE_SIZE // p
    x = img.reshape(b, CHANNELS, hp, p, hp, p)
    x = jnp.transpose(x, (0, 2, 4, 3, 5, 1)).reshape(b, hp * hp, PATCH_DIM)
    x = _layernorm(x, params["pe_ln1_g"], params["pe_ln1_b"])
    x = x @ params["pe_w"] + params["pe_b"]
    x = _layernorm(x, params["pe_ln2_g"], params["pe_ln2_b"])
    cls = jnp.broadcast_to(params["cls_token"], (b, 1, DIM))
    x = jnp.concatenate([cls, x], axis=1) + params["pos_embedding"][:, :SEQ_LEN]
    for layer in params["layers"]:
        h = _layernorm(x, layer["attn_ln_g"], layer["attn_ln_b"])
        q, k, v = jnp.split(h @ layer["wqkv"], 3, axis=-1)
        sh = lambda t: t.reshape(b, SEQ_LEN, HEADS, DIM_HEAD).transpose(0, 2, 1, 3)
        q, k, v = sh(q), sh(k), sh(v)
        dots = jnp.einsum("bhid,bhjd->bhij", q, k) * (DIM_HEAD ** -0.5)
        attn = jax.nn.softmax(dots, axis=-1)
        out = jnp.einsum("bhij,bhjd->bhid", attn, v)
        out = out.transpose(0, 2, 1, 3).reshape(b, SEQ_LEN, INNER_DIM)
        x = x + out @ layer["wo"] + layer["bo"]
        h = _layernorm(x, layer["ff_ln_g"], layer["ff_ln_b"])
        x = x + _gelu(h @ layer["w1"] + layer["b1"]) @ layer["w2"] + layer["b2"]
    cls_out = _layernorm(x[:, 0], params["head_ln_g"], params["head_ln_b"])
    return cls_out @ params["head_w"] + params["head_b"]


# ----------------------------- main --------------------------------------------
if __name__ == "__main__":
    key = jax.random.PRNGKey(0)
    k_img, k_par = jax.random.split(key)
    img = jax.random.normal(k_img, (BATCH, CHANNELS, IMAGE_SIZE, IMAGE_SIZE),
                            jnp.float32)
    params = init_params(k_par)

    logits = jax.block_until_ready(jax.jit(vit_forward)(img, params))
    assert logits.shape == (BATCH, NUM_CLASSES)
    assert bool(jnp.all(jnp.isfinite(logits)))

    ref = vit_reference(img, params)
    max_err = float(jnp.max(jnp.abs(logits - ref)))
    assert bool(jnp.allclose(logits, ref, atol=1e-2, rtol=1e-2)), \
        f"kernel/reference mismatch, max abs err {max_err}"

    print("KERNEL_OK")
</pallas_src>

<mosaic_0001>
module attributes {stable_mosaic.version = 11 : i64} {
  func.func @vit_fused_kernel(%arg0: i32, %arg1: memref<48x48xf32, #tpu.memory_space<vmem>>, %arg2: memref<48x32xf32, #tpu.memory_space<vmem>>, %arg3: memref<32x512xf32, #tpu.memory_space<vmem>>, %arg4: memref<176x32xf32, #tpu.memory_space<vmem>>, %arg5: memref<24x128xf32, #tpu.memory_space<vmem>>, %arg6: memref<2x128xf32, #tpu.memory_space<vmem>>) attributes {dimension_semantics = [#tpu.dimension_semantics<arbitrary>], iteration_bounds = array<i64: 1>, scalar_prefetch = 0 : i64, scratch_operands = 0 : i64, tpu.core_type = #tpu.core_type<tc>, window_params = [{pipeline_mode = #tpu.pipeline_mode<synchronous>, transform_indices = @transform_0, window_bounds = array<i64: 48, 48>}, {pipeline_mode = #tpu.pipeline_mode<synchronous>, transform_indices = @transform_1, window_bounds = array<i64: 48, 32>}, {pipeline_mode = #tpu.pipeline_mode<synchronous>, transform_indices = @transform_2, window_bounds = array<i64: 32, 512>}, {pipeline_mode = #tpu.pipeline_mode<synchronous>, transform_indices = @transform_3, window_bounds = array<i64: 176, 32>}, {pipeline_mode = #tpu.pipeline_mode<synchronous>, transform_indices = @transform_4, window_bounds = array<i64: 24, 128>}, {pipeline_mode = #tpu.pipeline_mode<synchronous>, transform_indices = @transform_5, window_bounds = array<i64: 2, 128>}]} {
    %0 = tpu.iota {dimensions = array<i32: 1>} : vector<1x32xi32>
    %c0_i32 = arith.constant 0 : i32
    %1 = vector.broadcast %c0_i32 : i32 to vector<1x32xi32>
    %2 = arith.cmpi sge, %0, %1 : vector<1x32xi32>
    %c8_i32 = arith.constant 8 : i32
    %3 = vector.broadcast %c8_i32 : i32 to vector<1x32xi32>
    %4 = arith.cmpi slt, %0, %3 : vector<1x32xi32>
    %5 = arith.andi %2, %4 : vector<1x32xi1>
    %cst = arith.constant 1.000000e+00 : f32
    %cst_0 = arith.constant 0.000000e+00 : f32
    %6 = vector.broadcast %cst : f32 to vector<1x32xf32>
    %7 = vector.broadcast %cst_0 : f32 to vector<1x32xf32>
    %8 = arith.select %5, %6, %7 : vector<1x32xi1>, vector<1x32xf32>
    %c8_i32_1 = arith.constant 8 : i32
    %9 = vector.broadcast %c8_i32_1 : i32 to vector<1x32xi32>
    %10 = arith.cmpi sge, %0, %9 : vector<1x32xi32>
    %c16_i32 = arith.constant 16 : i32
    %11 = vector.broadcast %c16_i32 : i32 to vector<1x32xi32>
    %12 = arith.cmpi slt, %0, %11 : vector<1x32xi32>
    %13 = arith.andi %10, %12 : vector<1x32xi1>
    %cst_2 = arith.constant 1.000000e+00 : f32
    %cst_3 = arith.constant 0.000000e+00 : f32
    %14 = vector.broadcast %cst_2 : f32 to vector<1x32xf32>
    %15 = vector.broadcast %cst_3 : f32 to vector<1x32xf32>
    %16 = arith.select %13, %14, %15 : vector<1x32xi1>, vector<1x32xf32>
    %c16_i32_4 = arith.constant 16 : i32
    %17 = vector.broadcast %c16_i32_4 : i32 to vector<1x32xi32>
    %18 = arith.cmpi sge, %0, %17 : vector<1x32xi32>
    %c24_i32 = arith.constant 24 : i32
    %19 = vector.broadcast %c24_i32 : i32 to vector<1x32xi32>
    %20 = arith.cmpi slt, %0, %19 : vector<1x32xi32>
    %21 = arith.andi %18, %20 : vector<1x32xi1>
    %cst_5 = arith.constant 1.000000e+00 : f32
    %cst_6 = arith.constant 0.000000e+00 : f32
    %22 = vector.broadcast %cst_5 : f32 to vector<1x32xf32>
    %23 = vector.broadcast %cst_6 : f32 to vector<1x32xf32>
    %24 = arith.select %21, %22, %23 : vector<1x32xi1>, vector<1x32xf32>
    %c24_i32_7 = arith.constant 24 : i32
    %25 = vector.broadcast %c24_i32_7 : i32 to vector<1x32xi32>
    %26 = arith.cmpi sge, %0, %25 : vector<1x32xi32>
    %c32_i32 = arith.constant 32 : i32
    %27 = vector.broadcast %c32_i32 : i32 to vector<1x32xi32>
    %28 = arith.cmpi slt, %0, %27 : vector<1x32xi32>
    %29 = arith.andi %26, %28 : vector<1x32xi1>
    %cst_8 = arith.constant 1.000000e+00 : f32
    %cst_9 = arith.constant 0.000000e+00 : f32
    %30 = vector.broadcast %cst_8 : f32 to vector<1x32xf32>
    %31 = vector.broadcast %cst_9 : f32 to vector<1x32xf32>
    %32 = arith.select %29, %30, %31 : vector<1x32xi1>, vector<1x32xf32>
    %33 = tpu.iota {dimensions = array<i32: 0>} : vector<48x48xi32>
    %34 = tpu.iota {dimensions = array<i32: 1>} : vector<48x48xi32>
    %c0_i32_10 = arith.constant 0 : i32
    %35 = vector.broadcast %c0_i32_10 : i32 to vector<48x48xi32>
    %36 = arith.cmpi slt, %33, %35 : vector<48x48xi32>
    %c0_i32_11 = arith.constant 0 : i32
    %37 = vector.broadcast %c0_i32_11 : i32 to vector<48x48xi32>
    %38 = arith.cmpi sge, %33, %37 : vector<48x48xi32>
    %c24_i32_12 = arith.constant 24 : i32
    %39 = vector.broadcast %c24_i32_12 : i32 to vector<48x48xi32>
    %40 = arith.cmpi slt, %33, %39 : vector<48x48xi32>
    %41 = arith.andi %38, %40 : vector<48x48xi1>
    %c0_i32_13 = arith.constant 0 : i32
    %42 = vector.broadcast %c0_i32_13 : i32 to vector<48x48xi32>
    %43 = arith.cmpi sge, %34, %42 : vector<48x48xi32>
    %c17_i32 = arith.constant 17 : i32
    %44 = vector.broadcast %c17_i32 : i32 to vector<48x48xi32>
    %45 = arith.cmpi slt, %34, %44 : vector<48x48xi32>
    %46 = arith.andi %43, %45 : vector<48x48xi1>
    %47 = arith.andi %41, %46 : vector<48x48xi1>
    %48 = arith.ori %36, %47 : vector<48x48xi1>
    %c24_i32_14 = arith.constant 24 : i32
    %49 = vector.broadcast %c24_i32_14 : i32 to vector<48x48xi32>
    %50 = arith.cmpi sge, %33, %49 : vector<48x48xi32>
    %c48_i32 = arith.constant 48 : i32
    %51 = vector.broadcast %c48_i32 : i32 to vector<48x48xi32>
    %52 = arith.cmpi slt, %33, %51 : vector<48x48xi32>
    %53 = arith.andi %50, %52 : vector<48x48xi1>
    %c24_i32_15 = arith.constant 24 : i32
    %54 = vector.broadcast %c24_i32_15 : i32 to vector<48x48xi32>
    %55 = arith.cmpi sge, %34, %54 : vector<48x48xi32>
    %c41_i32 = arith.constant 41 : i32
    %56 = vector.broadcast %c41_i32 : i32 to vector<48x48xi32>
    %57 = arith.cmpi slt, %34, %56 : vector<48x48xi32>
    %58 = arith.andi %55, %57 : vector<48x48xi1>
    %59 = arith.andi %53, %58 : vector<48x48xi1>
    %60 = arith.ori %48, %59 : vector<48x48xi1>
    %cst_16 = arith.constant 0.000000e+00 : f32
    %cst_17 = arith.constant -1.000000e+30 : f32
    %61 = vector.broadcast %cst_16 : f32 to vector<48x48xf32>
    %62 = vector.broadcast %cst_17 : f32 to vector<48x48xf32>
    %63 = arith.select %60, %61, %62 : vector<48x48xi1>, vector<48x48xf32>
    %64 = tpu.iota {dimensions = array<i32: 0>} : vector<48x1xi32>
    %cst_18 = arith.constant 0.000000e+00 : f32
    %65 = vector.broadcast %cst_18 : f32 to vector<48x1xf32>
    %c1_i32 = arith.constant 1 : i32
    %66 = vector.broadcast %c1_i32 : i32 to vector<48x1xi32>
    %67 = arith.cmpi sge, %64, %66 : vector<48x1xi32>
    %c17_i32_19 = arith.constant 17 : i32
    %68 = vector.broadcast %c17_i32_19 : i32 to vector<48x1xi32>
    %69 = arith.cmpi slt, %64, %68 : vector<48x1xi32>
    %70 = arith.andi %67, %69 : vector<48x1xi1>
    %cst_20 = arith.constant 1.000000e+00 : f32
    %71 = vector.broadcast %cst_20 : f32 to vector<48x1xf32>
    %72 = arith.select %70, %71, %65 : vector<48x1xi1>, vector<48x1xf32>
    %c25_i32 = arith.constant 25 : i32
    %73 = vector.broadcast %c25_i32 : i32 to vector<48x1xi32>
    %74 = arith.cmpi sge, %64, %73 : vector<48x1xi32>
    %c41_i32_21 = arith.constant 41 : i32
    %75 = vector.broadcast %c41_i32_21 : i32 to vector<48x1xi32>
    %76 = arith.cmpi slt, %64, %75 : vector<48x1xi32>
    %77 = arith.andi %74, %76 : vector<48x1xi1>
    %cst_22 = arith.constant 1.000000e+00 : f32
    %78 = vector.broadcast %cst_22 : f32 to vector<48x1xf32>
    %79 = arith.select %77, %78, %72 : vector<48x1xi1>, vector<48x1xf32>
    %c0 = arith.constant 0 : index
    %c0_23 = arith.constant 0 : index
    %80 = vector.load %arg1[%c0, %c0_23] : memref<48x48xf32, #tpu.memory_space<vmem>>, vector<48x48xf32>
    %c0_24 = arith.constant 0 : index
    %c0_25 = arith.constant 0 : index
    %81 = vector.load %arg5[%c0_24, %c0_25] : memref<24x128xf32, #tpu.memory_space<vmem>>, vector<1x48xf32>
    %c1 = arith.constant 1 : index
    %c0_26 = arith.constant 0 : index
    %82 = vector.load %arg5[%c1, %c0_26] : memref<24x128xf32, #tpu.memory_space<vmem>>, vector<1x48xf32>
    %cst_27 = arith.constant dense<0.000000e+00> : vector<48xf32>
    %83 = vector.multi_reduction <add>, %80, %cst_27 [1] : vector<48x48xf32> to vector<48xf32>
    %84 = vector.shape_cast %83 : vector<48xf32> to vector<48x1xf32>
    %cst_28 = arith.constant 4.800000e+01 : f32
    %85 = vector.broadcast %cst_28 : f32 to vector<48x1xf32>
    %86 = arith.divf %84, %85 : vector<48x1xf32>
    %87 = vector.broadcast %86 : vector<48x1xf32> to vector<48x48xf32>
    %88 = arith.subf %80, %87 : vector<48x48xf32>
    %89 = arith.mulf %88, %88 : vector<48x48xf32>
    %cst_29 = arith.constant dense<0.000000e+00> : vector<48xf32>
    %90 = vector.multi_reduction <add>, %89, %cst_29 [1] : vector<48x48xf32> to vector<48xf32>
    %91 = vector.shape_cast %90 : vector<48xf32> to vector<48x1xf32>
    %cst_30 = arith.constant 4.800000e+01 : f32
    %92 = vector.broadcast %cst_30 : f32 to vector<48x1xf32>
    %93 = arith.divf %91, %92 : vector<48x1xf32>
    %94 = vector.broadcast %86 : vector<48x1xf32> to vector<48x48xf32>
    %95 = arith.subf %80, %94 : vector<48x48xf32>
    %cst_31 = arith.constant 9.99999974E-6 : f32
    %96 = vector.broadcast %cst_31 : f32 to vector<48x1xf32>
    %97 = arith.addf %93, %96 : vector<48x1xf32>
    %98 = math.rsqrt %97 : vector<48x1xf32>
    %99 = vector.broadcast %98 : vector<48x1xf32> to vector<48x48xf32>
    %100 = arith.mulf %95, %99 : vector<48x48xf32>
    %101 = vector.broadcast %81 : vector<1x48xf32> to vector<48x48xf32>
    %102 = arith.mulf %100, %101 : vector<48x48xf32>
    %103 = vector.broadcast %82 : vector<1x48xf32> to vector<48x48xf32>
    %104 = arith.addf %102, %103 : vector<48x48xf32>
    %c0_32 = arith.constant 0 : index
    %c0_33 = arith.constant 0 : index
    %105 = vector.load %arg4[%c0_32, %c0_33] : memref<176x32xf32, #tpu.memory_space<vmem>>, vector<48x32xf32>
    %cst_34 = arith.constant dense<0.000000e+00> : vector<48x32xf32>
    %106 = tpu.matmul %104, %105, %cst_34 {dimension_numbers = #tpu.dot_dimension_numbers<[1], [0], [0], [1], [0, 0, 1, 1], [], []>} : vector<48x48xf32>, vector<48x32xf32>, vector<48x32xf32> -> vector<48x32xf32>
    %c2 = arith.constant 2 : index
    %c0_35 = arith.constant 0 : index
    %107 = vector.load %arg5[%c2, %c0_35] : memref<24x128xf32, #tpu.memory_space<vmem>>, vector<1x32xf32>
    %108 = vector.broadcast %107 : vector<1x32xf32> to vector<48x32xf32>
    %109 = arith.addf %106, %108 : vector<48x32xf32>
    %c3 = arith.constant 3 : index
    %c0_36 = arith.constant 0 : index
    %110 = vector.load %arg5[%c3, %c0_36] : memref<24x128xf32, #tpu.memory_space<vmem>>, vector<1x32xf32>
    %c4 = arith.constant 4 : index
    %c0_37 = arith.constant 0 : index
    %111 = vector.load %arg5[%c4, %c0_37] : memref<24x128xf32, #tpu.memory_space<vmem>>, vector<1x32xf32>
    %cst_38 = arith.constant dense<0.000000e+00> : vector<48xf32>
    %112 = vector.multi_reduction <add>, %109, %cst_38 [1] : vector<48x32xf32> to vector<48xf32>
    %113 = vector.shape_cast %112 : vector<48xf32> to vector<48x1xf32>
    %cst_39 = arith.constant 3.200000e+01 : f32
    %114 = vector.broadcast %cst_39 : f32 to vector<48x1xf32>
    %115 = arith.divf %113, %114 : vector<48x1xf32>
    %116 = vector.broadcast %115 : vector<48x1xf32> to vector<48x32xf32>
    %117 = arith.subf %109, %116 : vector<48x32xf32>
    %118 = arith.mulf %117, %117 : vector<48x32xf32>
    %cst_40 = arith.constant dense<0.000000e+00> : vector<48xf32>
    %119 = vector.multi_reduction <add>, %118, %cst_40 [1] : vector<48x32xf32> to vector<48xf32>
    %120 = vector.shape_cast %119 : vector<48xf32> to vector<48x1xf32>
    %cst_41 = arith.constant 3.200000e+01 : f32
    %121 = vector.broadcast %cst_41 : f32 to vector<48x1xf32>
    %122 = arith.divf %120, %121 : vector<48x1xf32>
    %123 = vector.broadcast %115 : vector<48x1xf32> to vector<48x32xf32>
    %124 = arith.subf %109, %123 : vector<48x32xf32>
    %cst_42 = arith.constant 9.99999974E-6 : f32
    %125 = vector.broadcast %cst_42 : f32 to vector<48x1xf32>
    %126 = arith.addf %122, %125 : vector<48x1xf32>
    %127 = math.rsqrt %126 : vector<48x1xf32>
    %128 = vector.broadcast %127 : vector<48x1xf32> to vector<48x32xf32>
    %129 = arith.mulf %124, %128 : vector<48x32xf32>
    %130 = vector.broadcast %110 : vector<1x32xf32> to vector<48x32xf32>
    %131 = arith.mulf %129, %130 : vector<48x32xf32>
    %132 = vector.broadcast %111 : vector<1x32xf32> to vector<48x32xf32>
    %133 = arith.addf %131, %132 : vector<48x32xf32>
    %134 = vector.broadcast %79 : vector<48x1xf32> to vector<48x32xf32>
    %135 = arith.mulf %133, %134 : vector<48x32xf32>
    %c0_43 = arith.constant 0 : index
    %c0_44 = arith.constant 0 : index
    %136 = vector.load %arg2[%c0_43, %c0_44] : memref<48x32xf32, #tpu.memory_space<vmem>>, vector<48x32xf32>
    %137 = arith.addf %135, %136 : vector<48x32xf32>
    %c5 = arith.constant 5 : index
    %c0_45 = arith.constant 0 : index
    %138 = vector.load %arg5[%c5, %c0_45] : memref<24x128xf32, #tpu.memory_space<vmem>>, vector<1x32xf32>
    %c6 = arith.constant 6 : index
    %c0_46 = arith.constant 0 : index
    %139 = vector.load %arg5[%c6, %c0_46] : memref<24x128xf32, #tpu.memory_space<vmem>>, vector<1x32xf32>
    %cst_47 = arith.constant dense<0.000000e+00> : vector<48xf32>
    %140 = vector.multi_reduction <add>, %137, %cst_47 [1] : vector<48x32xf32> to vector<48xf32>
    %141 = vector.shape_cast %140 : vector<48xf32> to vector<48x1xf32>
    %cst_48 = arith.constant 3.200000e+01 : f32
    %142 = vector.broadcast %cst_48 : f32 to vector<48x1xf32>
    %143 = arith.divf %141, %142 : vector<48x1xf32>
    %144 = vector.broadcast %143 : vector<48x1xf32> to vector<48x32xf32>
    %145 = arith.subf %137, %144 : vector<48x32xf32>
    %146 = arith.mulf %145, %145 : vector<48x32xf32>
    %cst_49 = arith.constant dense<0.000000e+00> : vector<48xf32>
    %147 = vector.multi_reduction <add>, %146, %cst_49 [1] : vector<48x32xf32> to vector<48xf32>
    %148 = vector.shape_cast %147 : vector<48xf32> to vector<48x1xf32>
    %cst_50 = arith.constant 3.200000e+01 : f32
    %149 = vector.broadcast %cst_50 : f32 to vector<48x1xf32>
    %150 = arith.divf %148, %149 : vector<48x1xf32>
    %151 = vector.broadcast %143 : vector<48x1xf32> to vector<48x32xf32>
    %152 = arith.subf %137, %151 : vector<48x32xf32>
    %cst_51 = arith.constant 9.99999974E-6 : f32
    %153 = vector.broadcast %cst_51 : f32 to vector<48x1xf32>
    %154 = arith.addf %150, %153 : vector<48x1xf32>
    %155 = math.rsqrt %154 : vector<48x1xf32>
    %156 = vector.broadcast %155 : vector<48x1xf32> to vector<48x32xf32>
    %157 = arith.mulf %152, %156 : vector<48x32xf32>
    %158 = vector.broadcast %138 : vector<1x32xf32> to vector<48x32xf32>
    %159 = arith.mulf %157, %158 : vector<48x32xf32>
    %160 = vector.broadcast %139 : vector<1x32xf32> to vector<48x32xf32>
    %161 = arith.addf %159, %160 : vector<48x32xf32>
    %c0_52 = arith.constant 0 : index
    %c0_53 = arith.constant 0 : index
    %162 = vector.load %arg3[%c0_52, %c0_53] : memref<32x512xf32, #tpu.memory_space<vmem>>, vector<32x32xf32>
    %cst_54 = arith.constant dense<0.000000e+00> : vector<48x32xf32>
    %163 = tpu.matmul %161, %162, %cst_54 {dimension_numbers = #tpu.dot_dimension_numbers<[1], [0], [0], [1], [0, 0, 1, 1], [], []>} : vector<48x32xf32>, vector<32x32xf32>, vector<48x32xf32> -> vector<48x32xf32>
    %c0_55 = arith.constant 0 : index
    %c32 = arith.constant 32 : index
    %164 = vector.load %arg3[%c0_55, %c32] : memref<32x512xf32, #tpu.memory_space<vmem>>, vector<32x32xf32>
    %cst_56 = arith.constant dense<0.000000e+00> : vector<48x32xf32>
    %165 = tpu.matmul %161, %164, %cst_56 {dimension_numbers = #tpu.dot_dimension_numbers<[1], [0], [0], [1], [0, 0, 1, 1], [], []>} : vector<48x32xf32>, vector<32x32xf32>, vector<48x32xf32> -> vector<48x32xf32>
    %c0_57 = arith.constant 0 : index
    %c64 = arith.constant 64 : index
    %166 = vector.load %arg3[%c0_57, %c64] : memref<32x512xf32, #tpu.memory_space<vmem>>, vector<32x32xf32>
    %cst_58 = arith.constant dense<0.000000e+00> : vector<48x32xf32>
    %167 = tpu.matmul %161, %166, %cst_58 {dimension_numbers = #tpu.dot_dimension_numbers<[1], [0], [0], [1], [0, 0, 1, 1], [], []>} : vector<48x32xf32>, vector<32x32xf32>, vector<48x32xf32> -> vector<48x32xf32>
    %cst_59 = arith.constant 0.000000e+00 : f32
    %168 = vector.broadcast %cst_59 : f32 to vector<48x32xf32>
    %169 = vector.broadcast %8 : vector<1x32xf32> to vector<48x32xf32>
    %170 = arith.mulf %163, %169 : vector<48x32xf32>
    %cst_60 = arith.constant dense<0.000000e+00> : vector<48x48xf32>
    %171 = tpu.matmul %170, %165, %cst_60 {dimension_numbers = #tpu.dot_dimension_numbers<[1], [1], [0], [0], [0, 0, 1, 0], [], []>} : vector<48x32xf32>, vector<48x32xf32>, vector<48x48xf32> -> vector<48x48xf32>
    %cst_61 = arith.constant 0.353553385 : f32
    %172 = vector.broadcast %cst_61 : f32 to vector<48x48xf32>
    %173 = arith.mulf %171, %172 : vector<48x48xf32>
    %174 = arith.addf %173, %63 : vector<48x48xf32>
    %cst_62 = arith.constant dense<0xFF800000> : vector<48xf32>
    %175 = vector.multi_reduction <maximumf>, %174, %cst_62 [1] : vector<48x48xf32> to vector<48xf32>
    %176 = vector.shape_cast %175 : vector<48xf32> to vector<48x1xf32>
    %177 = vector.broadcast %176 : vector<48x1xf32> to vector<48x48xf32>
    %178 = arith.subf %174, %177 : vector<48x48xf32>
    %179 = math.exp %178 : vector<48x48xf32>
    %cst_63 = arith.constant dense<0.000000e+00> : vector<48xf32>
    %180 = vector.multi_reduction <add>, %179, %cst_63 [1] : vector<48x48xf32> to vector<48xf32>
    %181 = vector.shape_cast %180 : vector<48xf32> to vector<48x1xf32>
    %182 = tpu.reciprocal %181 {approx = true} : vector<48x1xf32> -> vector<48x1xf32>
    %183 = vector.broadcast %182 : vector<48x1xf32> to vector<48x48xf32>
    %184 = arith.mulf %179, %183 : vector<48x48xf32>
    %185 = vector.broadcast %8 : vector<1x32xf32> to vector<48x32xf32>
    %186 = arith.mulf %167, %185 : vector<48x32xf32>
    %cst_64 = arith.constant dense<0.000000e+00> : vector<48x32xf32>
    %187 = tpu.matmul %184, %186, %cst_64 {dimension_numbers = #tpu.dot_dimension_numbers<[1], [0], [0], [1], [0, 0, 1, 1], [], []>} : vector<48x48xf32>, vector<48x32xf32>, vector<48x32xf32> -> vector<48x32xf32>
    %188 = arith.addf %168, %187 : vector<48x32xf32>
    %189 = vector.broadcast %16 : vector<1x32xf32> to vector<48x32xf32>
    %190 = arith.mulf %163, %189 : vector<48x32xf32>
    %cst_65 = arith.constant dense<0.000000e+00> : vector<48x48xf32>
    %191 = tpu.matmul %190, %165, %cst_65 {dimension_numbers = #tpu.dot_dimension_numbers<[1], [1], [0], [0], [0, 0, 1, 0], [], []>} : vector<48x32xf32>, vector<48x32xf32>, vector<48x48xf32> -> vector<48x48xf32>
    %cst_66 = arith.constant 0.353553385 : f32
    %192 = vector.broadcast %cst_66 : f32 to vector<48x48xf32>
    %193 = arith.mulf %191, %192 : vector<48x48xf32>
    %194 = arith.addf %193, %63 : vector<48x48xf32>
    %cst_67 = arith.constant dense<0xFF800000> : vector<48xf32>
    %195 = vector.multi_reduction <maximumf>, %194, %cst_67 [1] : vector<48x48xf32> to vector<48xf32>
    %196 = vector.shape_cast %195 : vector<48xf32> to vector<48x1xf32>
    %197 = vector.broadcast %196 : vector<48x1xf32> to vector<48x48xf32>
    %198 = arith.subf %194, %197 : vector<48x48xf32>
    %199 = math.exp %198 : vector<48x48xf32>
    %cst_68 = arith.constant dense<0.000000e+00> : vector<48xf32>
    %200 = vector.multi_reduction <add>, %199, %cst_68 [1] : vector<48x48xf32> to vector<48xf32>
    %201 = vector.shape_cast %200 : vector<48xf32> to vector<48x1xf32>
    %202 = tpu.reciprocal %201 {approx = true} : vector<48x1xf32> -> vector<48x1xf32>
    %203 = vector.broadcast %202 : vector<48x1xf32> to vector<48x48xf32>
    %204 = arith.mulf %199, %203 : vector<48x48xf32>
    %205 = vector.broadcast %16 : vector<1x32xf32> to vector<48x32xf32>
    %206 = arith.mulf %167, %205 : vector<48x32xf32>
    %cst_69 = arith.constant dense<0.000000e+00> : vector<48x32xf32>
    %207 = tpu.matmul %204, %206, %cst_69 {dimension_numbers = #tpu.dot_dimension_numbers<[1], [0], [0], [1], [0, 0, 1, 1], [], []>} : vector<48x48xf32>, vector<48x32xf32>, vector<48x32xf32> -> vector<48x32xf32>
    %208 = arith.addf %188, %207 : vector<48x32xf32>
    %209 = vector.broadcast %24 : vector<1x32xf32> to vector<48x32xf32>
    %210 = arith.mulf %163, %209 : vector<48x32xf32>
    %cst_70 = arith.constant dense<0.000000e+00> : vector<48x48xf32>
    %211 = tpu.matmul %210, %165, %cst_70 {dimension_numbers = #tpu.dot_dimension_numbers<[1], [1], [0], [0], [0, 0, 1, 0], [], []>} : vector<48x32xf32>, vector<48x32xf32>, vector<48x48xf32> -> vector<48x48xf32>
    %cst_71 = arith.constant 0.353553385 : f32
    %212 = vector.broadcast %cst_71 : f32 to vector<48x48xf32>
    %213 = arith.mulf %211, %212 : vector<48x48xf32>
    %214 = arith.addf %213, %63 : vector<48x48xf32>
    %cst_72 = arith.constant dense<0xFF800000> : vector<48xf32>
    %215 = vector.multi_reduction <maximumf>, %214, %cst_72 [1] : vector<48x48xf32> to vector<48xf32>
    %216 = vector.shape_cast %215 : vector<48xf32> to vector<48x1xf32>
    %217 = vector.broadcast %216 : vector<48x1xf32> to vector<48x48xf32>
    %218 = arith.subf %214, %217 : vector<48x48xf32>
    %219 = math.exp %218 : vector<48x48xf32>
    %cst_73 = arith.constant dense<0.000000e+00> : vector<48xf32>
    %220 = vector.multi_reduction <add>, %219, %cst_73 [1] : vector<48x48xf32> to vector<48xf32>
    %221 = vector.shape_cast %220 : vector<48xf32> to vector<48x1xf32>
    %222 = tpu.reciprocal %221 {approx = true} : vector<48x1xf32> -> vector<48x1xf32>
    %223 = vector.broadcast %222 : vector<48x1xf32> to vector<48x48xf32>
    %224 = arith.mulf %219, %223 : vector<48x48xf32>
    %225 = vector.broadcast %24 : vector<1x32xf32> to vector<48x32xf32>
    %226 = arith.mulf %167, %225 : vector<48x32xf32>
    %cst_74 = arith.constant dense<0.000000e+00> : vector<48x32xf32>
    %227 = tpu.matmul %224, %226, %cst_74 {dimension_numbers = #tpu.dot_dimension_numbers<[1], [0], [0], [1], [0, 0, 1, 1], [], []>} : vector<48x48xf32>, vector<48x32xf32>, vector<48x32xf32> -> vector<48x32xf32>
    %228 = arith.addf %208, %227 : vector<48x32xf32>
    %229 = vector.broadcast %32 : vector<1x32xf32> to vector<48x32xf32>
    %230 = arith.mulf %163, %229 : vector<48x32xf32>
    %cst_75 = arith.constant dense<0.000000e+00> : vector<48x48xf32>
    %231 = tpu.matmul %230, %165, %cst_75 {dimension_numbers = #tpu.dot_dimension_numbers<[1], [1], [0], [0], [0, 0, 1, 0], [], []>} : vector<48x32xf32>, vector<48x32xf32>, vector<48x48xf32> -> vector<48x48xf32>
    %cst_76 = arith.constant 0.353553385 : f32
    %232 = vector.broadcast %cst_76 : f32 to vector<48x48xf32>
    %233 = arith.mulf %231, %232 : vector<48x48xf32>
    %234 = arith.addf %233, %63 : vector<48x48xf32>
    %cst_77 = arith.constant dense<0xFF800000> : vector<48xf32>
    %235 = vector.multi_reduction <maximumf>, %234, %cst_77 [1] : vector<48x48xf32> to vector<48xf32>
    %236 = vector.shape_cast %235 : vector<48xf32> to vector<48x1xf32>
    %237 = vector.broadcast %236 : vector<48x1xf32> to vector<48x48xf32>
    %238 = arith.subf %234, %237 : vector<48x48xf32>
    %239 = math.exp %238 : vector<48x48xf32>
    %cst_78 = arith.constant dense<0.000000e+00> : vector<48xf32>
    %240 = vector.multi_reduction <add>, %239, %cst_78 [1] : vector<48x48xf32> to vector<48xf32>
    %241 = vector.shape_cast %240 : vector<48xf32> to vector<48x1xf32>
    %242 = tpu.reciprocal %241 {approx = true} : vector<48x1xf32> -> vector<48x1xf32>
    %243 = vector.broadcast %242 : vector<48x1xf32> to vector<48x48xf32>
    %244 = arith.mulf %239, %243 : vector<48x48xf32>
    %245 = vector.broadcast %32 : vector<1x32xf32> to vector<48x32xf32>
    %246 = arith.mulf %167, %245 : vector<48x32xf32>
    %cst_79 = arith.constant dense<0.000000e+00> : vector<48x32xf32>
    %247 = tpu.matmul %244, %246, %cst_79 {dimension_numbers = #tpu.dot_dimension_numbers<[1], [0], [0], [1], [0, 0, 1, 1], [], []>} : vector<48x48xf32>, vector<48x32xf32>, vector<48x32xf32> -> vector<48x32xf32>
    %248 = arith.addf %228, %247 : vector<48x32xf32>
    %c0_80 = arith.constant 0 : index
    %c96 = arith.constant 96 : index
    %249 = vector.load %arg3[%c0_80, %c96] : memref<32x512xf32, #tpu.memory_space<vmem>>, vector<32x32xf32>
    %cst_81 = arith.constant dense<0.000000e+00> : vector<48x32xf32>
    %250 = tpu.matmul %248, %249, %cst_81 {dimension_numbers = #tpu.dot_dimension_numbers<[1], [0], [0], [1], [0, 0, 1, 1], [], []>} : vector<48x32xf32>, vector<32x32xf32>, vector<48x32xf32> -> vector<48x32xf32>
    %251 = arith.addf %137, %250 : vector<48x32xf32>
    %c7 = arith.constant 7 : index
    %c0_82 = arith.constant 0 : index
    %252 = vector.load %arg5[%c7, %c0_82] : memref<24x128xf32, #tpu.memory_space<vmem>>, vector<1x32xf32>
    %253 = vector.broadcast %252 : vector<1x32xf32> to vector<48x32xf32>
    %254 = arith.addf %251, %253 : vector<48x32xf32>
    %c8 = arith.constant 8 : index
    %c0_83 = arith.constant 0 : index
    %255 = vector.load %arg5[%c8, %c0_83] : memref<24x128xf32, #tpu.memory_space<vmem>>, vector<1x32xf32>
    %c9 = arith.constant 9 : index
    %c0_84 = arith.constant 0 : index
    %256 = vector.load %arg5[%c9, %c0_84] : memref<24x128xf32, #tpu.memory_space<vmem>>, vector<1x32xf32>
    %cst_85 = arith.constant dense<0.000000e+00> : vector<48xf32>
    %257 = vector.multi_reduction <add>, %254, %cst_85 [1] : vector<48x32xf32> to vector<48xf32>
    %258 = vector.shape_cast %257 : vector<48xf32> to vector<48x1xf32>
    %cst_86 = arith.constant 3.200000e+01 : f32
    %259 = vector.broadcast %cst_86 : f32 to vector<48x1xf32>
    %260 = arith.divf %258, %259 : vector<48x1xf32>
    %261 = vector.broadcast %260 : vector<48x1xf32> to vector<48x32xf32>
    %262 = arith.subf %254, %261 : vector<48x32xf32>
    %263 = arith.mulf %262, %262 : vector<48x32xf32>
    %cst_87 = arith.constant dense<0.000000e+00> : vector<48xf32>
    %264 = vector.multi_reduction <add>, %263, %cst_87 [1] : vector<48x32xf32> to vector<48xf32>
    %265 = vector.shape_cast %264 : vector<48xf32> to vector<48x1xf32>
    %cst_88 = arith.constant 3.200000e+01 : f32
    %266 = vector.broadcast %cst_88 : f32 to vector<48x1xf32>
    %267 = arith.divf %265, %266 : vector<48x1xf32>
    %268 = vector.broadcast %260 : vector<48x1xf32> to vector<48x32xf32>
    %269 = arith.subf %254, %268 : vector<48x32xf32>
    %cst_89 = arith.constant 9.99999974E-6 : f32
    %270 = vector.broadcast %cst_89 : f32 to vector<48x1xf32>
    %271 = arith.addf %267, %270 : vector<48x1xf32>
    %272 = math.rsqrt %271 : vector<48x1xf32>
    %273 = vector.broadcast %272 : vector<48x1xf32> to vector<48x32xf32>
    %274 = arith.mulf %269, %273 : vector<48x32xf32>
    %275 = vector.broadcast %255 : vector<1x32xf32> to vector<48x32xf32>
    %276 = arith.mulf %274, %275 : vector<48x32xf32>
    %277 = vector.broadcast %256 : vector<1x32xf32> to vector<48x32xf32>
    %278 = arith.addf %276, %277 : vector<48x32xf32>
    %c0_90 = arith.constant 0 : index
    %c128 = arith.constant 128 : index
    %279 = vector.load %arg3[%c0_90, %c128] : memref<32x512xf32, #tpu.memory_space<vmem>>, vector<32x64xf32>
    %c48 = arith.constant 48 : index
    %c0_91 = arith.constant 0 : index
    %280 = vector.load %arg4[%c48, %c0_91] : memref<176x32xf32, #tpu.memory_space<vmem>>, vector<64x32xf32>
    %cst_92 = arith.constant dense<0.000000e+00> : vector<48x64xf32>
    %281 = tpu.matmul %278, %279, %cst_92 {dimension_numbers = #tpu.dot_dimension_numbers<[1], [0], [0], [1], [0, 0, 1, 1], [], []>} : vector<48x32xf32>, vector<32x64xf32>, vector<48x64xf32> -> vector<48x64xf32>
    %c10 = arith.constant 10 : index
    %c0_93 = arith.constant 0 : index
    %282 = vector.load %arg5[%c10, %c0_93] : memref<24x128xf32, #tpu.memory_space<vmem>>, vector<1x64xf32>
    %283 = vector.broadcast %282 : vector<1x64xf32> to vector<48x64xf32>
    %284 = arith.addf %281, %283 : vector<48x64xf32>
    %cst_94 = arith.constant 5.000000e-01 : f32
    %285 = vector.broadcast %cst_94 : f32 to vector<48x64xf32>
    %286 = arith.mulf %285, %284 : vector<48x64xf32>
    %287 = arith.mulf %284, %284 : vector<48x64xf32>
    %288 = arith.mulf %287, %284 : vector<48x64xf32>
    %cst_95 = arith.constant 4.471500e-02 : f32
    %289 = vector.broadcast %cst_95 : f32 to vector<48x64xf32>
    %290 = arith.mulf %289, %288 : vector<48x64xf32>
    %291 = arith.addf %284, %290 : vector<48x64xf32>
    %cst_96 = arith.constant 0.797884583 : f32
    %292 = vector.broadcast %cst_96 : f32 to vector<48x64xf32>
    %293 = arith.mulf %292, %291 : vector<48x64xf32>
    %294 = math.tanh %293 : vector<48x64xf32>
    %cst_97 = arith.constant 1.000000e+00 : f32
    %295 = vector.broadcast %cst_97 : f32 to vector<48x64xf32>
    %296 = arith.addf %295, %294 : vector<48x64xf32>
    %297 = arith.mulf %286, %296 : vector<48x64xf32>
    %cst_98 = arith.constant dense<0.000000e+00> : vector<48x32xf32>
    %298 = tpu.matmul %297, %280, %cst_98 {dimension_numbers = #tpu.dot_dimension_numbers<[1], [0], [0], [1], [0, 0, 1, 1], [], []>} : vector<48x64xf32>, vector<64x32xf32>, vector<48x32xf32> -> vector<48x32xf32>
    %299 = arith.addf %254, %298 : vector<48x32xf32>
    %c11 = arith.constant 11 : index
    %c0_99 = arith.constant 0 : index
    %300 = vector.load %arg5[%c11, %c0_99] : memref<24x128xf32, #tpu.memory_space<vmem>>, vector<1x32xf32>
    %301 = vector.broadcast %300 : vector<1x32xf32> to vector<48x32xf32>
    %302 = arith.addf %299, %301 : vector<48x32xf32>
    %c12 = arith.constant 12 : index
    %c0_100 = arith.constant 0 : index
    %303 = vector.load %arg5[%c12, %c0_100] : memref<24x128xf32, #tpu.memory_space<vmem>>, vector<1x32xf32>
    %c13 = arith.constant 13 : index
    %c0_101 = arith.constant 0 : index
    %304 = vector.load %arg5[%c13, %c0_101] : memref<24x128xf32, #tpu.memory_space<vmem>>, vector<1x32xf32>
    %cst_102 = arith.constant dense<0.000000e+00> : vector<48xf32>
    %305 = vector.multi_reduction <add>, %302, %cst_102 [1] : vector<48x32xf32> to vector<48xf32>
    %306 = vector.shape_cast %305 : vector<48xf32> to vector<48x1xf32>
    %cst_103 = arith.constant 3.200000e+01 : f32
    %307 = vector.broadcast %cst_103 : f32 to vector<48x1xf32>
    %308 = arith.divf %306, %307 : vector<48x1xf32>
    %309 = vector.broadcast %308 : vector<48x1xf32> to vector<48x32xf32>
    %310 = arith.subf %302, %309 : vector<48x32xf32>
    %311 = arith.mulf %310, %310 : vector<48x32xf32>
    %cst_104 = arith.constant dense<0.000000e+00> : vector<48xf32>
    %312 = vector.multi_reduction <add>, %311, %cst_104 [1] : vector<48x32xf32> to vector<48xf32>
    %313 = vector.shape_cast %312 : vector<48xf32> to vector<48x1xf32>
    %cst_105 = arith.constant 3.200000e+01 : f32
    %314 = vector.broadcast %cst_105 : f32 to vector<48x1xf32>
    %315 = arith.divf %313, %314 : vector<48x1xf32>
    %316 = vector.broadcast %308 : vector<48x1xf32> to vector<48x32xf32>
    %317 = arith.subf %302, %316 : vector<48x32xf32>
    %cst_106 = arith.constant 9.99999974E-6 : f32
    %318 = vector.broadcast %cst_106 : f32 to vector<48x1xf32>
    %319 = arith.addf %315, %318 : vector<48x1xf32>
    %320 = math.rsqrt %319 : vector<48x1xf32>
    %321 = vector.broadcast %320 : vector<48x1xf32> to vector<48x32xf32>
    %322 = arith.mulf %317, %321 : vector<48x32xf32>
    %323 = vector.broadcast %303 : vector<1x32xf32> to vector<48x32xf32>
    %324 = arith.mulf %322, %323 : vector<48x32xf32>
    %325 = vector.broadcast %304 : vector<1x32xf32> to vector<48x32xf32>
    %326 = arith.addf %324, %325 : vector<48x32xf32>
    %c0_107 = arith.constant 0 : index
    %c192 = arith.constant 192 : index
    %327 = vector.load %arg3[%c0_107, %c192] : memref<32x512xf32, #tpu.memory_space<vmem>>, vector<32x32xf32>
    %cst_108 = arith.constant dense<0.000000e+00> : vector<48x32xf32>
    %328 = tpu.matmul %326, %327, %cst_108 {dimension_numbers = #tpu.dot_dimension_numbers<[1], [0], [0], [1], [0, 0, 1, 1], [], []>} : vector<48x32xf32>, vector<32x32xf32>, vector<48x32xf32> -> vector<48x32xf32>
    %c0_109 = arith.constant 0 : index
    %c224 = arith.constant 224 : index
    %329 = vector.load %arg3[%c0_109, %c224] : memref<32x512xf32, #tpu.memory_space<vmem>>, vector<32x32xf32>
    %cst_110 = arith.constant dense<0.000000e+00> : vector<48x32xf32>
    %330 = tpu.matmul %326, %329, %cst_110 {dimension_numbers = #tpu.dot_dimension_numbers<[1], [0], [0], [1], [0, 0, 1, 1], [], []>} : vector<48x32xf32>, vector<32x32xf32>, vector<48x32xf32> -> vector<48x32xf32>
    %c0_111 = arith.constant 0 : index
    %c256 = arith.constant 256 : index
    %331 = vector.load %arg3[%c0_111, %c256] : memref<32x512xf32, #tpu.memory_space<vmem>>, vector<32x32xf32>
    %cst_112 = arith.constant dense<0.000000e+00> : vector<48x32xf32>
    %332 = tpu.matmul %326, %331, %cst_112 {dimension_numbers = #tpu.dot_dimension_numbers<[1], [0], [0], [1], [0, 0, 1, 1], [], []>} : vector<48x32xf32>, vector<32x32xf32>, vector<48x32xf32> -> vector<48x32xf32>
    %cst_113 = arith.constant 0.000000e+00 : f32
    %333 = vector.broadcast %cst_113 : f32 to vector<48x32xf32>
    %334 = vector.broadcast %8 : vector<1x32xf32> to vector<48x32xf32>
    %335 = arith.mulf %328, %334 : vector<48x32xf32>
    %cst_114 = arith.constant dense<0.000000e+00> : vector<48x48xf32>
    %336 = tpu.matmul %335, %330, %cst_114 {dimension_numbers = #tpu.dot_dimension_numbers<[1], [1], [0], [0], [0, 0, 1, 0], [], []>} : vector<48x32xf32>, vector<48x32xf32>, vector<48x48xf32> -> vector<48x48xf32>
    %cst_115 = arith.constant 0.353553385 : f32
    %337 = vector.broadcast %cst_115 : f32 to vector<48x48xf32>
    %338 = arith.mulf %336, %337 : vector<48x48xf32>
    %339 = arith.addf %338, %63 : vector<48x48xf32>
    %cst_116 = arith.constant dense<0xFF800000> : vector<48xf32>
    %340 = vector.multi_reduction <maximumf>, %339, %cst_116 [1] : vector<48x48xf32> to vector<48xf32>
    %341 = vector.shape_cast %340 : vector<48xf32> to vector<48x1xf32>
    %342 = vector.broadcast %341 : vector<48x1xf32> to vector<48x48xf32>
    %343 = arith.subf %339, %342 : vector<48x48xf32>
    %344 = math.exp %343 : vector<48x48xf32>
    %cst_117 = arith.constant dense<0.000000e+00> : vector<48xf32>
    %345 = vector.multi_reduction <add>, %344, %cst_117 [1] : vector<48x48xf32> to vector<48xf32>
    %346 = vector.shape_cast %345 : vector<48xf32> to vector<48x1xf32>
    %347 = tpu.reciprocal %346 {approx = true} : vector<48x1xf32> -> vector<48x1xf32>
    %348 = vector.broadcast %347 : vector<48x1xf32> to vector<48x48xf32>
    %349 = arith.mulf %344, %348 : vector<48x48xf32>
    %350 = vector.broadcast %8 : vector<1x32xf32> to vector<48x32xf32>
    %351 = arith.mulf %332, %350 : vector<48x32xf32>
    %cst_118 = arith.constant dense<0.000000e+00> : vector<48x32xf32>
    %352 = tpu.matmul %349, %351, %cst_118 {dimension_numbers = #tpu.dot_dimension_numbers<[1], [0], [0], [1], [0, 0, 1, 1], [], []>} : vector<48x48xf32>, vector<48x32xf32>, vector<48x32xf32> -> vector<48x32xf32>
    %353 = arith.addf %333, %352 : vector<48x32xf32>
    %354 = vector.broadcast %16 : vector<1x32xf32> to vector<48x32xf32>
    %355 = arith.mulf %328, %354 : vector<48x32xf32>
    %cst_119 = arith.constant dense<0.000000e+00> : vector<48x48xf32>
    %356 = tpu.matmul %355, %330, %cst_119 {dimension_numbers = #tpu.dot_dimension_numbers<[1], [1], [0], [0], [0, 0, 1, 0], [], []>} : vector<48x32xf32>, vector<48x32xf32>, vector<48x48xf32> -> vector<48x48xf32>
    %cst_120 = arith.constant 0.353553385 : f32
    %357 = vector.broadcast %cst_120 : f32 to vector<48x48xf32>
    %358 = arith.mulf %356, %357 : vector<48x48xf32>
    %359 = arith.addf %358, %63 : vector<48x48xf32>
    %cst_121 = arith.constant dense<0xFF800000> : vector<48xf32>
    %360 = vector.multi_reduction <maximumf>, %359, %cst_121 [1] : vector<48x48xf32> to vector<48xf32>
    %361 = vector.shape_cast %360 : vector<48xf32> to vector<48x1xf32>
    %362 = vector.broadcast %361 : vector<48x1xf32> to vector<48x48xf32>
    %363 = arith.subf %359, %362 : vector<48x48xf32>
    %364 = math.exp %363 : vector<48x48xf32>
    %cst_122 = arith.constant dense<0.000000e+00> : vector<48xf32>
    %365 = vector.multi_reduction <add>, %364, %cst_122 [1] : vector<48x48xf32> to vector<48xf32>
    %366 = vector.shape_cast %365 : vector<48xf32> to vector<48x1xf32>
    %367 = tpu.reciprocal %366 {approx = true} : vector<48x1xf32> -> vector<48x1xf32>
    %368 = vector.broadcast %367 : vector<48x1xf32> to vector<48x48xf32>
    %369 = arith.mulf %364, %368 : vector<48x48xf32>
    %370 = vector.broadcast %16 : vector<1x32xf32> to vector<48x32xf32>
    %371 = arith.mulf %332, %370 : vector<48x32xf32>
    %cst_123 = arith.constant dense<0.000000e+00> : vector<48x32xf32>
    %372 = tpu.matmul %369, %371, %cst_123 {dimension_numbers = #tpu.dot_dimension_numbers<[1], [0], [0], [1], [0, 0, 1, 1], [], []>} : vector<48x48xf32>, vector<48x32xf32>, vector<48x32xf32> -> vector<48x32xf32>
    %373 = arith.addf %353, %372 : vector<48x32xf32>
    %374 = vector.broadcast %24 : vector<1x32xf32> to vector<48x32xf32>
    %375 = arith.mulf %328, %374 : vector<48x32xf32>
    %cst_124 = arith.constant dense<0.000000e+00> : vector<48x48xf32>
    %376 = tpu.matmul %375, %330, %cst_124 {dimension_numbers = #tpu.dot_dimension_numbers<[1], [1], [0], [0], [0, 0, 1, 0], [], []>} : vector<48x32xf32>, vector<48x32xf32>, vector<48x48xf32> -> vector<48x48xf32>
    %cst_125 = arith.constant 0.353553385 : f32
    %377 = vector.broadcast %cst_125 : f32 to vector<48x48xf32>
    %378 = arith.mulf %376, %377 : vector<48x48xf32>
    %379 = arith.addf %378, %63 : vector<48x48xf32>
    %cst_126 = arith.constant dense<0xFF800000> : vector<48xf32>
    %380 = vector.multi_reduction <maximumf>, %379, %cst_126 [1] : vector<48x48xf32> to vector<48xf32>
    %381 = vector.shape_cast %380 : vector<48xf32> to vector<48x1xf32>
    %382 = vector.broadcast %381 : vector<48x1xf32> to vector<48x48xf32>
    %383 = arith.subf %379, %382 : vector<48x48xf32>
    %384 = math.exp %383 : vector<48x48xf32>
    %cst_127 = arith.constant dense<0.000000e+00> : vector<48xf32>
    %385 = vector.multi_reduction <add>, %384, %cst_127 [1] : vector<48x48xf32> to vector<48xf32>
    %386 = vector.shape_cast %385 : vector<48xf32> to vector<48x1xf32>
    %387 = tpu.reciprocal %386 {approx = true} : vector<48x1xf32> -> vector<48x1xf32>
    %388 = vector.broadcast %387 : vector<48x1xf32> to vector<48x48xf32>
    %389 = arith.mulf %384, %388 : vector<48x48xf32>
    %390 = vector.broadcast %24 : vector<1x32xf32> to vector<48x32xf32>
    %391 = arith.mulf %332, %390 : vector<48x32xf32>
    %cst_128 = arith.constant dense<0.000000e+00> : vector<48x32xf32>
    %392 = tpu.matmul %389, %391, %cst_128 {dimension_numbers = #tpu.dot_dimension_numbers<[1], [0], [0], [1], [0, 0, 1, 1], [], []>} : vector<48x48xf32>, vector<48x32xf32>, vector<48x32xf32> -> vector<48x32xf32>
    %393 = arith.addf %373, %392 : vector<48x32xf32>
    %394 = vector.broadcast %32 : vector<1x32xf32> to vector<48x32xf32>
    %395 = arith.mulf %328, %394 : vector<48x32xf32>
    %cst_129 = arith.constant dense<0.000000e+00> : vector<48x48xf32>
    %396 = tpu.matmul %395, %330, %cst_129 {dimension_numbers = #tpu.dot_dimension_numbers<[1], [1], [0], [0], [0, 0, 1, 0], [], []>} : vector<48x32xf32>, vector<48x32xf32>, vector<48x48xf32> -> vector<48x48xf32>
    %cst_130 = arith.constant 0.353553385 : f32
    %397 = vector.broadcast %cst_130 : f32 to vector<48x48xf32>
    %398 = arith.mulf %396, %397 : vector<48x48xf32>
    %399 = arith.addf %398, %63 : vector<48x48xf32>
    %cst_131 = arith.constant dense<0xFF800000> : vector<48xf32>
    %400 = vector.multi_reduction <maximumf>, %399, %cst_131 [1] : vector<48x48xf32> to vector<48xf32>
    %401 = vector.shape_cast %400 : vector<48xf32> to vector<48x1xf32>
    %402 = vector.broadcast %401 : vector<48x1xf32> to vector<48x48xf32>
    %403 = arith.subf %399, %402 : vector<48x48xf32>
    %404 = math.exp %403 : vector<48x48xf32>
    %cst_132 = arith.constant dense<0.000000e+00> : vector<48xf32>
    %405 = vector.multi_reduction <add>, %404, %cst_132 [1] : vector<48x48xf32> to vector<48xf32>
    %406 = vector.shape_cast %405 : vector<48xf32> to vector<48x1xf32>
    %407 = tpu.reciprocal %406 {approx = true} : vector<48x1xf32> -> vector<48x1xf32>
    %408 = vector.broadcast %407 : vector<48x1xf32> to vector<48x48xf32>
    %409 = arith.mulf %404, %408 : vector<48x48xf32>
    %410 = vector.broadcast %32 : vector<1x32xf32> to vector<48x32xf32>
    %411 = arith.mulf %332, %410 : vector<48x32xf32>
    %cst_133 = arith.constant dense<0.000000e+00> : vector<48x32xf32>
    %412 = tpu.matmul %409, %411, %cst_133 {dimension_numbers = #tpu.dot_dimension_numbers<[1], [0], [0], [1], [0, 0, 1, 1], [], []>} : vector<48x48xf32>, vector<48x32xf32>, vector<48x32xf32> -> vector<48x32xf32>
    %413 = arith.addf %393, %412 : vector<48x32xf32>
    %c0_134 = arith.constant 0 : index
    %c288 = arith.constant 288 : index
    %414 = vector.load %arg3[%c0_134, %c288] : memref<32x512xf32, #tpu.memory_space<vmem>>, vector<32x32xf32>
    %cst_135 = arith.constant dense<0.000000e+00> : vector<48x32xf32>
    %415 = tpu.matmul %413, %414, %cst_135 {dimension_numbers = #tpu.dot_dimension_numbers<[1], [0], [0], [1], [0, 0, 1, 1], [], []>} : vector<48x32xf32>, vector<32x32xf32>, vector<48x32xf32> -> vector<48x32xf32>
    %416 = arith.addf %302, %415 : vector<48x32xf32>
    %c14 = arith.constant 14 : index
    %c0_136 = arith.constant 0 : index
    %417 = vector.load %arg5[%c14, %c0_136] : memref<24x128xf32, #tpu.memory_space<vmem>>, vector<1x32xf32>
    %418 = vector.broadcast %417 : vector<1x32xf32> to vector<48x32xf32>
    %419 = arith.addf %416, %418 : vector<48x32xf32>
    %c15 = arith.constant 15 : index
    %c0_137 = arith.constant 0 : index
    %420 = vector.load %arg5[%c15, %c0_137] : memref<24x128xf32, #tpu.memory_space<vmem>>, vector<1x32xf32>
    %c16 = arith.constant 16 : index
    %c0_138 = arith.constant 0 : index
    %421 = vector.load %arg5[%c16, %c0_138] : memref<24x128xf32, #tpu.memory_space<vmem>>, vector<1x32xf32>
    %cst_139 = arith.constant dense<0.000000e+00> : vector<48xf32>
    %422 = vector.multi_reduction <add>, %419, %cst_139 [1] : vector<48x32xf32> to vector<48xf32>
    %423 = vector.shape_cast %422 : vector<48xf32> to vector<48x1xf32>
    %cst_140 = arith.constant 3.200000e+01 : f32
    %424 = vector.broadcast %cst_140 : f32 to vector<48x1xf32>
    %425 = arith.divf %423, %424 : vector<48x1xf32>
    %426 = vector.broadcast %425 : vector<48x1xf32> to vector<48x32xf32>
    %427 = arith.subf %419, %426 : vector<48x32xf32>
    %428 = arith.mulf %427, %427 : vector<48x32xf32>
    %cst_141 = arith.constant dense<0.000000e+00> : vector<48xf32>
    %429 = vector.multi_reduction <add>, %428, %cst_141 [1] : vector<48x32xf32> to vector<48xf32>
    %430 = vector.shape_cast %429 : vector<48xf32> to vector<48x1xf32>
    %cst_142 = arith.constant 3.200000e+01 : f32
    %431 = vector.broadcast %cst_142 : f32 to vector<48x1xf32>
    %432 = arith.divf %430, %431 : vector<48x1xf32>
    %433 = vector.broadcast %425 : vector<48x1xf32> to vector<48x32xf32>
    %434 = arith.subf %419, %433 : vector<48x32xf32>
    %cst_143 = arith.constant 9.99999974E-6 : f32
    %435 = vector.broadcast %cst_143 : f32 to vector<48x1xf32>
    %436 = arith.addf %432, %435 : vector<48x1xf32>
    %437 = math.rsqrt %436 : vector<48x1xf32>
    %438 = vector.broadcast %437 : vector<48x1xf32> to vector<48x32xf32>
    %439 = arith.mulf %434, %438 : vector<48x32xf32>
    %440 = vector.broadcast %420 : vector<1x32xf32> to vector<48x32xf32>
    %441 = arith.mulf %439, %440 : vector<48x32xf32>
    %442 = vector.broadcast %421 : vector<1x32xf32> to vector<48x32xf32>
    %443 = arith.addf %441, %442 : vector<48x32xf32>
    %c0_144 = arith.constant 0 : index
    %c320 = arith.constant 320 : index
    %444 = vector.load %arg3[%c0_144, %c320] : memref<32x512xf32, #tpu.memory_space<vmem>>, vector<32x64xf32>
    %c112 = arith.constant 112 : index
    %c0_145 = arith.constant 0 : index
    %445 = vector.load %arg4[%c112, %c0_145] : memref<176x32xf32, #tpu.memory_space<vmem>>, vector<64x32xf32>
    %cst_146 = arith.constant dense<0.000000e+00> : vector<48x64xf32>
    %446 = tpu.matmul %443, %444, %cst_146 {dimension_numbers = #tpu.dot_dimension_numbers<[1], [0], [0], [1], [0, 0, 1, 1], [], []>} : vector<48x32xf32>, vector<32x64xf32>, vector<48x64xf32> -> vector<48x64xf32>
    %c17 = arith.constant 17 : index
    %c0_147 = arith.constant 0 : index
    %447 = vector.load %arg5[%c17, %c0_147] : memref<24x128xf32, #tpu.memory_space<vmem>>, vector<1x64xf32>
    %448 = vector.broadcast %447 : vector<1x64xf32> to vector<48x64xf32>
    %449 = arith.addf %446, %448 : vector<48x64xf32>
    %cst_148 = arith.constant 5.000000e-01 : f32
    %450 = vector.broadcast %cst_148 : f32 to vector<48x64xf32>
    %451 = arith.mulf %450, %449 : vector<48x64xf32>
    %452 = arith.mulf %449, %449 : vector<48x64xf32>
    %453 = arith.mulf %452, %449 : vector<48x64xf32>
    %cst_149 = arith.constant 4.471500e-02 : f32
    %454 = vector.broadcast %cst_149 : f32 to vector<48x64xf32>
    %455 = arith.mulf %454, %453 : vector<48x64xf32>
    %456 = arith.addf %449, %455 : vector<48x64xf32>
    %cst_150 = arith.constant 0.797884583 : f32
    %457 = vector.broadcast %cst_150 : f32 to vector<48x64xf32>
    %458 = arith.mulf %457, %456 : vector<48x64xf32>
    %459 = math.tanh %458 : vector<48x64xf32>
    %cst_151 = arith.constant 1.000000e+00 : f32
    %460 = vector.broadcast %cst_151 : f32 to vector<48x64xf32>
    %461 = arith.addf %460, %459 : vector<48x64xf32>
    %462 = arith.mulf %451, %461 : vector<48x64xf32>
    %cst_152 = arith.constant dense<0.000000e+00> : vector<48x32xf32>
    %463 = tpu.matmul %462, %445, %cst_152 {dimension_numbers = #tpu.dot_dimension_numbers<[1], [0], [0], [1], [0, 0, 1, 1], [], []>} : vector<48x64xf32>, vector<64x32xf32>, vector<48x32xf32> -> vector<48x32xf32>
    %464 = arith.addf %419, %463 : vector<48x32xf32>
    %c18 = arith.constant 18 : index
    %c0_153 = arith.constant 0 : index
    %465 = vector.load %arg5[%c18, %c0_153] : memref<24x128xf32, #tpu.memory_space<vmem>>, vector<1x32xf32>
    %466 = vector.broadcast %465 : vector<1x32xf32> to vector<48x32xf32>
    %467 = arith.addf %464, %466 : vector<48x32xf32>
    %468 = vector.extract_strided_slice %467 {offsets = [0, 0], sizes = [1, 32], strides = [1, 1]} : vector<48x32xf32> to vector<1x32xf32>
    %469 = vector.extract_strided_slice %467 {offsets = [24, 0], sizes = [1, 32], strides = [1, 1]} : vector<48x32xf32> to vector<1x32xf32>
    %470 = tpu.concatenate %468, %469 in 0 : vector<1x32xf32>, vector<1x32xf32> -> vector<2x32xf32>
    %c19 = arith.constant 19 : index
    %c0_154 = arith.constant 0 : index
    %471 = vector.load %arg5[%c19, %c0_154] : memref<24x128xf32, #tpu.memory_space<vmem>>, vector<1x32xf32>
    %c20 = arith.constant 20 : index
    %c0_155 = arith.constant 0 : index
    %472 = vector.load %arg5[%c20, %c0_155] : memref<24x128xf32, #tpu.memory_space<vmem>>, vector<1x32xf32>
    %cst_156 = arith.constant dense<0.000000e+00> : vector<2xf32>
    %473 = vector.multi_reduction <add>, %470, %cst_156 [1] : vector<2x32xf32> to vector<2xf32>
    %474 = vector.shape_cast %473 : vector<2xf32> to vector<2x1xf32>
    %cst_157 = arith.constant 3.200000e+01 : f32
    %475 = vector.broadcast %cst_157 : f32 to vector<2x1xf32>
    %476 = arith.divf %474, %475 : vector<2x1xf32>
    %477 = vector.broadcast %476 : vector<2x1xf32> to vector<2x32xf32>
    %478 = arith.subf %470, %477 : vector<2x32xf32>
    %479 = arith.mulf %478, %478 : vector<2x32xf32>
    %cst_158 = arith.constant dense<0.000000e+00> : vector<2xf32>
    %480 = vector.multi_reduction <add>, %479, %cst_158 [1] : vector<2x32xf32> to vector<2xf32>
    %481 = vector.shape_cast %480 : vector<2xf32> to vector<2x1xf32>
    %cst_159 = arith.constant 3.200000e+01 : f32
    %482 = vector.broadcast %cst_159 : f32 to vector<2x1xf32>
    %483 = arith.divf %481, %482 : vector<2x1xf32>
    %484 = vector.broadcast %476 : vector<2x1xf32> to vector<2x32xf32>
    %485 = arith.subf %470, %484 : vector<2x32xf32>
    %cst_160 = arith.constant 9.99999974E-6 : f32
    %486 = vector.broadcast %cst_160 : f32 to vector<2x1xf32>
    %487 = arith.addf %483, %486 : vector<2x1xf32>
    %488 = math.rsqrt %487 : vector<2x1xf32>
    %489 = vector.broadcast %488 : vector<2x1xf32> to vector<2x32xf32>
    %490 = arith.mulf %485, %489 : vector<2x32xf32>
    %491 = vector.broadcast %471 : vector<1x32xf32> to vector<2x32xf32>
    %492 = arith.mulf %490, %491 : vector<2x32xf32>
    %493 = vector.broadcast %472 : vector<1x32xf32> to vector<2x32xf32>
    %494 = arith.addf %492, %493 : vector<2x32xf32>
    %c0_161 = arith.constant 0 : index
    %c384 = arith.constant 384 : index
    %495 = vector.load %arg3[%c0_161, %c384] : memref<32x512xf32, #tpu.memory_space<vmem>>, vector<32x128xf32>
    %cst_162 = arith.constant dense<0.000000e+00> : vector<2x128xf32>
    %496 = tpu.matmul %494, %495, %cst_162 {dimension_numbers = #tpu.dot_dimension_numbers<[1], [0], [0], [1], [0, 0, 1, 1], [], []>} : vector<2x32xf32>, vector<32x128xf32>, vector<2x128xf32> -> vector<2x128xf32>
    %c21 = arith.constant 21 : index
    %c0_163 = arith.constant 0 : index
    %497 = vector.load %arg5[%c21, %c0_163] : memref<24x128xf32, #tpu.memory_space<vmem>>, vector<1x128xf32>
    %498 = vector.broadcast %497 : vector<1x128xf32> to vector<2x128xf32>
    %499 = arith.addf %496, %498 : vector<2x128xf32>
    %c0_164 = arith.constant 0 : index
    %c0_165 = arith.constant 0 : index
    %500 = vector.load %arg6[%c0_164, %c0_165] : memref<2x128xf32, #tpu.memory_space<vmem>>, vector<2x128xf32>
    tpu.vector_store %arg6[%c0_164, %c0_165], %499 {strides = array<i32>} : memref<2x128xf32, #tpu.memory_space<vmem>>, vector<2x128xf32>,
    return
  }
  func.func @transform_0(%arg0: i32) -> (i32, i32) {
    %c0_i32 = arith.constant 0 : i32
    %c0_i32_0 = arith.constant 0 : i32
    %c0_i32_1 = arith.constant 0 : i32
    return %c0_i32, %c0_i32_0 : i32, i32
  }
  func.func @transform_1(%arg0: i32) -> (i32, i32) {
    %c0_i32 = arith.constant 0 : i32
    %c0_i32_0 = arith.constant 0 : i32
    %c0_i32_1 = arith.constant 0 : i32
    return %c0_i32, %c0_i32_0 : i32, i32
  }
  func.func @transform_2(%arg0: i32) -> (i32, i32) {
    %c0_i32 = arith.constant 0 : i32
    %c0_i32_0 = arith.constant 0 : i32
    %c0_i32_1 = arith.constant 0 : i32
    return %c0_i32, %c0_i32_0 : i32, i32
  }
  func.func @transform_3(%arg0: i32) -> (i32, i32) {
    %c0_i32 = arith.constant 0 : i32
    %c0_i32_0 = arith.constant 0 : i32
    %c0_i32_1 = arith.constant 0 : i32
    return %c0_i32, %c0_i32_0 : i32, i32
  }
  func.func @transform_4(%arg0: i32) -> (i32, i32) {
    %c0_i32 = arith.constant 0 : i32
    %c0_i32_0 = arith.constant 0 : i32
    %c0_i32_1 = arith.constant 0 : i32
    return %c0_i32, %c0_i32_0 : i32, i32
  }
  func.func @transform_5(%arg0: i32) -> (i32, i32) {
    %c0_i32 = arith.constant 0 : i32
    %c0_i32_0 = arith.constant 0 : i32
    %c0_i32_1 = arith.constant 0 : i32
    return %c0_i32, %c0_i32_0 : i32, i32
  }
}

</mosaic_0001>

<llo_original>
// kernel: vit_forward.1
$region0: #{vit_forward.1}
  #allocation0 [shape = 'u32[]', space=smem, size = 0x4, offset = 0x4, fixed_abs, tag = 'smem constant byte address 0x4 - core index']
  #allocation1 [shape = 'u32[72,128]{1,0:T(1,128)}', space=vmem, size = 0x9000, scoped, tag = 'internal scratch']
  %s0 = inlined_call_operand.vmem [shape: f32[48,48], index: 0, kind: input, shape index: {}]
  %s1 = inlined_call_operand.vmem [shape: f32[48,32], index: 1, kind: input, shape index: {}]
  %s2 = inlined_call_operand.vmem [shape: f32[32,512], index: 2, kind: input, shape index: {}]
  %s3 = inlined_call_operand.vmem [shape: f32[176,32], index: 3, kind: input, shape index: {}]
  %s4 = inlined_call_operand.vmem [shape: f32[24,128], index: 4, kind: input, shape index: {}]
  %s5 = inlined_call_operand.hbm [shape: f32[2,128], index: 5, kind: output, shape index: {}]
  %s6 = sld [smem:[#allocation0]]
  $region30: #{vit_forward.1} parent=0
    _
  %s8 = ssub.s32 1, %s6
  %s9 = scalar_select 0, %s8, %s6
  $region1: #{vit_forward.1} parent=0
    #allocation2 [shape = 'u8[1024]{0}', space=vmem, size = 0x400, scoped, tag = 'output window, operand 0, single buffered']
    #allocation3 [shape = 's32[1]{0}', space=sflag, size = 0x4, scoped, tag = 'scoped memory for vit_forward.1']
    %10 = vsyncpa [#allocation3], 0
    // Predicated region
    $region2: #{vit_forward.1} parent=1 // pred_check
      _
    $region3: #{vit_forward.1} parent=1 // pred_check_branch
      %12 = sbr.rel (0) target = $region5
    $region4: #{vit_forward.1} parent=1 // pred_region
      _
    $region5: #{vit_forward.1} parent=1 // pred_fallthru
      _
    // Predicated region
    $region6: #{vit_forward.1} parent=1 // pred_check
      _
    $region7: #{vit_forward.1} parent=1 // pred_check_branch
      %14 = sbr.rel (0) target = $region9
    $region8: #{vit_forward.1} parent=1 // pred_region
      _
    $region9: #{vit_forward.1} parent=1 // pred_fallthru
      _
    // Predicated region
    $region10: #{vit_forward.1} parent=1 // pred_check
      _
    $region11: #{vit_forward.1} parent=1 // pred_check_branch
      %16 = sbr.rel (0) target = $region13
    $region12: #{vit_forward.1} parent=1 // pred_region
      _
    $region13: #{vit_forward.1} parent=1 // pred_fallthru
      _
    // Predicated region
    $region14: #{vit_forward.1} parent=1 // pred_check
      _
    $region15: #{vit_forward.1} parent=1 // pred_check_branch
      %18 = sbr.rel (0) target = $region17
    $region16: #{vit_forward.1} parent=1 // pred_region
      _
    $region17: #{vit_forward.1} parent=1 // pred_fallthru
      _
    // Predicated region
    $region18: #{vit_forward.1} parent=1 // pred_check
      _
    $region19: #{vit_forward.1} parent=1 // pred_check_branch
      %20 = sbr.rel (0) target = $region21
    $region20: #{vit_forward.1} parent=1 // pred_region
      _
    $region21: #{vit_forward.1} parent=1 // pred_fallthru
      _
    %v21 = vlaneseq
    %v22 = vand.u32 %v21, 127
    %vm23 = vcmp.ge.s32.totalorder %v22, 0
    %vm24 = vcmp.lt.s32.totalorder %v22, 8
    %vm25 = vmand %vm23, %vm24
    %v26 = vsel %vm25, 1.0, 0.0
    %vm27 = vcmp.ge.s32.totalorder %v22, 8
    %vm28 = vcmp.lt.s32.totalorder %v22, 16
    %vm29 = vmand %vm27, %vm28
    %v30 = vsel %vm29, 1.0, 0.0
    %vm31 = vcmp.ge.s32.totalorder %v22, 16
    %vm32 = vcmp.lt.s32.totalorder %v22, 24
    %vm33 = vmand %vm31, %vm32
    %v34 = vsel %vm33, 1.0, 0.0
    %vm35 = vcmp.ge.s32.totalorder %v22, 24
    %vm36 = vcmp.lt.s32.totalorder %v22, 32
    %vm37 = vmand %vm35, %vm36
    %v38 = vsel %vm37, 1.0, 0.0
    %v39 = vlaneseq
    %v40 = vshrl.u32 %v39, 7
    %v41 = vadd.s32 %v40, 8
    %v42 = vadd.s32 %v40, 16
    %v43 = vadd.s32 %v40, 24
    %v44 = vadd.s32 %v40, 32
    %v45 = vadd.s32 %v40, 40
    %vm46 = vcmp.lt.s32.totalorder %v40, 0
    %vm47 = vcmp.lt.s32.totalorder %v41, 0
    %vm48 = vcmp.lt.s32.totalorder %v42, 0
    %vm49 = vcmp.lt.s32.totalorder %v43, 0
    %vm50 = vcmp.lt.s32.totalorder %v44, 0
    %vm51 = vcmp.lt.s32.totalorder %v45, 0
    %vm52 = vcmp.ge.s32.totalorder %v40, 0
    %vm53 = vcmp.ge.s32.totalorder %v41, 0
    %vm54 = vcmp.ge.s32.totalorder %v42, 0
    %vm55 = vcmp.ge.s32.totalorder %v43, 0
    %vm56 = vcmp.ge.s32.totalorder %v44, 0
    %vm57 = vcmp.ge.s32.totalorder %v45, 0
    %vm58 = vcmp.lt.s32.totalorder %v40, 24
    %vm59 = vcmp.lt.s32.totalorder %v41, 24
    %vm60 = vcmp.lt.s32.totalorder %v42, 24
    %vm61 = vcmp.lt.s32.totalorder %v43, 24
    %vm62 = vcmp.lt.s32.totalorder %v44, 24
    %vm63 = vcmp.lt.s32.totalorder %v45, 24
    %vm64 = vmand %vm52, %vm58
    %vm65 = vmand %vm53, %vm59
    %vm66 = vmand %vm54, %vm60
    %vm67 = vmand %vm55, %vm61
    %vm68 = vmand %vm56, %vm62
    %vm69 = vmand %vm57, %vm63
    %vm70 = vcmp.lt.s32.totalorder %v22, 17
    %vm71 = vmand %vm23, %vm70
    %vm72 = vmand %vm64, %vm71
    %vm73 = vmand %vm65, %vm71
    %vm74 = vmand %vm66, %vm71
    %vm75 = vmand %vm67, %vm71
    %vm76 = vmand %vm68, %vm71
    %vm77 = vmand %vm69, %vm71
    %vm78 = vmor %vm46, %vm72
    %vm79 = vmor %vm47, %vm73
    %vm80 = vmor %vm48, %vm74
    %vm81 = vmor %vm49, %vm75
    %vm82 = vmor %vm50, %vm76
    %vm83 = vmor %vm51, %vm77
    %vm84 = vcmp.ge.s32.totalorder %v40, 24
    %vm85 = vcmp.ge.s32.totalorder %v41, 24
    %vm86 = vcmp.ge.s32.totalorder %v42, 24
    %vm87 = vcmp.ge.s32.totalorder %v43, 24
    %vm88 = vcmp.ge.s32.totalorder %v44, 24
    %vm89 = vcmp.ge.s32.totalorder %v45, 24
    %vm90 = vcmp.lt.s32.totalorder %v40, 48
    %vm91 = vcmp.lt.s32.totalorder %v41, 48
    %vm92 = vcmp.lt.s32.totalorder %v42, 48
    %vm93 = vcmp.lt.s32.totalorder %v43, 48
    %vm94 = vcmp.lt.s32.totalorder %v44, 48
    %vm95 = vcmp.lt.s32.totalorder %v45, 48
    %vm96 = vmand %vm84, %vm90
    %vm97 = vmand %vm85, %vm91
    %vm98 = vmand %vm86, %vm92
    %vm99 = vmand %vm87, %vm93
    %vm100 = vmand %vm88, %vm94
    %vm101 = vmand %vm89, %vm95
    %vm102 = vcmp.lt.s32.totalorder %v22, 41
    %vm103 = vmand %vm35, %vm102
    %vm104 = vmand %vm96, %vm103
    %vm105 = vmand %vm97, %vm103
    %vm106 = vmand %vm98, %vm103
    %vm107 = vmand %vm99, %vm103
    %vm108 = vmand %vm100, %vm103
    %vm109 = vmand %vm101, %vm103
    %vm110 = vmor %vm78, %vm104
    %vm111 = vmor %vm79, %vm105
    %vm112 = vmor %vm80, %vm106
    %vm113 = vmor %vm81, %vm107
    %vm114 = vmor %vm82, %vm108
    %vm115 = vmor %vm83, %vm109
    %v116 = vsel %vm110, 0.0, -1e+30
    %v117 = vsel %vm111, 0.0, -1e+30
    %v118 = vsel %vm112, 0.0, -1e+30
    %v119 = vsel %vm113, 0.0, -1e+30
    %v120 = vsel %vm114, 0.0, -1e+30
    %v121 = vsel %vm115, 0.0, -1e+30
    %vm122 = vcmp.ge.s32.totalorder %v40, 1
    %vm123 = vcmp.ge.s32.totalorder %v41, 1
    %vm124 = vcmp.ge.s32.totalorder %v42, 1
    %vm125 = vcmp.ge.s32.totalorder %v43, 1
    %vm126 = vcmp.ge.s32.totalorder %v44, 1
    %vm127 = vcmp.ge.s32.totalorder %v45, 1
    %vm128 = vcmp.lt.s32.totalorder %v40, 17
    %vm129 = vcmp.lt.s32.totalorder %v41, 17
    %vm130 = vcmp.lt.s32.totalorder %v42, 17
    %vm131 = vcmp.lt.s32.totalorder %v43, 17
    %vm132 = vcmp.lt.s32.totalorder %v44, 17
    %vm133 = vcmp.lt.s32.totalorder %v45, 17
    %vm134 = vmand %vm122, %vm128
    %vm135 = vmand %vm123, %vm129
    %vm136 = vmand %vm124, %vm130
    %vm137 = vmand %vm125, %vm131
    %vm138 = vmand %vm126, %vm132
    %vm139 = vmand %vm127, %vm133
    %v140 = vsel %vm134, 1.0, 0.0
    %v141 = vsel %vm135, 1.0, 0.0
    %v142 = vsel %vm136, 1.0, 0.0
    %v143 = vsel %vm137, 1.0, 0.0
    %v144 = vsel %vm138, 1.0, 0.0
    %v145 = vsel %vm139, 1.0, 0.0
    %vm146 = vcmp.ge.s32.totalorder %v40, 25
    %vm147 = vcmp.ge.s32.totalorder %v41, 25
    %vm148 = vcmp.ge.s32.totalorder %v42, 25
    %vm149 = vcmp.ge.s32.totalorder %v43, 25
    %vm150 = vcmp.ge.s32.totalorder %v44, 25
    %vm151 = vcmp.ge.s32.totalorder %v45, 25
    %vm152 = vcmp.lt.s32.totalorder %v40, 41
    %vm153 = vcmp.lt.s32.totalorder %v41, 41
    %vm154 = vcmp.lt.s32.totalorder %v42, 41
    %vm155 = vcmp.lt.s32.totalorder %v43, 41
    %vm156 = vcmp.lt.s32.totalorder %v44, 41
    %vm157 = vcmp.lt.s32.totalorder %v45, 41
    %vm158 = vmand %vm146, %vm152
    %vm159 = vmand %vm147, %vm153
    %vm160 = vmand %vm148, %vm154
    %vm161 = vmand %vm149, %vm155
    %vm162 = vmand %vm150, %vm156
    %vm163 = vmand %vm151, %vm157
    %v164 = vsel %vm158, 1.0, %v140
    %v165 = vsel %vm159, 1.0, %v141
    %v166 = vsel %vm160, 1.0, %v142
    %v167 = vsel %vm161, 1.0, %v143
    %v168 = vsel %vm162, 1.0, %v144
    %v169 = vsel %vm163, 1.0, %v145
    %v170 = vld [vmem:[%s0] sm:$0xff]
    %v171 = vld [vmem:[%s0 + $0x8] sm:$0xff]
    %v172 = vld [vmem:[%s0 + $0x10] sm:$0xff]
    %v173 = vld [vmem:[%s0 + $0x18] sm:$0xff]
    %v174 = vld [vmem:[%s0 + $0x20] sm:$0xff]
    %v175 = vld [vmem:[%s0 + $0x28] sm:$0xff]
    %v176 = vld [vmem:[%s4] sm:$0x1]
    %v177 = vld [vmem:[%s4 + $0x1] sm:$0x1]
    %vm178 = vcmask 392192
    %v179 = vsel %vm178, %v170, 0.0
    %180 = vadd.xlane.f32.xlu0 %v179
    %v181 = vpop.xlane.xlu0 %180
    %v182 = vsel %vm178, %v171, 0.0
    %183 = vadd.xlane.f32.xlu0 %v182
    %v184 = vpop.xlane.xlu0 %183
    %v185 = vsel %vm178, %v172, 0.0
    %186 = vadd.xlane.f32.xlu0 %v185
    %v187 = vpop.xlane.xlu0 %186
    %v188 = vsel %vm178, %v173, 0.0
    %189 = vadd.xlane.f32.xlu0 %v188
    %v190 = vpop.xlane.xlu0 %189
    %v191 = vsel %vm178, %v174, 0.0
    %192 = vadd.xlane.f32.xlu0 %v191
    %v193 = vpop.xlane.xlu0 %192
    %v194 = vsel %vm178, %v175, 0.0
    %195 = vadd.xlane.f32.xlu0 %v194
    %v196 = vpop.xlane.xlu0 %195
    %v197 = vrcp.pop 48.0
    %v198 = vmul.f32 48.0, %v197
    %v199 = vsub.f32 1.0, %v198
    %v200 = vmul.f32 %v197, %v199
    %v201 = vadd.f32 %v197, %v200
    %vm202 = vweird.f32 %v197
    %v203 = vsel %vm202, %v197, %v201
    %v204 = vmul.f32 %v181, %v203
    %v205 = vmul.f32 %v184, %v203
    %v206 = vmul.f32 %v187, %v203
    %v207 = vmul.f32 %v190, %v203
    %v208 = vmul.f32 %v193, %v203
    %v209 = vmul.f32 %v196, %v203
    %v210 = vsub.f32 %v170, %v204
    %v211 = vsub.f32 %v171, %v205
    %v212 = vsub.f32 %v172, %v206
    %v213 = vsub.f32 %v173, %v207
    %v214 = vsub.f32 %v174, %v208
    %v215 = vsub.f32 %v175, %v209
    %v216 = vmul.f32 %v210, %v210
    %v217 = vmul.f32 %v211, %v211
    %v218 = vmul.f32 %v212, %v212
    %v219 = vmul.f32 %v213, %v213
    %v220 = vmul.f32 %v214, %v214
    %v221 = vmul.f32 %v215, %v215
    %v222 = vsel %vm178, %v216, 0.0
    %223 = vadd.xlane.f32.xlu0 %v222
    %v224 = vpop.xlane.xlu0 %223
    %v225 = vsel %vm178, %v217, 0.0
    %226 = vadd.xlane.f32.xlu0 %v225
    %v227 = vpop.xlane.xlu0 %226
    %v228 = vsel %vm178, %v218, 0.0
    %229 = vadd.xlane.f32.xlu0 %v228
    %v230 = vpop.xlane.xlu0 %229
    %v231 = vsel %vm178, %v219, 0.0
    %232 = vadd.xlane.f32.xlu0 %v231
    %v233 = vpop.xlane.xlu0 %232
    %v234 = vsel %vm178, %v220, 0.0
    %235 = vadd.xlane.f32.xlu0 %v234
    %v236 = vpop.xlane.xlu0 %235
    %v237 = vsel %vm178, %v221, 0.0
    %238 = vadd.xlane.f32.xlu0 %v237
    %v239 = vpop.xlane.xlu0 %238
    %v240 = vmul.f32 %v224, %v203
    %v241 = vmul.f32 %v227, %v203
    %v242 = vmul.f32 %v230, %v203
    %v243 = vmul.f32 %v233, %v203
    %v244 = vmul.f32 %v236, %v203
    %v245 = vmul.f32 %v239, %v203
    %v246 = vadd.f32 %v240, 1e-05
    %v247 = vadd.f32 %v241, 1e-05
    %v248 = vadd.f32 %v242, 1e-05
    %v249 = vadd.f32 %v243, 1e-05
    %v250 = vadd.f32 %v244, 1e-05
    %v251 = vadd.f32 %v245, 1e-05
    %v252 = vrsqrt.pop %v246
    %v253 = vmul.f32 %v252, %v246
    %v254 = vmul.f32 %v253, %v252
    %v255 = vmul.f32 0.5, %v254
    %v256 = vsub.f32 1.5, %v255
    %v257 = vmul.f32 %v252, %v256
    %vm258 = vweird.f32 %v246
    %vm259 = vweird.f32 %v252
    %vm260 = vmor %vm258, %vm259
    %v261 = vsel %vm260, %v252, %v257
    %v262 = vrsqrt.pop %v247
    %v263 = vmul.f32 %v262, %v247
    %v264 = vmul.f32 %v263, %v262
    %v265 = vmul.f32 0.5, %v264
    %v266 = vsub.f32 1.5, %v265
    %v267 = vmul.f32 %v262, %v266
    %vm268 = vweird.f32 %v247
    %vm269 = vweird.f32 %v262
    %vm270 = vmor %vm268, %vm269
    %v271 = vsel %vm270, %v262, %v267
    %v272 = vrsqrt.pop %v248
    %v273 = vmul.f32 %v272, %v248
    %v274 = vmul.f32 %v273, %v272
    %v275 = vmul.f32 0.5, %v274
    %v276 = vsub.f32 1.5, %v275
    %v277 = vmul.f32 %v272, %v276
    %vm278 = vweird.f32 %v248
    %vm279 = vweird.f32 %v272
    %vm280 = vmor %vm278, %vm279
    %v281 = vsel %vm280, %v272, %v277
    %v282 = vrsqrt.pop %v249
    %v283 = vmul.f32 %v282, %v249
    %v284 = vmul.f32 %v283, %v282
    %v285 = vmul.f32 0.5, %v284
    %v286 = vsub.f32 1.5, %v285
    %v287 = vmul.f32 %v282, %v286
    %vm288 = vweird.f32 %v249
    %vm289 = vweird.f32 %v282
    %vm290 = vmor %vm288, %vm289
    %v291 = vsel %vm290, %v282, %v287
    %v292 = vrsqrt.pop %v250
    %v293 = vmul.f32 %v292, %v250
    %v294 = vmul.f32 %v293, %v292
    %v295 = vmul.f32 0.5, %v294
    %v296 = vsub.f32 1.5, %v295
    %v297 = vmul.f32 %v292, %v296
    %vm298 = vweird.f32 %v250
    %vm299 = vweird.f32 %v292
    %vm300 = vmor %vm298, %vm299
    %v301 = vsel %vm300, %v292, %v297
    %v302 = vrsqrt.pop %v251
    %v303 = vmul.f32 %v302, %v251
    %v304 = vmul.f32 %v303, %v302
    %v305 = vmul.f32 0.5, %v304
    %v306 = vsub.f32 1.5, %v305
    %v307 = vmul.f32 %v302, %v306
    %vm308 = vweird.f32 %v251
    %vm309 = vweird.f32 %v302
    %vm310 = vmor %vm308, %vm309
    %v311 = vsel %vm310, %v302, %v307
    %v312 = vmul.f32 %v210, %v261
    %v313 = vmul.f32 %v211, %v271
    %v314 = vmul.f32 %v212, %v281
    %v315 = vmul.f32 %v213, %v291
    %v316 = vmul.f32 %v214, %v301
    %v317 = vmul.f32 %v215, %v311
    %v318 = vperm.slane %v176, 0
    %v319 = vmul.f32 %v312, %v318
    %v320 = vmul.f32 %v313, %v318
    %v321 = vmul.f32 %v314, %v318
    %v322 = vmul.f32 %v315, %v318
    %v323 = vmul.f32 %v316, %v318
    %v324 = vmul.f32 %v317, %v318
    %v325 = vperm.slane %v177, 0
    %v326 = vadd.f32 %v319, %v325
    %v327 = vadd.f32 %v320, %v325
    %v328 = vadd.f32 %v321, %v325
    %v329 = vadd.f32 %v322, %v325
    %v330 = vadd.f32 %v323, %v325
    %v331 = vadd.f32 %v324, %v325
    %v332 = vld [vmem:[%s3] sm:$0xff]
    %v333 = vld [vmem:[%s3 + $0x8] sm:$0xff]
    %v334 = vld [vmem:[%s3 + $0x10] sm:$0xff]
    %v335 = vld [vmem:[%s3 + $0x18] sm:$0xff]
    %v336 = vld [vmem:[%s3 + $0x20] sm:$0xff]
    %v337 = vld [vmem:[%s3 + $0x28] sm:$0xff]
    %v338 = vld [vmem:[%s4 + $0x2] sm:$0x1]
    %v339 = vperm.slane %v338, 0
    %v341 = vsel %vm178, %v326, 0
    %v344 = vsel %vm178, %v327, 0
    %v347 = vsel %vm178, %v328, 0
    %v350 = vsel %vm178, %v329, 0
    %v353 = vsel %vm178, %v330, 0
    %v356 = vsel %vm178, %v331, 0
    %358 = vmatpush.msra.mxu0 0.0
    %359 = vmatpush.msra.mxu0 0.0
    %360 = vmatpush.msra.mxu0 0.0
    %361 = vmatpush.msra.mxu0 0.0
    %362 = vmatpush.msra.mxu0 0.0
    %363 = vmatpush.msra.mxu0 0.0
    %364 = vmatpush.msra.mxu0 0.0
    %365 = vmatpush.msra.mxu0 0.0
    %366 = vmatpush.msra.mxu0 0.0
    %367 = vmatpush.msra.mxu0 0.0
    %368 = vmatpush.msra.mxu0 %v337
    %369 = vmatpush.msra.mxu0 %v336
    %370 = vmatpush.msra.mxu0 %v335
    %371 = vmatpush.msra.mxu0 %v334
    %372 = vmatpush.msra.mxu0 %v333
    %373 = vmatpush.msra.mxu0 %v332
    %374 = vmatmul.f32.gmra.mxu0 %v341
    %v375 = vpop.f32.mrf.mxu0
    %v376 = vadd.f32 %v339, %v375
    %377 = vmatmul.f32.gmra.mxu0 %v344
    %v378 = vpop.f32.mrf.mxu0
    %v379 = vadd.f32 %v339, %v378
    %380 = vmatmul.f32.gmra.mxu0 %v347
    %v381 = vpop.f32.mrf.mxu0
    %v382 = vadd.f32 %v339, %v381
    %383 = vmatmul.f32.gmra.mxu0 %v350
    %v384 = vpop.f32.mrf.mxu0
    %v385 = vadd.f32 %v339, %v384
    %386 = vmatmul.f32.gmra.mxu0 %v353
    %v387 = vpop.f32.mrf.mxu0
    %v388 = vadd.f32 %v339, %v387
    %389 = vmatmul.f32.gmra.mxu0 %v356
    %v390 = vpop.f32.mrf.mxu0
    %v391 = vadd.f32 %v339, %v390
    %392 = vdwg.mxu0
    %v393 = vld [vmem:[%s4 + $0x3] sm:$0x1]
    %v394 = vld [vmem:[%s4 + $0x4] sm:$0x1]
    %vm395 = vcmask 261120
    %v396 = vsel %vm395, %v376, 0.0
    %397 = vadd.xlane.f32.xlu0 %v396
    %v398 = vpop.xlane.xlu0 %397
    %v399 = vsel %vm395, %v379, 0.0
    %400 = vadd.xlane.f32.xlu0 %v399
    %v401 = vpop.xlane.xlu0 %400
    %v402 = vsel %vm395, %v382, 0.0
    %403 = vadd.xlane.f32.xlu0 %v402
    %v404 = vpop.xlane.xlu0 %403
    %v405 = vsel %vm395, %v385, 0.0
    %406 = vadd.xlane.f32.xlu0 %v405
    %v407 = vpop.xlane.xlu0 %406
    %v408 = vsel %vm395, %v388, 0.0
    %409 = vadd.xlane.f32.xlu0 %v408
    %v410 = vpop.xlane.xlu0 %409
    %v411 = vsel %vm395, %v391, 0.0
    %412 = vadd.xlane.f32.xlu0 %v411
    %v413 = vpop.xlane.xlu0 %412
    %v414 = vrcp.pop 32.0
    %v415 = vmul.f32 32.0, %v414
    %v416 = vsub.f32 1.0, %v415
    %v417 = vmul.f32 %v414, %v416
    %v418 = vadd.f32 %v414, %v417
    %vm419 = vweird.f32 %v414
    %v420 = vsel %vm419, %v414, %v418
    %v421 = vmul.f32 %v398, %v420
    %v422 = vmul.f32 %v401, %v420
    %v423 = vmul.f32 %v404, %v420
    %v424 = vmul.f32 %v407, %v420
    %v425 = vmul.f32 %v410, %v420
    %v426 = vmul.f32 %v413, %v420
    %v427 = vsub.f32 %v376, %v421
    %v428 = vsub.f32 %v379, %v422
    %v429 = vsub.f32 %v382, %v423
    %v430 = vsub.f32 %v385, %v424
    %v431 = vsub.f32 %v388, %v425
    %v432 = vsub.f32 %v391, %v426
    %v433 = vmul.f32 %v427, %v427
    %v434 = vmul.f32 %v428, %v428
    %v435 = vmul.f32 %v429, %v429
    %v436 = vmul.f32 %v430, %v430
    %v437 = vmul.f32 %v431, %v431
    %v438 = vmul.f32 %v432, %v432
    %v439 = vsel %vm395, %v433, 0.0
    %440 = vadd.xlane.f32.xlu0 %v439
    %v441 = vpop.xlane.xlu0 %440
    %v442 = vsel %vm395, %v434, 0.0
    %443 = vadd.xlane.f32.xlu0 %v442
    %v444 = vpop.xlane.xlu0 %443
    %v445 = vsel %vm395, %v435, 0.0
    %446 = vadd.xlane.f32.xlu0 %v445
    %v447 = vpop.xlane.xlu0 %446
    %v448 = vsel %vm395, %v436, 0.0
    %449 = vadd.xlane.f32.xlu0 %v448
    %v450 = vpop.xlane.xlu0 %449
    %v451 = vsel %vm395, %v437, 0.0
    %452 = vadd.xlane.f32.xlu0 %v451
    %v453 = vpop.xlane.xlu0 %452
    %v454 = vsel %vm395, %v438, 0.0
    %455 = vadd.xlane.f32.xlu0 %v454
    %v456 = vpop.xlane.xlu0 %455
    %v457 = vmul.f32 %v441, %v420
    %v458 = vmul.f32 %v444, %v420
    %v459 = vmul.f32 %v447, %v420
    %v460 = vmul.f32 %v450, %v420
    %v461 = vmul.f32 %v453, %v420
    %v462 = vmul.f32 %v456, %v420
    %v463 = vadd.f32 %v457, 1e-05
    %v464 = vadd.f32 %v458, 1e-05
    %v465 = vadd.f32 %v459, 1e-05
    %v466 = vadd.f32 %v460, 1e-05
    %v467 = vadd.f32 %v461, 1e-05
    %v468 = vadd.f32 %v462, 1e-05
    %v469 = vrsqrt.pop %v463
    %v470 = vmul.f32 %v469, %v463
    %v471 = vmul.f32 %v470, %v469
    %v472 = vmul.f32 0.5, %v471
    %v473 = vsub.f32 1.5, %v472
    %v474 = vmul.f32 %v469, %v473
    %vm475 = vweird.f32 %v463
    %vm476 = vweird.f32 %v469
    %vm477 = vmor %vm475, %vm476
    %v478 = vsel %vm477, %v469, %v474
    %v479 = vrsqrt.pop %v464
    %v480 = vmul.f32 %v479, %v464
    %v481 = vmul.f32 %v480, %v479
    %v482 = vmul.f32 0.5, %v481
    %v483 = vsub.f32 1.5, %v482
    %v484 = vmul.f32 %v479, %v483
    %vm485 = vweird.f32 %v464
    %vm486 = vweird.f32 %v479
    %vm487 = vmor %vm485, %vm486
    %v488 = vsel %vm487, %v479, %v484
    %v489 = vrsqrt.pop %v465
    %v490 = vmul.f32 %v489, %v465
    %v491 = vmul.f32 %v490, %v489
    %v492 = vmul.f32 0.5, %v491
    %v493 = vsub.f32 1.5, %v492
    %v494 = vmul.f32 %v489, %v493
    %vm495 = vweird.f32 %v465
    %vm496 = vweird.f32 %v489
    %vm497 = vmor %vm495, %vm496
    %v498 = vsel %vm497, %v489, %v494
    %v499 = vrsqrt.pop %v466
    %v500 = vmul.f32 %v499, %v466
    %v501 = vmul.f32 %v500, %v499
    %v502 = vmul.f32 0.5, %v501
    %v503 = vsub.f32 1.5, %v502
    %v504 = vmul.f32 %v499, %v503
    %vm505 = vweird.f32 %v466
    %vm506 = vweird.f32 %v499
    %vm507 = vmor %vm505, %vm506
    %v508 = vsel %vm507, %v499, %v504
    %v509 = vrsqrt.pop %v467
    %v510 = vmul.f32 %v509, %v467
    %v511 = vmul.f32 %v510, %v509
    %v512 = vmul.f32 0.5, %v511
    %v513 = vsub.f32 1.5, %v512
    %v514 = vmul.f32 %v509, %v513
    %vm515 = vweird.f32 %v467
    %vm516 = vweird.f32 %v509
    %vm517 = vmor %vm515, %vm516
    %v518 = vsel %vm517, %v509, %v514
    %v519 = vrsqrt.pop %v468
    %v520 = vmul.f32 %v519, %v468
    %v521 = vmul.f32 %v520, %v519
    %v522 = vmul.f32 0.5, %v521
    %v523 = vsub.f32 1.5, %v522
    %v524 = vmul.f32 %v519, %v523
    %vm525 = vweird.f32 %v468
    %vm526 = vweird.f32 %v519
    %vm527 = vmor %vm525, %vm526
    %v528 = vsel %vm527, %v519, %v524
    %v529 = vmul.f32 %v427, %v478
    %v530 = vmul.f32 %v428, %v488
    %v531 = vmul.f32 %v429, %v498
    %v532 = vmul.f32 %v430, %v508
    %v533 = vmul.f32 %v431, %v518
    %v534 = vmul.f32 %v432, %v528
    %v535 = vperm.slane %v393, 0
    %v536 = vmul.f32 %v529, %v535
    %v537 = vmul.f32 %v530, %v535
    %v538 = vmul.f32 %v531, %v535
    %v539 = vmul.f32 %v532, %v535
    %v540 = vmul.f32 %v533, %v535
    %v541 = vmul.f32 %v534, %v535
    %v542 = vperm.slane %v394, 0
    %v543 = vadd.f32 %v536, %v542
    %v544 = vadd.f32 %v537, %v542
    %v545 = vadd.f32 %v538, %v542
    %v546 = vadd.f32 %v539, %v542
    %v547 = vadd.f32 %v540, %v542
    %v548 = vadd.f32 %v541, %v542
    %v549 = vmul.f32 %v543, %v164
    %v550 = vmul.f32 %v544, %v165
    %v551 = vmul.f32 %v545, %v166
    %v552 = vmul.f32 %v546, %v167
    %v553 = vmul.f32 %v547, %v168
    %v554 = vmul.f32 %v548, %v169
    %v555 = vld [vmem:[%s1] sm:$0xff]
    %v556 = vld [vmem:[%s1 + $0x8] sm:$0xff]
    %v557 = vld [vmem:[%s1 + $0x10] sm:$0xff]
    %v558 = vld [vmem:[%s1 + $0x18] sm:$0xff]
    %v559 = vld [vmem:[%s1 + $0x20] sm:$0xff]
    %v560 = vld [vmem:[%s1 + $0x28] sm:$0xff]
    %v561 = vadd.f32 %v549, %v555
    %v562 = vadd.f32 %v550, %v556
    %v563 = vadd.f32 %v551, %v557
    %v564 = vadd.f32 %v552, %v558
    %v565 = vadd.f32 %v553, %v559
    %v566 = vadd.f32 %v554, %v560
    %v567 = vld [vmem:[%s4 + $0x5] sm:$0x1]
    %v568 = vld [vmem:[%s4 + $0x6] sm:$0x1]
    %v569 = vsel %vm395, %v561, 0.0
    %570 = vadd.xlane.f32.xlu0 %v569
    %v571 = vpop.xlane.xlu0 %570
    %v572 = vsel %vm395, %v562, 0.0
    %573 = vadd.xlane.f32.xlu0 %v572
    %v574 = vpop.xlane.xlu0 %573
    %v575 = vsel %vm395, %v563, 0.0
    %576 = vadd.xlane.f32.xlu0 %v575
    %v577 = vpop.xlane.xlu0 %576
    %v578 = vsel %vm395, %v564, 0.0
    %579 = vadd.xlane.f32.xlu0 %v578
    %v580 = vpop.xlane.xlu0 %579
    %v581 = vsel %vm395, %v565, 0.0
    %582 = vadd.xlane.f32.xlu0 %v581
    %v583 = vpop.xlane.xlu0 %582
    %v584 = vsel %vm395, %v566, 0.0
    %585 = vadd.xlane.f32.xlu0 %v584
    %v586 = vpop.xlane.xlu0 %585
    %v587 = vmul.f32 %v571, %v420
    %v588 = vmul.f32 %v574, %v420
    %v589 = vmul.f32 %v577, %v420
    %v590 = vmul.f32 %v580, %v420
    %v591 = vmul.f32 %v583, %v420
    %v592 = vmul.f32 %v586, %v420
    %v593 = vsub.f32 %v561, %v587
    %v594 = vsub.f32 %v562, %v588
    %v595 = vsub.f32 %v563, %v589
    %v596 = vsub.f32 %v564, %v590
    %v597 = vsub.f32 %v565, %v591
    %v598 = vsub.f32 %v566, %v592
    %v599 = vmul.f32 %v593, %v593
    %v600 = vmul.f32 %v594, %v594
    %v601 = vmul.f32 %v595, %v595
    %v602 = vmul.f32 %v596, %v596
    %v603 = vmul.f32 %v597, %v597
    %v604 = vmul.f32 %v598, %v598
    %v605 = vsel %vm395, %v599, 0.0
    %606 = vadd.xlane.f32.xlu0 %v605
    %v607 = vpop.xlane.xlu0 %606
    %v608 = vsel %vm395, %v600, 0.0
    %609 = vadd.xlane.f32.xlu0 %v608
    %v610 = vpop.xlane.xlu0 %609
    %v611 = vsel %vm395, %v601, 0.0
    %612 = vadd.xlane.f32.xlu0 %v611
    %v613 = vpop.xlane.xlu0 %612
    %v614 = vsel %vm395, %v602, 0.0
    %615 = vadd.xlane.f32.xlu0 %v614
    %v616 = vpop.xlane.xlu0 %615
    %v617 = vsel %vm395, %v603, 0.0
    %618 = vadd.xlane.f32.xlu0 %v617
    %v619 = vpop.xlane.xlu0 %618
    %v620 = vsel %vm395, %v604, 0.0
    %621 = vadd.xlane.f32.xlu0 %v620
    %v622 = vpop.xlane.xlu0 %621
    %v623 = vmul.f32 %v607, %v420
    %v624 = vmul.f32 %v610, %v420
    %v625 = vmul.f32 %v613, %v420
    %v626 = vmul.f32 %v616, %v420
    %v627 = vmul.f32 %v619, %v420
    %v628 = vmul.f32 %v622, %v420
    %v629 = vadd.f32 %v623, 1e-05
    %v630 = vadd.f32 %v624, 1e-05
    %v631 = vadd.f32 %v625, 1e-05
    %v632 = vadd.f32 %v626, 1e-05
    %v633 = vadd.f32 %v627, 1e-05
    %v634 = vadd.f32 %v628, 1e-05
    %v635 = vrsqrt.pop %v629
    %v636 = vmul.f32 %v635, %v629
    %v637 = vmul.f32 %v636, %v635
    %v638 = vmul.f32 0.5, %v637
    %v639 = vsub.f32 1.5, %v638
    %v640 = vmul.f32 %v635, %v639
    %vm641 = vweird.f32 %v629
    %vm642 = vweird.f32 %v635
    %vm643 = vmor %vm641, %vm642
    %v644 = vsel %vm643, %v635, %v640
    %v645 = vrsqrt.pop %v630
    %v646 = vmul.f32 %v645, %v630
    %v647 = vmul.f32 %v646, %v645
    %v648 = vmul.f32 0.5, %v647
    %v649 = vsub.f32 1.5, %v648
    %v650 = vmul.f32 %v645, %v649
    %vm651 = vweird.f32 %v630
    %vm652 = vweird.f32 %v645
    %vm653 = vmor %vm651, %vm652
    %v654 = vsel %vm653, %v645, %v650
    %v655 = vrsqrt.pop %v631
    %v656 = vmul.f32 %v655, %v631
    %v657 = vmul.f32 %v656, %v655
    %v658 = vmul.f32 0.5, %v657
    %v659 = vsub.f32 1.5, %v658
    %v660 = vmul.f32 %v655, %v659
    %vm661 = vweird.f32 %v631
    %vm662 = vweird.f32 %v655
    %vm663 = vmor %vm661, %vm662
    %v664 = vsel %vm663, %v655, %v660
    %v665 = vrsqrt.pop %v632
    %v666 = vmul.f32 %v665, %v632
    %v667 = vmul.f32 %v666, %v665
    %v668 = vmul.f32 0.5, %v667
    %v669 = vsub.f32 1.5, %v668
    %v670 = vmul.f32 %v665, %v669
    %vm671 = vweird.f32 %v632
    %vm672 = vweird.f32 %v665
    %vm673 = vmor %vm671, %vm672
    %v674 = vsel %vm673, %v665, %v670
    %v675 = vrsqrt.pop %v633
    %v676 = vmul.f32 %v675, %v633
    %v677 = vmul.f32 %v676, %v675
    %v678 = vmul.f32 0.5, %v677
    %v679 = vsub.f32 1.5, %v678
    %v680 = vmul.f32 %v675, %v679
    %vm681 = vweird.f32 %v633
    %vm682 = vweird.f32 %v675
    %vm683 = vmor %vm681, %vm682
    %v684 = vsel %vm683, %v675, %v680
    %v685 = vrsqrt.pop %v634
    %v686 = vmul.f32 %v685, %v634
    %v687 = vmul.f32 %v686, %v685
    %v688 = vmul.f32 0.5, %v687
    %v689 = vsub.f32 1.5, %v688
    %v690 = vmul.f32 %v685, %v689
    %vm691 = vweird.f32 %v634
    %vm692 = vweird.f32 %v685
    %vm693 = vmor %vm691, %vm692
    %v694 = vsel %vm693, %v685, %v690
    %v695 = vmul.f32 %v593, %v644
    %v696 = vmul.f32 %v594, %v654
    %v697 = vmul.f32 %v595, %v664
    %v698 = vmul.f32 %v596, %v674
    %v699 = vmul.f32 %v597, %v684
    %v700 = vmul.f32 %v598, %v694
    %v701 = vperm.slane %v567, 0
    %v702 = vmul.f32 %v695, %v701
    %v703 = vmul.f32 %v696, %v701
    %v704 = vmul.f32 %v697, %v701
    %v705 = vmul.f32 %v698, %v701
    %v706 = vmul.f32 %v699, %v701
    %v707 = vmul.f32 %v700, %v701
    %v708 = vperm.slane %v568, 0
    %v709 = vadd.f32 %v702, %v708
    %v710 = vadd.f32 %v703, %v708
    %v711 = vadd.f32 %v704, %v708
    %v712 = vadd.f32 %v705, %v708
    %v713 = vadd.f32 %v706, %v708
    %v714 = vadd.f32 %v707, %v708
    %v715 = vld [vmem:[%s2] sm:$0xff]
    %v716 = vld [vmem:[%s2 + $0x20] sm:$0xff]
    %v717 = vld [vmem:[%s2 + $0x40] sm:$0xff]
    %v718 = vld [vmem:[%s2 + $0x60] sm:$0xff]
    %v720 = vsel %vm395, %v709, 0
    %v723 = vsel %vm395, %v710, 0
    %v726 = vsel %vm395, %v711, 0
    %v729 = vsel %vm395, %v712, 0
    %v732 = vsel %vm395, %v713, 0
    %v735 = vsel %vm395, %v714, 0
    %737 = vmatpush.msra.mxu0 0.0
    %738 = vmatpush.msra.mxu0 0.0
    %739 = vmatpush.msra.mxu0 0.0
    %740 = vmatpush.msra.mxu0 0.0
    %741 = vmatpush.msra.mxu0 0.0
    %742 = vmatpush.msra.mxu0 0.0
    %743 = vmatpush.msra.mxu0 0.0
    %744 = vmatpush.msra.mxu0 0.0
    %745 = vmatpush.msra.mxu0 0.0
    %746 = vmatpush.msra.mxu0 0.0
    %747 = vmatpush.msra.mxu0 0.0
    %748 = vmatpush.msra.mxu0 0.0
    %749 = vmatpush.msra.mxu0 %v718
    %750 = vmatpush.msra.mxu0 %v717
    %751 = vmatpush.msra.mxu0 %v716
    %752 = vmatpush.msra.mxu0 %v715
    %753 = vmatmul.f32.gmra.mxu0 %v720
    %v754 = vpop.f32.mrf.mxu0
    %v755 = vadd.f32 0.0, %v754
    %756 = vmatmul.f32.gmra.mxu0 %v723
    %v757 = vpop.f32.mrf.mxu0
    %v758 = vadd.f32 0.0, %v757
    %759 = vmatmul.f32.gmra.mxu0 %v726
    %v760 = vpop.f32.mrf.mxu0
    %v761 = vadd.f32 0.0, %v760
    %762 = vmatmul.f32.gmra.mxu0 %v729
    %v763 = vpop.f32.mrf.mxu0
    %v764 = vadd.f32 0.0, %v763
    %765 = vmatmul.f32.gmra.mxu0 %v732
    %v766 = vpop.f32.mrf.mxu0
    %v767 = vadd.f32 0.0, %v766
    %768 = vmatmul.f32.gmra.mxu0 %v735
    %v769 = vpop.f32.mrf.mxu0
    %v770 = vadd.f32 0.0, %v769
    %771 = vdwg.mxu0
    %776 = vrot.lane.b32.xlu0 %v715, 96
    %v777 = vpop.permute.xlu0 %776
    %778 = vrot.lane.b32.xlu0 %v716, 96
    %v779 = vpop.permute.xlu0 %778
    %780 = vrot.lane.b32.xlu0 %v717, 96
    %v781 = vpop.permute.xlu0 %780
    %782 = vrot.lane.b32.xlu0 %v718, 96
    %v783 = vpop.permute.xlu0 %782
    %788 = vmatpush.msra.mxu0 0.0
    %789 = vmatpush.msra.mxu0 0.0
    %790 = vmatpush.msra.mxu0 0.0
    %791 = vmatpush.msra.mxu0 0.0
    %792 = vmatpush.msra.mxu0 0.0
    %793 = vmatpush.msra.mxu0 0.0
    %794 = vmatpush.msra.mxu0 0.0
    %795 = vmatpush.msra.mxu0 0.0
    %796 = vmatpush.msra.mxu0 0.0
    %797 = vmatpush.msra.mxu0 0.0
    %798 = vmatpush.msra.mxu0 0.0
    %799 = vmatpush.msra.mxu0 0.0
    %800 = vmatpush.msra.mxu0 %v783
    %801 = vmatpush.msra.mxu0 %v781
    %802 = vmatpush.msra.mxu0 %v779
    %803 = vmatpush.msra.mxu0 %v777
    %804 = vmatmul.f32.gmra.mxu0 %v720
    %v805 = vpop.f32.mrf.mxu0
    %v806 = vadd.f32 0.0, %v805
    %807 = vmatmul.f32.gmra.mxu0 %v723
    %v808 = vpop.f32.mrf.mxu0
    %v809 = vadd.f32 0.0, %v808
    %810 = vmatmul.f32.gmra.mxu0 %v726
    %v811 = vpop.f32.mrf.mxu0
    %v812 = vadd.f32 0.0, %v811
    %813 = vmatmul.f32.gmra.mxu0 %v729
    %v814 = vpop.f32.mrf.mxu0
    %v815 = vadd.f32 0.0, %v814
    %816 = vmatmul.f32.gmra.mxu0 %v732
    %v817 = vpop.f32.mrf.mxu0
    %v818 = vadd.f32 0.0, %v817
    %819 = vmatmul.f32.gmra.mxu0 %v735
    %v820 = vpop.f32.mrf.mxu0
    %v821 = vadd.f32 0.0, %v820
    %822 = vdwg.mxu0
    %823 = vrot.lane.b32.xlu0 %v715, 64
    %v824 = vpop.permute.xlu0 %823
    %825 = vrot.lane.b32.xlu0 %v716, 64
    %v826 = vpop.permute.xlu0 %825
    %827 = vrot.lane.b32.xlu0 %v717, 64
    %v828 = vpop.permute.xlu0 %827
    %829 = vrot.lane.b32.xlu0 %v718, 64
    %v830 = vpop.permute.xlu0 %829
    %835 = vmatpush.msra.mxu0 0.0
    %836 = vmatpush.msra.mxu0 0.0
    %837 = vmatpush.msra.mxu0 0.0
    %838 = vmatpush.msra.mxu0 0.0
    %839 = vmatpush.msra.mxu0 0.0
    %840 = vmatpush.msra.mxu0 0.0
    %841 = vmatpush.msra.mxu0 0.0
    %842 = vmatpush.msra.mxu0 0.0
    %843 = vmatpush.msra.mxu0 0.0
    %844 = vmatpush.msra.mxu0 0.0
    %845 = vmatpush.msra.mxu0 0.0
    %846 = vmatpush.msra.mxu0 0.0
    %847 = vmatpush.msra.mxu0 %v830
    %848 = vmatpush.msra.mxu0 %v828
    %849 = vmatpush.msra.mxu0 %v826
    %850 = vmatpush.msra.mxu0 %v824
    %851 = vmatmul.f32.gmra.mxu0 %v720
    %v852 = vpop.f32.mrf.mxu0
    %v853 = vadd.f32 0.0, %v852
    %854 = vmatmul.f32.gmra.mxu0 %v723
    %v855 = vpop.f32.mrf.mxu0
    %v856 = vadd.f32 0.0, %v855
    %857 = vmatmul.f32.gmra.mxu0 %v726
    %v858 = vpop.f32.mrf.mxu0
    %v859 = vadd.f32 0.0, %v858
    %860 = vmatmul.f32.gmra.mxu0 %v729
    %v861 = vpop.f32.mrf.mxu0
    %v862 = vadd.f32 0.0, %v861
    %863 = vmatmul.f32.gmra.mxu0 %v732
    %v864 = vpop.f32.mrf.mxu0
    %v865 = vadd.f32 0.0, %v864
    %866 = vmatmul.f32.gmra.mxu0 %v735
    %v867 = vpop.f32.mrf.mxu0
    %v868 = vadd.f32 0.0, %v867
    %869 = vdwg.mxu0
    %v870 = vmul.f32 %v755, %v26
    %v871 = vmul.f32 %v758, %v26
    %v872 = vmul.f32 %v761, %v26
    %v873 = vmul.f32 %v764, %v26
    %v874 = vmul.f32 %v767, %v26
    %v875 = vmul.f32 %v770, %v26
    %v877 = vsel %vm395, %v870, 0
    %v880 = vsel %vm395, %v871, 0
    %v883 = vsel %vm395, %v872, 0
    %v886 = vsel %vm395, %v873, 0
    %v889 = vsel %vm395, %v874, 0
    %v892 = vsel %vm395, %v875, 0
    %v895 = vsel %vm395, %v806, 0
    %v898 = vsel %vm395, %v809, 0
    %v901 = vsel %vm395, %v812, 0
    %v904 = vsel %vm395, %v815, 0
    %v907 = vsel %vm395, %v818, 0
    %v910 = vsel %vm395, %v821, 0
    %912 = vmatpush.xpose.msra.mxu0 0.0
    %913 = vmatpush.xpose.msra.mxu0 0.0
    %914 = vmatpush.xpose.msra.mxu0 0.0
    %915 = vmatpush.xpose.msra.mxu0 0.0
    %916 = vmatpush.xpose.msra.mxu0 0.0
    %917 = vmatpush.xpose.msra.mxu0 0.0
    %918 = vmatpush.xpose.msra.mxu0 0.0
    %919 = vmatpush.xpose.msra.mxu0 0.0
    %920 = vmatpush.xpose.msra.mxu0 0.0
    %921 = vmatpush.xpose.msra.mxu0 0.0
    %922 = vmatpush.xpose.msra.mxu0 %v910
    %923 = vmatpush.xpose.msra.mxu0 %v907
    %924 = vmatpush.xpose.msra.mxu0 %v904
    %925 = vmatpush.xpose.msra.mxu0 %v901
    %926 = vmatpush.xpose.msra.mxu0 %v898
    %927 = vmatpush.xpose.msra.mxu0 %v895
    %928 = vmatmul.f32.gmra.mxu0 %v877
    %v929 = vpop.f32.mrf.mxu0
    %v930 = vadd.f32 0.0, %v929
    %931 = vmatmul.f32.gmra.mxu0 %v880
    %v932 = vpop.f32.mrf.mxu0
    %v933 = vadd.f32 0.0, %v932
    %934 = vmatmul.f32.gmra.mxu0 %v883
    %v935 = vpop.f32.mrf.mxu0
    %v936 = vadd.f32 0.0, %v935
    %937 = vmatmul.f32.gmra.mxu0 %v886
    %v938 = vpop.f32.mrf.mxu0
    %v939 = vadd.f32 0.0, %v938
    %940 = vmatmul.f32.gmra.mxu0 %v889
    %v941 = vpop.f32.mrf.mxu0
    %v942 = vadd.f32 0.0, %v941
    %943 = vmatmul.f32.gmra.mxu0 %v892
    %v944 = vpop.f32.mrf.mxu0
    %v945 = vadd.f32 0.0, %v944
    %946 = vdwg.mxu0
    %v947 = vmul.f32 %v930, 0.35355338
    %v948 = vmul.f32 %v933, 0.35355338
    %v949 = vmul.f32 %v936, 0.35355338
    %v950 = vmul.f32 %v939, 0.35355338
    %v951 = vmul.f32 %v942, 0.35355338
    %v952 = vmul.f32 %v945, 0.35355338
    %v953 = vadd.f32 %v947, %v116
    %v954 = vadd.f32 %v948, %v117
    %v955 = vadd.f32 %v949, %v118
    %v956 = vadd.f32 %v950, %v119
    %v957 = vadd.f32 %v951, %v120
    %v958 = vadd.f32 %v952, %v121
    %v959 = vsel %vm178, %v953, -inf
    %960 = vmax.xlane.f32.xlu0 %v959
    %v961 = vpop.xlane.xlu0 %960
    %v962 = vsel %vm178, %v954, -inf
    %963 = vmax.xlane.f32.xlu0 %v962
    %v964 = vpop.xlane.xlu0 %963
    %v965 = vsel %vm178, %v955, -inf
    %966 = vmax.xlane.f32.xlu0 %v965
    %v967 = vpop.xlane.xlu0 %966
    %v968 = vsel %vm178, %v956, -inf
    %969 = vmax.xlane.f32.xlu0 %v968
    %v970 = vpop.xlane.xlu0 %969
    %v971 = vsel %vm178, %v957, -inf
    %972 = vmax.xlane.f32.xlu0 %v971
    %v973 = vpop.xlane.xlu0 %972
    %v974 = vsel %vm178, %v958, -inf
    %975 = vmax.xlane.f32.xlu0 %v974
    %v976 = vpop.xlane.xlu0 %975
    %v977 = vsub.f32 %v953, %v961
    %v978 = vsub.f32 %v954, %v964
    %v979 = vsub.f32 %v955, %v967
    %v980 = vsub.f32 %v956, %v970
    %v981 = vsub.f32 %v957, %v973
    %v982 = vsub.f32 %v958, %v976
    %v983 = vmul.f32 %v977, 1.442695
    %v984 = vpow.pop %v983
    %v985 = vmul.f32 %v978, 1.442695
    %v986 = vpow.pop %v985
    %v987 = vmul.f32 %v979, 1.442695
    %v988 = vpow.pop %v987
    %v989 = vmul.f32 %v980, 1.442695
    %v990 = vpow.pop %v989
    %v991 = vmul.f32 %v981, 1.442695
    %v992 = vpow.pop %v991
    %v993 = vmul.f32 %v982, 1.442695
    %v994 = vpow.pop %v993
    %v995 = vsel %vm178, %v984, 0.0
    %996 = vadd.xlane.f32.xlu0 %v995
    %v997 = vpop.xlane.xlu0 %996
    %v998 = vsel %vm178, %v986, 0.0
    %999 = vadd.xlane.f32.xlu0 %v998
    %v1000 = vpop.xlane.xlu0 %999
    %v1001 = vsel %vm178, %v988, 0.0
    %1002 = vadd.xlane.f32.xlu0 %v1001
    %v1003 = vpop.xlane.xlu0 %1002
    %v1004 = vsel %vm178, %v990, 0.0
    %1005 = vadd.xlane.f32.xlu0 %v1004
    %v1006 = vpop.xlane.xlu0 %1005
    %v1007 = vsel %vm178, %v992, 0.0
    %1008 = vadd.xlane.f32.xlu0 %v1007
    %v1009 = vpop.xlane.xlu0 %1008
    %v1010 = vsel %vm178, %v994, 0.0
    %1011 = vadd.xlane.f32.xlu0 %v1010
    %v1012 = vpop.xlane.xlu0 %1011
    %v1013 = vrcp.pop %v997
    %v1014 = vrcp.pop %v1000
    %v1015 = vrcp.pop %v1003
    %v1016 = vrcp.pop %v1006
    %v1017 = vrcp.pop %v1009
    %v1018 = vrcp.pop %v1012
    %v1019 = vmul.f32 %v984, %v1013
    %v1020 = vmul.f32 %v986, %v1014
    %v1021 = vmul.f32 %v988, %v1015
    %v1022 = vmul.f32 %v990, %v1016
    %v1023 = vmul.f32 %v992, %v1017
    %v1024 = vmul.f32 %v994, %v1018
    %v1025 = vmul.f32 %v853, %v26
    %v1026 = vmul.f32 %v856, %v26
    %v1027 = vmul.f32 %v859, %v26
    %v1028 = vmul.f32 %v862, %v26
    %v1029 = vmul.f32 %v865, %v26
    %v1030 = vmul.f32 %v868, %v26
    %v1031 = vmul.f32 %v755, %v30
    %v1032 = vmul.f32 %v758, %v30
    %v1033 = vmul.f32 %v761, %v30
    %v1034 = vmul.f32 %v764, %v30
    %v1035 = vmul.f32 %v767, %v30
    %v1036 = vmul.f32 %v770, %v30
    %v1038 = vsel %vm395, %v1031, 0
    %v1041 = vsel %vm395, %v1032, 0
    %v1044 = vsel %vm395, %v1033, 0
    %v1047 = vsel %vm395, %v1034, 0
    %v1050 = vsel %vm395, %v1035, 0
    %v1053 = vsel %vm395, %v1036, 0
    %1055 = vmatpush.xpose.msra.mxu0 0.0
    %1056 = vmatpush.xpose.msra.mxu0 0.0
    %1057 = vmatpush.xpose.msra.mxu0 0.0
    %1058 = vmatpush.xpose.msra.mxu0 0.0
    %1059 = vmatpush.xpose.msra.mxu0 0.0
    %1060 = vmatpush.xpose.msra.mxu0 0.0
    %1061 = vmatpush.xpose.msra.mxu0 0.0
    %1062 = vmatpush.xpose.msra.mxu0 0.0
    %1063 = vmatpush.xpose.msra.mxu0 0.0
    %1064 = vmatpush.xpose.msra.mxu0 0.0
    %1065 = vmatpush.xpose.msra.mxu0 %v910
    %1066 = vmatpush.xpose.msra.mxu0 %v907
    %1067 = vmatpush.xpose.msra.mxu0 %v904
    %1068 = vmatpush.xpose.msra.mxu0 %v901
    %1069 = vmatpush.xpose.msra.mxu0 %v898
    %1070 = vmatpush.xpose.msra.mxu0 %v895
    %1071 = vmatmul.f32.gmra.mxu0 %v1038
    %v1072 = vpop.f32.mrf.mxu0
    %v1073 = vadd.f32 0.0, %v1072
    %1074 = vmatmul.f32.gmra.mxu0 %v1041
    %v1075 = vpop.f32.mrf.mxu0
    %v1076 = vadd.f32 0.0, %v1075
    %1077 = vmatmul.f32.gmra.mxu0 %v1044
    %v1078 = vpop.f32.mrf.mxu0
    %v1079 = vadd.f32 0.0, %v1078
    %1080 = vmatmul.f32.gmra.mxu0 %v1047
    %v1081 = vpop.f32.mrf.mxu0
    %v1082 = vadd.f32 0.0, %v1081
    %1083 = vmatmul.f32.gmra.mxu0 %v1050
    %v1084 = vpop.f32.mrf.mxu0
    %v1085 = vadd.f32 0.0, %v1084
    %1086 = vmatmul.f32.gmra.mxu0 %v1053
    %v1087 = vpop.f32.mrf.mxu0
    %v1088 = vadd.f32 0.0, %v1087
    %1089 = vdwg.mxu0
    %v1090 = vmul.f32 %v1073, 0.35355338
    %v1091 = vmul.f32 %v1076, 0.35355338
    %v1092 = vmul.f32 %v1079, 0.35355338
    %v1093 = vmul.f32 %v1082, 0.35355338
    %v1094 = vmul.f32 %v1085, 0.35355338
    %v1095 = vmul.f32 %v1088, 0.35355338
    %v1096 = vadd.f32 %v1090, %v116
    %v1097 = vadd.f32 %v1091, %v117
    %v1098 = vadd.f32 %v1092, %v118
    %v1099 = vadd.f32 %v1093, %v119
    %v1100 = vadd.f32 %v1094, %v120
    %v1101 = vadd.f32 %v1095, %v121
    %v1102 = vsel %vm178, %v1096, -inf
    %1103 = vmax.xlane.f32.xlu0 %v1102
    %v1104 = vpop.xlane.xlu0 %1103
    %v1105 = vsel %vm178, %v1097, -inf
    %1106 = vmax.xlane.f32.xlu0 %v1105
    %v1107 = vpop.xlane.xlu0 %1106
    %v1108 = vsel %vm178, %v1098, -inf
    %1109 = vmax.xlane.f32.xlu0 %v1108
    %v1110 = vpop.xlane.xlu0 %1109
    %v1111 = vsel %vm178, %v1099, -inf
    %1112 = vmax.xlane.f32.xlu0 %v1111
    %v1113 = vpop.xlane.xlu0 %1112
    %v1114 = vsel %vm178, %v1100, -inf
    %1115 = vmax.xlane.f32.xlu0 %v1114
    %v1116 = vpop.xlane.xlu0 %1115
    %v1117 = vsel %vm178, %v1101, -inf
    %1118 = vmax.xlane.f32.xlu0 %v1117
    %v1119 = vpop.xlane.xlu0 %1118
    %v1120 = vsub.f32 %v1096, %v1104
    %v1121 = vsub.f32 %v1097, %v1107
    %v1122 = vsub.f32 %v1098, %v1110
    %v1123 = vsub.f32 %v1099, %v1113
    %v1124 = vsub.f32 %v1100, %v1116
    %v1125 = vsub.f32 %v1101, %v1119
    %v1126 = vmul.f32 %v1120, 1.442695
    %v1127 = vpow.pop %v1126
    %v1128 = vmul.f32 %v1121, 1.442695
    %v1129 = vpow.pop %v1128
    %v1130 = vmul.f32 %v1122, 1.442695
    %v1131 = vpow.pop %v1130
    %v1132 = vmul.f32 %v1123, 1.442695
    %v1133 = vpow.pop %v1132
    %v1134 = vmul.f32 %v1124, 1.442695
    %v1135 = vpow.pop %v1134
    %v1136 = vmul.f32 %v1125, 1.442695
    %v1137 = vpow.pop %v1136
    %v1138 = vsel %vm178, %v1127, 0.0
    %1139 = vadd.xlane.f32.xlu0 %v1138
    %v1140 = vpop.xlane.xlu0 %1139
    %v1141 = vsel %vm178, %v1129, 0.0
    %1142 = vadd.xlane.f32.xlu0 %v1141
    %v1143 = vpop.xlane.xlu0 %1142
    %v1144 = vsel %vm178, %v1131, 0.0
    %1145 = vadd.xlane.f32.xlu0 %v1144
    %v1146 = vpop.xlane.xlu0 %1145
    %v1147 = vsel %vm178, %v1133, 0.0
    %1148 = vadd.xlane.f32.xlu0 %v1147
    %v1149 = vpop.xlane.xlu0 %1148
    %v1150 = vsel %vm178, %v1135, 0.0
    %1151 = vadd.xlane.f32.xlu0 %v1150
    %v1152 = vpop.xlane.xlu0 %1151
    %v1153 = vsel %vm178, %v1137, 0.0
    %1154 = vadd.xlane.f32.xlu0 %v1153
    %v1155 = vpop.xlane.xlu0 %1154
    %v1156 = vrcp.pop %v1140
    %v1157 = vrcp.pop %v1143
    %v1158 = vrcp.pop %v1146
    %v1159 = vrcp.pop %v1149
    %v1160 = vrcp.pop %v1152
    %v1161 = vrcp.pop %v1155
    %v1162 = vmul.f32 %v1127, %v1156
    %v1163 = vmul.f32 %v1129, %v1157
    %v1164 = vmul.f32 %v1131, %v1158
    %v1165 = vmul.f32 %v1133, %v1159
    %v1166 = vmul.f32 %v1135, %v1160
    %v1167 = vmul.f32 %v1137, %v1161
    %v1168 = vmul.f32 %v853, %v30
    %v1169 = vmul.f32 %v856, %v30
    %v1170 = vmul.f32 %v859, %v30
    %v1171 = vmul.f32 %v862, %v30
    %v1172 = vmul.f32 %v865, %v30
    %v1173 = vmul.f32 %v868, %v30
    %v1175 = vsel %vm178, %v1162, 0
    %v1178 = vsel %vm178, %v1163, 0
    %v1181 = vsel %vm178, %v1164, 0
    %v1184 = vsel %vm178, %v1165, 0
    %v1187 = vsel %vm178, %v1166, 0
    %v1190 = vsel %vm178, %v1167, 0
    %1192 = vmatpush.msra.mxu0 0.0
    %1193 = vmatpush.msra.mxu0 0.0
    %1194 = vmatpush.msra.mxu0 0.0
    %1195 = vmatpush.msra.mxu0 0.0
    %1196 = vmatpush.msra.mxu0 0.0
    %1197 = vmatpush.msra.mxu0 0.0
    %1198 = vmatpush.msra.mxu0 0.0
    %1199 = vmatpush.msra.mxu0 0.0
    %1200 = vmatpush.msra.mxu0 0.0
    %1201 = vmatpush.msra.mxu0 0.0
    %1202 = vmatpush.msra.mxu0 %v1173
    %1203 = vmatpush.msra.mxu0 %v1172
    %1204 = vmatpush.msra.mxu0 %v1171
    %1205 = vmatpush.msra.mxu0 %v1170
    %1206 = vmatpush.msra.mxu0 %v1169
    %1207 = vmatpush.msra.mxu0 %v1168
    %1208 = vmatmul.f32.gmra.mxu0 %v1175
    %v1209 = vpop.f32.mrf.mxu0
    %v1210 = vadd.f32 0.0, %v1209
    %1211 = vmatmul.f32.gmra.mxu0 %v1178
    %v1212 = vpop.f32.mrf.mxu0
    %v1213 = vadd.f32 0.0, %v1212
    %1214 = vmatmul.f32.gmra.mxu0 %v1181
    %v1215 = vpop.f32.mrf.mxu0
    %v1216 = vadd.f32 0.0, %v1215
    %1217 = vmatmul.f32.gmra.mxu0 %v1184
    %v1218 = vpop.f32.mrf.mxu0
    %v1219 = vadd.f32 0.0, %v1218
    %1220 = vmatmul.f32.gmra.mxu0 %v1187
    %v1221 = vpop.f32.mrf.mxu0
    %v1222 = vadd.f32 0.0, %v1221
    %1223 = vmatmul.f32.gmra.mxu0 %v1190
    %v1224 = vpop.f32.mrf.mxu0
    %v1225 = vadd.f32 0.0, %v1224
    %1226 = vdwg.mxu0
    %v1228 = vsel %vm178, %v1019, 0
    %v1231 = vsel %vm178, %v1020, 0
    %v1234 = vsel %vm178, %v1021, 0
    %v1237 = vsel %vm178, %v1022, 0
    %v1240 = vsel %vm178, %v1023, 0
    %v1243 = vsel %vm178, %v1024, 0
    %1245 = vmatpush.msra.mxu0 0.0
    %1246 = vmatpush.msra.mxu0 0.0
    %1247 = vmatpush.msra.mxu0 0.0
    %1248 = vmatpush.msra.mxu0 0.0
    %1249 = vmatpush.msra.mxu0 0.0
    %1250 = vmatpush.msra.mxu0 0.0
    %1251 = vmatpush.msra.mxu0 0.0
    %1252 = vmatpush.msra.mxu0 0.0
    %1253 = vmatpush.msra.mxu0 0.0
    %1254 = vmatpush.msra.mxu0 0.0
    %1255 = vmatpush.msra.mxu0 %v1030
    %1256 = vmatpush.msra.mxu0 %v1029
    %1257 = vmatpush.msra.mxu0 %v1028
    %1258 = vmatpush.msra.mxu0 %v1027
    %1259 = vmatpush.msra.mxu0 %v1026
    %1260 = vmatpush.msra.mxu0 %v1025
    %1261 = vmatmul.f32.gmra.mxu0 %v1228
    %v1262 = vpop.f32.mrf.mxu0
    %v1263 = vadd.f32 %v1210, %v1262
    %1264 = vmatmul.f32.gmra.mxu0 %v1231
    %v1265 = vpop.f32.mrf.mxu0
    %v1266 = vadd.f32 %v1213, %v1265
    %1267 = vmatmul.f32.gmra.mxu0 %v1234
    %v1268 = vpop.f32.mrf.mxu0
    %v1269 = vadd.f32 %v1216, %v1268
    %1270 = vmatmul.f32.gmra.mxu0 %v1237
    %v1271 = vpop.f32.mrf.mxu0
    %v1272 = vadd.f32 %v1219, %v1271
    %1273 = vmatmul.f32.gmra.mxu0 %v1240
    %v1274 = vpop.f32.mrf.mxu0
    %v1275 = vadd.f32 %v1222, %v1274
    %1276 = vmatmul.f32.gmra.mxu0 %v1243
    %v1277 = vpop.f32.mrf.mxu0
    %v1278 = vadd.f32 %v1225, %v1277
    %1279 = vdwg.mxu0
    %v1280 = vmul.f32 %v755, %v34
    %v1281 = vmul.f32 %v758, %v34
    %v1282 = vmul.f32 %v761, %v34
    %v1283 = vmul.f32 %v764, %v34
    %v1284 = vmul.f32 %v767, %v34
    %v1285 = vmul.f32 %v770, %v34
    %v1287 = vsel %vm395, %v1280, 0
    %v1290 = vsel %vm395, %v1281, 0
    %v1293 = vsel %vm395, %v1282, 0
    %v1296 = vsel %vm395, %v1283, 0
    %v1299 = vsel %vm395, %v1284, 0
    %v1302 = vsel %vm395, %v1285, 0
    %1304 = vmatpush.xpose.msra.mxu0 0.0
    %1305 = vmatpush.xpose.msra.mxu0 0.0
    %1306 = vmatpush.xpose.msra.mxu0 0.0
    %1307 = vmatpush.xpose.msra.mxu0 0.0
    %1308 = vmatpush.xpose.msra.mxu0 0.0
    %1309 = vmatpush.xpose.msra.mxu0 0.0
    %1310 = vmatpush.xpose.msra.mxu0 0.0
    %1311 = vmatpush.xpose.msra.mxu0 0.0
    %1312 = vmatpush.xpose.msra.mxu0 0.0
    %1313 = vmatpush.xpose.msra.mxu0 0.0
    %1314 = vmatpush.xpose.msra.mxu0 %v910
    %1315 = vmatpush.xpose.msra.mxu0 %v907
    %1316 = vmatpush.xpose.msra.mxu0 %v904
    %1317 = vmatpush.xpose.msra.mxu0 %v901
    %1318 = vmatpush.xpose.msra.mxu0 %v898
    %1319 = vmatpush.xpose.msra.mxu0 %v895
    %1320 = vmatmul.f32.gmra.mxu0 %v1287
    %v1321 = vpop.f32.mrf.mxu0
    %v1322 = vadd.f32 0.0, %v1321
    %1323 = vmatmul.f32.gmra.mxu0 %v1290
    %v1324 = vpop.f32.mrf.mxu0
    %v1325 = vadd.f32 0.0, %v1324
    %1326 = vmatmul.f32.gmra.mxu0 %v1293
    %v1327 = vpop.f32.mrf.mxu0
    %v1328 = vadd.f32 0.0, %v1327
    %1329 = vmatmul.f32.gmra.mxu0 %v1296
    %v1330 = vpop.f32.mrf.mxu0
    %v1331 = vadd.f32 0.0, %v1330
    %1332 = vmatmul.f32.gmra.mxu0 %v1299
    %v1333 = vpop.f32.mrf.mxu0
    %v1334 = vadd.f32 0.0, %v1333
    %1335 = vmatmul.f32.gmra.mxu0 %v1302
    %v1336 = vpop.f32.mrf.mxu0
    %v1337 = vadd.f32 0.0, %v1336
    %1338 = vdwg.mxu0
    %v1339 = vmul.f32 %v1322, 0.35355338
    %v1340 = vmul.f32 %v1325, 0.35355338
    %v1341 = vmul.f32 %v1328, 0.35355338
    %v1342 = vmul.f32 %v1331, 0.35355338
    %v1343 = vmul.f32 %v1334, 0.35355338
    %v1344 = vmul.f32 %v1337, 0.35355338
    %v1345 = vadd.f32 %v1339, %v116
    %v1346 = vadd.f32 %v1340, %v117
    %v1347 = vadd.f32 %v1341, %v118
    %v1348 = vadd.f32 %v1342, %v119
    %v1349 = vadd.f32 %v1343, %v120
    %v1350 = vadd.f32 %v1344, %v121
    %v1351 = vsel %vm178, %v1345, -inf
    %1352 = vmax.xlane.f32.xlu0 %v1351
    %v1353 = vpop.xlane.xlu0 %1352
    %v1354 = vsel %vm178, %v1346, -inf
    %1355 = vmax.xlane.f32.xlu0 %v1354
    %v1356 = vpop.xlane.xlu0 %1355
    %v1357 = vsel %vm178, %v1347, -inf
    %1358 = vmax.xlane.f32.xlu0 %v1357
    %v1359 = vpop.xlane.xlu0 %1358
    %v1360 = vsel %vm178, %v1348, -inf
    %1361 = vmax.xlane.f32.xlu0 %v1360
    %v1362 = vpop.xlane.xlu0 %1361
    %v1363 = vsel %vm178, %v1349, -inf
    %1364 = vmax.xlane.f32.xlu0 %v1363
    %v1365 = vpop.xlane.xlu0 %1364
    %v1366 = vsel %vm178, %v1350, -inf
    %1367 = vmax.xlane.f32.xlu0 %v1366
    %v1368 = vpop.xlane.xlu0 %1367
    %v1369 = vsub.f32 %v1345, %v1353
    %v1370 = vsub.f32 %v1346, %v1356
    %v1371 = vsub.f32 %v1347, %v1359
    %v1372 = vsub.f32 %v1348, %v1362
    %v1373 = vsub.f32 %v1349, %v1365
    %v1374 = vsub.f32 %v1350, %v1368
    %v1375 = vmul.f32 %v1369, 1.442695
    %v1376 = vpow.pop %v1375
    %v1377 = vmul.f32 %v1370, 1.442695
    %v1378 = vpow.pop %v1377
    %v1379 = vmul.f32 %v1371, 1.442695
    %v1380 = vpow.pop %v1379
    %v1381 = vmul.f32 %v1372, 1.442695
    %v1382 = vpow.pop %v1381
    %v1383 = vmul.f32 %v1373, 1.442695
    %v1384 = vpow.pop %v1383
    %v1385 = vmul.f32 %v1374, 1.442695
    %v1386 = vpow.pop %v1385
    %v1387 = vsel %vm178, %v1376, 0.0
    %1388 = vadd.xlane.f32.xlu0 %v1387
    %v1389 = vpop.xlane.xlu0 %1388
    %v1390 = vsel %vm178, %v1378, 0.0
    %1391 = vadd.xlane.f32.xlu0 %v1390
    %v1392 = vpop.xlane.xlu0 %1391
    %v1393 = vsel %vm178, %v1380, 0.0
    %1394 = vadd.xlane.f32.xlu0 %v1393
    %v1395 = vpop.xlane.xlu0 %1394
    %v1396 = vsel %vm178, %v1382, 0.0
    %1397 = vadd.xlane.f32.xlu0 %v1396
    %v1398 = vpop.xlane.xlu0 %1397
    %v1399 = vsel %vm178, %v1384, 0.0
    %1400 = vadd.xlane.f32.xlu0 %v1399
    %v1401 = vpop.xlane.xlu0 %1400
    %v1402 = vsel %vm178, %v1386, 0.0
    %1403 = vadd.xlane.f32.xlu0 %v1402
    %v1404 = vpop.xlane.xlu0 %1403
    %v1405 = vrcp.pop %v1389
    %v1406 = vrcp.pop %v1392
    %v1407 = vrcp.pop %v1395
    %v1408 = vrcp.pop %v1398
    %v1409 = vrcp.pop %v1401
    %v1410 = vrcp.pop %v1404
    %v1411 = vmul.f32 %v1376, %v1405
    %v1412 = vmul.f32 %v1378, %v1406
    %v1413 = vmul.f32 %v1380, %v1407
    %v1414 = vmul.f32 %v1382, %v1408
    %v1415 = vmul.f32 %v1384, %v1409
    %v1416 = vmul.f32 %v1386, %v1410
    %v1417 = vmul.f32 %v853, %v34
    %v1418 = vmul.f32 %v856, %v34
    %v1419 = vmul.f32 %v859, %v34
    %v1420 = vmul.f32 %v862, %v34
    %v1421 = vmul.f32 %v865, %v34
    %v1422 = vmul.f32 %v868, %v34
    %v1424 = vsel %vm178, %v1411, 0
    %v1427 = vsel %vm178, %v1412, 0
    %v1430 = vsel %vm178, %v1413, 0
    %v1433 = vsel %vm178, %v1414, 0
    %v1436 = vsel %vm178, %v1415, 0
    %v1439 = vsel %vm178, %v1416, 0
    %1441 = vmatpush.msra.mxu0 0.0
    %1442 = vmatpush.msra.mxu0 0.0
    %1443 = vmatpush.msra.mxu0 0.0
    %1444 = vmatpush.msra.mxu0 0.0
    %1445 = vmatpush.msra.mxu0 0.0
    %1446 = vmatpush.msra.mxu0 0.0
    %1447 = vmatpush.msra.mxu0 0.0
    %1448 = vmatpush.msra.mxu0 0.0
    %1449 = vmatpush.msra.mxu0 0.0
    %1450 = vmatpush.msra.mxu0 0.0
    %1451 = vmatpush.msra.mxu0 %v1422
    %1452 = vmatpush.msra.mxu0 %v1421
    %1453 = vmatpush.msra.mxu0 %v1420
    %1454 = vmatpush.msra.mxu0 %v1419
    %1455 = vmatpush.msra.mxu0 %v1418
    %1456 = vmatpush.msra.mxu0 %v1417
    %1457 = vmatmul.f32.gmra.mxu0 %v1424
    %v1458 = vpop.f32.mrf.mxu0
    %v1459 = vadd.f32 0.0, %v1458
    %1460 = vmatmul.f32.gmra.mxu0 %v1427
    %v1461 = vpop.f32.mrf.mxu0
    %v1462 = vadd.f32 0.0, %v1461
    %1463 = vmatmul.f32.gmra.mxu0 %v1430
    %v1464 = vpop.f32.mrf.mxu0
    %v1465 = vadd.f32 0.0, %v1464
    %1466 = vmatmul.f32.gmra.mxu0 %v1433
    %v1467 = vpop.f32.mrf.mxu0
    %v1468 = vadd.f32 0.0, %v1467
    %1469 = vmatmul.f32.gmra.mxu0 %v1436
    %v1470 = vpop.f32.mrf.mxu0
    %v1471 = vadd.f32 0.0, %v1470
    %1472 = vmatmul.f32.gmra.mxu0 %v1439
    %v1473 = vpop.f32.mrf.mxu0
    %v1474 = vadd.f32 0.0, %v1473
    %1475 = vdwg.mxu0
    %v1476 = vadd.f32 %v1263, %v1459
    %v1477 = vadd.f32 %v1266, %v1462
    %v1478 = vadd.f32 %v1269, %v1465
    %v1479 = vadd.f32 %v1272, %v1468
    %v1480 = vadd.f32 %v1275, %v1471
    %v1481 = vadd.f32 %v1278, %v1474
    %v1482 = vmul.f32 %v755, %v38
    %v1483 = vmul.f32 %v758, %v38
    %v1484 = vmul.f32 %v761, %v38
    %v1485 = vmul.f32 %v764, %v38
    %v1486 = vmul.f32 %v767, %v38
    %v1487 = vmul.f32 %v770, %v38
    %v1489 = vsel %vm395, %v1482, 0
    %v1492 = vsel %vm395, %v1483, 0
    %v1495 = vsel %vm395, %v1484, 0
    %v1498 = vsel %vm395, %v1485, 0
    %v1501 = vsel %vm395, %v1486, 0
    %v1504 = vsel %vm395, %v1487, 0
    %1506 = vmatpush.xpose.msra.mxu0 0.0
    %1507 = vmatpush.xpose.msra.mxu0 0.0
    %1508 = vmatpush.xpose.msra.mxu0 0.0
    %1509 = vmatpush.xpose.msra.mxu0 0.0
    %1510 = vmatpush.xpose.msra.mxu0 0.0
    %1511 = vmatpush.xpose.msra.mxu0 0.0
    %1512 = vmatpush.xpose.msra.mxu0 0.0
    %1513 = vmatpush.xpose.msra.mxu0 0.0
    %1514 = vmatpush.xpose.msra.mxu0 0.0
    %1515 = vmatpush.xpose.msra.mxu0 0.0
    %1516 = vmatpush.xpose.msra.mxu0 %v910
    %1517 = vmatpush.xpose.msra.mxu0 %v907
    %1518 = vmatpush.xpose.msra.mxu0 %v904
    %1519 = vmatpush.xpose.msra.mxu0 %v901
    %1520 = vmatpush.xpose.msra.mxu0 %v898
    %1521 = vmatpush.xpose.msra.mxu0 %v895
    %1522 = vmatmul.f32.gmra.mxu0 %v1489
    %v1523 = vpop.f32.mrf.mxu0
    %v1524 = vadd.f32 0.0, %v1523
    %1525 = vmatmul.f32.gmra.mxu0 %v1492
    %v1526 = vpop.f32.mrf.mxu0
    %v1527 = vadd.f32 0.0, %v1526
    %1528 = vmatmul.f32.gmra.mxu0 %v1495
    %v1529 = vpop.f32.mrf.mxu0
    %v1530 = vadd.f32 0.0, %v1529
    %1531 = vmatmul.f32.gmra.mxu0 %v1498
    %v1532 = vpop.f32.mrf.mxu0
    %v1533 = vadd.f32 0.0, %v1532
    %1534 = vmatmul.f32.gmra.mxu0 %v1501
    %v1535 = vpop.f32.mrf.mxu0
    %v1536 = vadd.f32 0.0, %v1535
    %1537 = vmatmul.f32.gmra.mxu0 %v1504
    %v1538 = vpop.f32.mrf.mxu0
    %v1539 = vadd.f32 0.0, %v1538
    %1540 = vdwg.mxu0
    %v1541 = vmul.f32 %v1524, 0.35355338
    %v1542 = vmul.f32 %v1527, 0.35355338
    %v1543 = vmul.f32 %v1530, 0.35355338
    %v1544 = vmul.f32 %v1533, 0.35355338
    %v1545 = vmul.f32 %v1536, 0.35355338
    %v1546 = vmul.f32 %v1539, 0.35355338
    %v1547 = vadd.f32 %v1541, %v116
    %v1548 = vadd.f32 %v1542, %v117
    %v1549 = vadd.f32 %v1543, %v118
    %v1550 = vadd.f32 %v1544, %v119
    %v1551 = vadd.f32 %v1545, %v120
    %v1552 = vadd.f32 %v1546, %v121
    %v1553 = vsel %vm178, %v1547, -inf
    %1554 = vmax.xlane.f32.xlu0 %v1553
    %v1555 = vpop.xlane.xlu0 %1554
    %v1556 = vsel %vm178, %v1548, -inf
    %1557 = vmax.xlane.f32.xlu0 %v1556
    %v1558 = vpop.xlane.xlu0 %1557
    %v1559 = vsel %vm178, %v1549, -inf
    %1560 = vmax.xlane.f32.xlu0 %v1559
    %v1561 = vpop.xlane.xlu0 %1560
    %v1562 = vsel %vm178, %v1550, -inf
    %1563 = vmax.xlane.f32.xlu0 %v1562
    %v1564 = vpop.xlane.xlu0 %1563
    %v1565 = vsel %vm178, %v1551, -inf
    %1566 = vmax.xlane.f32.xlu0 %v1565
    %v1567 = vpop.xlane.xlu0 %1566
    %v1568 = vsel %vm178, %v1552, -inf
    %1569 = vmax.xlane.f32.xlu0 %v1568
    %v1570 = vpop.xlane.xlu0 %1569
    %v1571 = vsub.f32 %v1547, %v1555
    %v1572 = vsub.f32 %v1548, %v1558
    %v1573 = vsub.f32 %v1549, %v1561
    %v1574 = vsub.f32 %v1550, %v1564
    %v1575 = vsub.f32 %v1551, %v1567
    %v1576 = vsub.f32 %v1552, %v1570
    %v1577 = vmul.f32 %v1571, 1.442695
    %v1578 = vpow.pop %v1577
    %v1579 = vmul.f32 %v1572, 1.442695
    %v1580 = vpow.pop %v1579
    %v1581 = vmul.f32 %v1573, 1.442695
    %v1582 = vpow.pop %v1581
    %v1583 = vmul.f32 %v1574, 1.442695
    %v1584 = vpow.pop %v1583
    %v1585 = vmul.f32 %v1575, 1.442695
    %v1586 = vpow.pop %v1585
    %v1587 = vmul.f32 %v1576, 1.442695
    %v1588 = vpow.pop %v1587
    %v1589 = vsel %vm178, %v1578, 0.0
    %1590 = vadd.xlane.f32.xlu0 %v1589
    %v1591 = vpop.xlane.xlu0 %1590
    %v1592 = vsel %vm178, %v1580, 0.0
    %1593 = vadd.xlane.f32.xlu0 %v1592
    %v1594 = vpop.xlane.xlu0 %1593
    %v1595 = vsel %vm178, %v1582, 0.0
    %1596 = vadd.xlane.f32.xlu0 %v1595
    %v1597 = vpop.xlane.xlu0 %1596
    %v1598 = vsel %vm178, %v1584, 0.0
    %1599 = vadd.xlane.f32.xlu0 %v1598
    %v1600 = vpop.xlane.xlu0 %1599
    %v1601 = vsel %vm178, %v1586, 0.0
    %1602 = vadd.xlane.f32.xlu0 %v1601
    %v1603 = vpop.xlane.xlu0 %1602
    %v1604 = vsel %vm178, %v1588, 0.0
    %1605 = vadd.xlane.f32.xlu0 %v1604
    %v1606 = vpop.xlane.xlu0 %1605
    %v1607 = vrcp.pop %v1591
    %v1608 = vrcp.pop %v1594
    %v1609 = vrcp.pop %v1597
    %v1610 = vrcp.pop %v1600
    %v1611 = vrcp.pop %v1603
    %v1612 = vrcp.pop %v1606
    %v1613 = vmul.f32 %v1578, %v1607
    %v1614 = vmul.f32 %v1580, %v1608
    %v1615 = vmul.f32 %v1582, %v1609
    %v1616 = vmul.f32 %v1584, %v1610
    %v1617 = vmul.f32 %v1586, %v1611
    %v1618 = vmul.f32 %v1588, %v1612
    %v1619 = vmul.f32 %v853, %v38
    %v1620 = vmul.f32 %v856, %v38
    %v1621 = vmul.f32 %v859, %v38
    %v1622 = vmul.f32 %v862, %v38
    %v1623 = vmul.f32 %v865, %v38
    %v1624 = vmul.f32 %v868, %v38
    %v1626 = vsel %vm178, %v1613, 0
    %v1629 = vsel %vm178, %v1614, 0
    %v1632 = vsel %vm178, %v1615, 0
    %v1635 = vsel %vm178, %v1616, 0
    %v1638 = vsel %vm178, %v1617, 0
    %v1641 = vsel %vm178, %v1618, 0
    %1643 = vmatpush.msra.mxu0 0.0
    %1644 = vmatpush.msra.mxu0 0.0
    %1645 = vmatpush.msra.mxu0 0.0
    %1646 = vmatpush.msra.mxu0 0.0
    %1647 = vmatpush.msra.mxu0 0.0
    %1648 = vmatpush.msra.mxu0 0.0
    %1649 = vmatpush.msra.mxu0 0.0
    %1650 = vmatpush.msra.mxu0 0.0
    %1651 = vmatpush.msra.mxu0 0.0
    %1652 = vmatpush.msra.mxu0 0.0
    %1653 = vmatpush.msra.mxu0 %v1624
    %1654 = vmatpush.msra.mxu0 %v1623
    %1655 = vmatpush.msra.mxu0 %v1622
    %1656 = vmatpush.msra.mxu0 %v1621
    %1657 = vmatpush.msra.mxu0 %v1620
    %1658 = vmatpush.msra.mxu0 %v1619
    %1659 = vmatmul.f32.gmra.mxu0 %v1626
    %v1660 = vpop.f32.mrf.mxu0
    %v1661 = vadd.f32 0.0, %v1660
    %1662 = vmatmul.f32.gmra.mxu0 %v1629
    %v1663 = vpop.f32.mrf.mxu0
    %v1664 = vadd.f32 0.0, %v1663
    %1665 = vmatmul.f32.gmra.mxu0 %v1632
    %v1666 = vpop.f32.mrf.mxu0
    %v1667 = vadd.f32 0.0, %v1666
    %1668 = vmatmul.f32.gmra.mxu0 %v1635
    %v1669 = vpop.f32.mrf.mxu0
    %v1670 = vadd.f32 0.0, %v1669
    %1671 = vmatmul.f32.gmra.mxu0 %v1638
    %v1672 = vpop.f32.mrf.mxu0
    %v1673 = vadd.f32 0.0, %v1672
    %1674 = vmatmul.f32.gmra.mxu0 %v1641
    %v1675 = vpop.f32.mrf.mxu0
    %v1676 = vadd.f32 0.0, %v1675
    %1677 = vdwg.mxu0
    %v1678 = vadd.f32 %v1476, %v1661
    %v1679 = vadd.f32 %v1477, %v1664
    %v1680 = vadd.f32 %v1478, %v1667
    %v1681 = vadd.f32 %v1479, %v1670
    %v1682 = vadd.f32 %v1480, %v1673
    %v1683 = vadd.f32 %v1481, %v1676
    %1684 = vrot.lane.b32.xlu0 %v715, 32
    %v1685 = vpop.permute.xlu0 %1684
    %1686 = vrot.lane.b32.xlu0 %v716, 32
    %v1687 = vpop.permute.xlu0 %1686
    %1688 = vrot.lane.b32.xlu0 %v717, 32
    %v1689 = vpop.permute.xlu0 %1688
    %1690 = vrot.lane.b32.xlu0 %v718, 32
    %v1691 = vpop.permute.xlu0 %1690
    %v1697 = vsel %vm395, %v1678, 0
    %v1700 = vsel %vm395, %v1679, 0
    %v1703 = vsel %vm395, %v1680, 0
    %v1706 = vsel %vm395, %v1681, 0
    %v1709 = vsel %vm395, %v1682, 0
    %v1712 = vsel %vm395, %v1683, 0
    %1714 = vmatpush.msra.mxu0 0.0
    %1715 = vmatpush.msra.mxu0 0.0
    %1716 = vmatpush.msra.mxu0 0.0
    %1717 = vmatpush.msra.mxu0 0.0
    %1718 = vmatpush.msra.mxu0 0.0
    %1719 = vmatpush.msra.mxu0 0.0
    %1720 = vmatpush.msra.mxu0 0.0
    %1721 = vmatpush.msra.mxu0 0.0
    %1722 = vmatpush.msra.mxu0 0.0
    %1723 = vmatpush.msra.mxu0 0.0
    %1724 = vmatpush.msra.mxu0 0.0
    %1725 = vmatpush.msra.mxu0 0.0
    %1726 = vmatpush.msra.mxu0 %v1691
    %1727 = vmatpush.msra.mxu0 %v1689
    %1728 = vmatpush.msra.mxu0 %v1687
    %1729 = vmatpush.msra.mxu0 %v1685
    %1730 = vmatmul.f32.gmra.mxu0 %v1697
    %v1731 = vpop.f32.mrf.mxu0
    %v1732 = vadd.f32 0.0, %v1731
    %1733 = vmatmul.f32.gmra.mxu0 %v1700
    %v1734 = vpop.f32.mrf.mxu0
    %v1735 = vadd.f32 0.0, %v1734
    %1736 = vmatmul.f32.gmra.mxu0 %v1703
    %v1737 = vpop.f32.mrf.mxu0
    %v1738 = vadd.f32 0.0, %v1737
    %1739 = vmatmul.f32.gmra.mxu0 %v1706
    %v1740 = vpop.f32.mrf.mxu0
    %v1741 = vadd.f32 0.0, %v1740
    %1742 = vmatmul.f32.gmra.mxu0 %v1709
    %v1743 = vpop.f32.mrf.mxu0
    %v1744 = vadd.f32 0.0, %v1743
    %1745 = vmatmul.f32.gmra.mxu0 %v1712
    %v1746 = vpop.f32.mrf.mxu0
    %v1747 = vadd.f32 0.0, %v1746
    %1748 = vdwg.mxu0
    %v1749 = vadd.f32 %v561, %v1732
    %v1750 = vadd.f32 %v562, %v1735
    %v1751 = vadd.f32 %v563, %v1738
    %v1752 = vadd.f32 %v564, %v1741
    %v1753 = vadd.f32 %v565, %v1744
    %v1754 = vadd.f32 %v566, %v1747
    %v1755 = vld [vmem:[%s4 + $0x7] sm:$0x1]
    %v1756 = vperm.slane %v1755, 0
    %v1757 = vadd.f32 %v1749, %v1756
    %v1758 = vadd.f32 %v1750, %v1756
    %v1759 = vadd.f32 %v1751, %v1756
    %v1760 = vadd.f32 %v1752, %v1756
    %v1761 = vadd.f32 %v1753, %v1756
    %v1762 = vadd.f32 %v1754, %v1756
    %v1763 = vld [vmem:[%s4 + $0x8] sm:$0x1]
    %v1764 = vld [vmem:[%s4 + $0x9] sm:$0x1]
    %v1765 = vsel %vm395, %v1757, 0.0
    %1766 = vadd.xlane.f32.xlu0 %v1765
    %v1767 = vpop.xlane.xlu0 %1766
    %v1768 = vsel %vm395, %v1758, 0.0
    %1769 = vadd.xlane.f32.xlu0 %v1768
    %v1770 = vpop.xlane.xlu0 %1769
    %v1771 = vsel %vm395, %v1759, 0.0
    %1772 = vadd.xlane.f32.xlu0 %v1771
    %v1773 = vpop.xlane.xlu0 %1772
    %v1774 = vsel %vm395, %v1760, 0.0
    %1775 = vadd.xlane.f32.xlu0 %v1774
    %v1776 = vpop.xlane.xlu0 %1775
    %v1777 = vsel %vm395, %v1761, 0.0
    %1778 = vadd.xlane.f32.xlu0 %v1777
    %v1779 = vpop.xlane.xlu0 %1778
    %v1780 = vsel %vm395, %v1762, 0.0
    %1781 = vadd.xlane.f32.xlu0 %v1780
    %v1782 = vpop.xlane.xlu0 %1781
    %v1783 = vmul.f32 %v1767, %v420
    %v1784 = vmul.f32 %v1770, %v420
    %v1785 = vmul.f32 %v1773, %v420
    %v1786 = vmul.f32 %v1776, %v420
    %v1787 = vmul.f32 %v1779, %v420
    %v1788 = vmul.f32 %v1782, %v420
    %v1789 = vsub.f32 %v1757, %v1783
    %v1790 = vsub.f32 %v1758, %v1784
    %v1791 = vsub.f32 %v1759, %v1785
    %v1792 = vsub.f32 %v1760, %v1786
    %v1793 = vsub.f32 %v1761, %v1787
    %v1794 = vsub.f32 %v1762, %v1788
    %v1795 = vmul.f32 %v1789, %v1789
    %v1796 = vmul.f32 %v1790, %v1790
    %v1797 = vmul.f32 %v1791, %v1791
    %v1798 = vmul.f32 %v1792, %v1792
    %v1799 = vmul.f32 %v1793, %v1793
    %v1800 = vmul.f32 %v1794, %v1794
    %v1801 = vsel %vm395, %v1795, 0.0
    %1802 = vadd.xlane.f32.xlu0 %v1801
    %v1803 = vpop.xlane.xlu0 %1802
    %v1804 = vsel %vm395, %v1796, 0.0
    %1805 = vadd.xlane.f32.xlu0 %v1804
    %v1806 = vpop.xlane.xlu0 %1805
    %v1807 = vsel %vm395, %v1797, 0.0
    %1808 = vadd.xlane.f32.xlu0 %v1807
    %v1809 = vpop.xlane.xlu0 %1808
    %v1810 = vsel %vm395, %v1798, 0.0
    %1811 = vadd.xlane.f32.xlu0 %v1810
    %v1812 = vpop.xlane.xlu0 %1811
    %v1813 = vsel %vm395, %v1799, 0.0
    %1814 = vadd.xlane.f32.xlu0 %v1813
    %v1815 = vpop.xlane.xlu0 %1814
    %v1816 = vsel %vm395, %v1800, 0.0
    %1817 = vadd.xlane.f32.xlu0 %v1816
    %v1818 = vpop.xlane.xlu0 %1817
    %v1819 = vmul.f32 %v1803, %v420
    %v1820 = vmul.f32 %v1806, %v420
    %v1821 = vmul.f32 %v1809, %v420
    %v1822 = vmul.f32 %v1812, %v420
    %v1823 = vmul.f32 %v1815, %v420
    %v1824 = vmul.f32 %v1818, %v420
    %v1825 = vadd.f32 %v1819, 1e-05
    %v1826 = vadd.f32 %v1820, 1e-05
    %v1827 = vadd.f32 %v1821, 1e-05
    %v1828 = vadd.f32 %v1822, 1e-05
    %v1829 = vadd.f32 %v1823, 1e-05
    %v1830 = vadd.f32 %v1824, 1e-05
    %v1831 = vrsqrt.pop %v1825
    %v1832 = vmul.f32 %v1831, %v1825
    %v1833 = vmul.f32 %v1832, %v1831
    %v1834 = vmul.f32 0.5, %v1833
    %v1835 = vsub.f32 1.5, %v1834
    %v1836 = vmul.f32 %v1831, %v1835
    %vm1837 = vweird.f32 %v1825
    %vm1838 = vweird.f32 %v1831
    %vm1839 = vmor %vm1837, %vm1838
    %v1840 = vsel %vm1839, %v1831, %v1836
    %v1841 = vrsqrt.pop %v1826
    %v1842 = vmul.f32 %v1841, %v1826
    %v1843 = vmul.f32 %v1842, %v1841
    %v1844 = vmul.f32 0.5, %v1843
    %v1845 = vsub.f32 1.5, %v1844
    %v1846 = vmul.f32 %v1841, %v1845
    %vm1847 = vweird.f32 %v1826
    %vm1848 = vweird.f32 %v1841
    %vm1849 = vmor %vm1847, %vm1848
    %v1850 = vsel %vm1849, %v1841, %v1846
    %v1851 = vrsqrt.pop %v1827
    %v1852 = vmul.f32 %v1851, %v1827
    %v1853 = vmul.f32 %v1852, %v1851
    %v1854 = vmul.f32 0.5, %v1853
    %v1855 = vsub.f32 1.5, %v1854
    %v1856 = vmul.f32 %v1851, %v1855
    %vm1857 = vweird.f32 %v1827
    %vm1858 = vweird.f32 %v1851
    %vm1859 = vmor %vm1857, %vm1858
    %v1860 = vsel %vm1859, %v1851, %v1856
    %v1861 = vrsqrt.pop %v1828
    %v1862 = vmul.f32 %v1861, %v1828
    %v1863 = vmul.f32 %v1862, %v1861
    %v1864 = vmul.f32 0.5, %v1863
    %v1865 = vsub.f32 1.5, %v1864
    %v1866 = vmul.f32 %v1861, %v1865
    %vm1867 = vweird.f32 %v1828
    %vm1868 = vweird.f32 %v1861
    %vm1869 = vmor %vm1867, %vm1868
    %v1870 = vsel %vm1869, %v1861, %v1866
    %v1871 = vrsqrt.pop %v1829
    %v1872 = vmul.f32 %v1871, %v1829
    %v1873 = vmul.f32 %v1872, %v1871
    %v1874 = vmul.f32 0.5, %v1873
    %v1875 = vsub.f32 1.5, %v1874
    %v1876 = vmul.f32 %v1871, %v1875
    %vm1877 = vweird.f32 %v1829
    %vm1878 = vweird.f32 %v1871
    %vm1879 = vmor %vm1877, %vm1878
    %v1880 = vsel %vm1879, %v1871, %v1876
    %v1881 = vrsqrt.pop %v1830
    %v1882 = vmul.f32 %v1881, %v1830
    %v1883 = vmul.f32 %v1882, %v1881
    %v1884 = vmul.f32 0.5, %v1883
    %v1885 = vsub.f32 1.5, %v1884
    %v1886 = vmul.f32 %v1881, %v1885
    %vm1887 = vweird.f32 %v1830
    %vm1888 = vweird.f32 %v1881
    %vm1889 = vmor %vm1887, %vm1888
    %v1890 = vsel %vm1889, %v1881, %v1886
    %v1891 = vmul.f32 %v1789, %v1840
    %v1892 = vmul.f32 %v1790, %v1850
    %v1893 = vmul.f32 %v1791, %v1860
    %v1894 = vmul.f32 %v1792, %v1870
    %v1895 = vmul.f32 %v1793, %v1880
    %v1896 = vmul.f32 %v1794, %v1890
    %v1897 = vperm.slane %v1763, 0
    %v1898 = vmul.f32 %v1891, %v1897
    %v1899 = vmul.f32 %v1892, %v1897
    %v1900 = vmul.f32 %v1893, %v1897
    %v1901 = vmul.f32 %v1894, %v1897
    %v1902 = vmul.f32 %v1895, %v1897
    %v1903 = vmul.f32 %v1896, %v1897
    %v1904 = vperm.slane %v1764, 0
    %v1905 = vadd.f32 %v1898, %v1904
    %v1906 = vadd.f32 %v1899, %v1904
    %v1907 = vadd.f32 %v1900, %v1904
    %v1908 = vadd.f32 %v1901, %v1904
    %v1909 = vadd.f32 %v1902, %v1904
    %v1910 = vadd.f32 %v1903, %v1904
    %v1911 = vld [vmem:[%s2 + $0x8] sm:$0xff]
    %v1912 = vld [vmem:[%s2 + $0x28] sm:$0xff]
    %v1913 = vld [vmem:[%s2 + $0x48] sm:$0xff]
    %v1914 = vld [vmem:[%s2 + $0x68] sm:$0xff]
    %v1915 = vld [vmem:[%s3 + $0x30] sm:$0xff]
    %v1916 = vld [vmem:[%s3 + $0x38] sm:$0xff]
    %v1917 = vld [vmem:[%s3 + $0x40] sm:$0xff]
    %v1918 = vld [vmem:[%s3 + $0x48] sm:$0xff]
    %v1919 = vld [vmem:[%s3 + $0x50] sm:$0xff]
    %v1920 = vld [vmem:[%s3 + $0x58] sm:$0xff]
    %v1921 = vld [vmem:[%s3 + $0x60] sm:$0xff]
    %v1922 = vld [vmem:[%s3 + $0x68] sm:$0xff]
    %v1923 = vld [vmem:[%s4 + $0xa] sm:$0x1]
    %v1924 = vperm.slane %v1923, 0
    %v1926 = vsel %vm395, %v1905, 0
    %v1929 = vsel %vm395, %v1906, 0
    %v1932 = vsel %vm395, %v1907, 0
    %v1935 = vsel %vm395, %v1908, 0
    %v1938 = vsel %vm395, %v1909, 0
    %v1941 = vsel %vm395, %v1910, 0
    %1943 = vmatpush.msra.mxu0 0.0
    %1944 = vmatpush.msra.mxu0 0.0
    %1945 = vmatpush.msra.mxu0 0.0
    %1946 = vmatpush.msra.mxu0 0.0
    %1947 = vmatpush.msra.mxu0 0.0
    %1948 = vmatpush.msra.mxu0 0.0
    %1949 = vmatpush.msra.mxu0 0.0
    %1950 = vmatpush.msra.mxu0 0.0
    %1951 = vmatpush.msra.mxu0 0.0
    %1952 = vmatpush.msra.mxu0 0.0
    %1953 = vmatpush.msra.mxu0 0.0
    %1954 = vmatpush.msra.mxu0 0.0
    %1955 = vmatpush.msra.mxu0 %v1914
    %1956 = vmatpush.msra.mxu0 %v1913
    %1957 = vmatpush.msra.mxu0 %v1912
    %1958 = vmatpush.msra.mxu0 %v1911
    %1959 = vmatmul.f32.gmra.mxu0 %v1926
    %v1960 = vpop.f32.mrf.mxu0
    %v1961 = vadd.f32 %v1924, %v1960
    %1962 = vmatmul.f32.gmra.mxu0 %v1929
    %v1963 = vpop.f32.mrf.mxu0
    %v1964 = vadd.f32 %v1924, %v1963
    %1965 = vmatmul.f32.gmra.mxu0 %v1932
    %v1966 = vpop.f32.mrf.mxu0
    %v1967 = vadd.f32 %v1924, %v1966
    %1968 = vmatmul.f32.gmra.mxu0 %v1935
    %v1969 = vpop.f32.mrf.mxu0
    %v1970 = vadd.f32 %v1924, %v1969
    %1971 = vmatmul.f32.gmra.mxu0 %v1938
    %v1972 = vpop.f32.mrf.mxu0
    %v1973 = vadd.f32 %v1924, %v1972
    %1974 = vmatmul.f32.gmra.mxu0 %v1941
    %v1975 = vpop.f32.mrf.mxu0
    %v1976 = vadd.f32 %v1924, %v1975
    %1977 = vdwg.mxu0
    %v1978 = vmul.f32 %v1961, 0.5
    %v1979 = vmul.f32 %v1964, 0.5
    %v1980 = vmul.f32 %v1967, 0.5
    %v1981 = vmul.f32 %v1970, 0.5
    %v1982 = vmul.f32 %v1973, 0.5
    %v1983 = vmul.f32 %v1976, 0.5
    %v1984 = vmul.f32 %v1961, %v1961
    %v1985 = vmul.f32 %v1964, %v1964
    %v1986 = vmul.f32 %v1967, %v1967
    %v1987 = vmul.f32 %v1970, %v1970
    %v1988 = vmul.f32 %v1973, %v1973
    %v1989 = vmul.f32 %v1976, %v1976
    %v1990 = vmul.f32 %v1984, %v1961
    %v1991 = vmul.f32 %v1985, %v1964
    %v1992 = vmul.f32 %v1986, %v1967
    %v1993 = vmul.f32 %v1987, %v1970
    %v1994 = vmul.f32 %v1988, %v1973
    %v1995 = vmul.f32 %v1989, %v1976
    %v1996 = vmul.f32 %v1990, 0.044715
    %v1997 = vmul.f32 %v1991, 0.044715
    %v1998 = vmul.f32 %v1992, 0.044715
    %v1999 = vmul.f32 %v1993, 0.044715
    %v2000 = vmul.f32 %v1994, 0.044715
    %v2001 = vmul.f32 %v1995, 0.044715
    %v2002 = vadd.f32 %v1961, %v1996
    %v2003 = vadd.f32 %v1964, %v1997
    %v2004 = vadd.f32 %v1967, %v1998
    %v2005 = vadd.f32 %v1970, %v1999
    %v2006 = vadd.f32 %v1973, %v2000
    %v2007 = vadd.f32 %v1976, %v2001
    %v2008 = vmul.f32 %v2002, 0.7978846
    %v2009 = vmul.f32 %v2003, 0.7978846
    %v2010 = vmul.f32 %v2004, 0.7978846
    %v2011 = vmul.f32 %v2005, 0.7978846
    %v2012 = vmul.f32 %v2006, 0.7978846
    %v2013 = vmul.f32 %v2007, 0.7978846
    %v2014 = vtanh.pop %v2008
    %v2015 = vtanh.pop %v2009
    %v2016 = vtanh.pop %v2010
    %v2017 = vtanh.pop %v2011
    %v2018 = vtanh.pop %v2012
    %v2019 = vtanh.pop %v2013
    %v2020 = vadd.f32 %v2014, 1.0
    %v2021 = vadd.f32 %v2015, 1.0
    %v2022 = vadd.f32 %v2016, 1.0
    %v2023 = vadd.f32 %v2017, 1.0
    %v2024 = vadd.f32 %v2018, 1.0
    %v2025 = vadd.f32 %v2019, 1.0
    %v2026 = vmul.f32 %v1978, %v2020
    %v2027 = vmul.f32 %v1979, %v2021
    %v2028 = vmul.f32 %v1980, %v2022
    %v2029 = vmul.f32 %v1981, %v2023
    %v2030 = vmul.f32 %v1982, %v2024
    %v2031 = vmul.f32 %v1983, %v2025
    %vm2032 = vcmask 523264
    %v2034 = vsel %vm2032, %v2026, 0
    %v2037 = vsel %vm2032, %v2027, 0
    %v2040 = vsel %vm2032, %v2028, 0
    %v2043 = vsel %vm2032, %v2029, 0
    %v2046 = vsel %vm2032, %v2030, 0
    %v2049 = vsel %vm2032, %v2031, 0
    %2051 = vmatpush.msra.mxu0 0.0
    %2052 = vmatpush.msra.mxu0 0.0
    %2053 = vmatpush.msra.mxu0 0.0
    %2054 = vmatpush.msra.mxu0 0.0
    %2055 = vmatpush.msra.mxu0 0.0
    %2056 = vmatpush.msra.mxu0 0.0
    %2057 = vmatpush.msra.mxu0 0.0
    %2058 = vmatpush.msra.mxu0 0.0
    %2059 = vmatpush.msra.mxu0 %v1922
    %2060 = vmatpush.msra.mxu0 %v1921
    %2061 = vmatpush.msra.mxu0 %v1920
    %2062 = vmatpush.msra.mxu0 %v1919
    %2063 = vmatpush.msra.mxu0 %v1918
    %2064 = vmatpush.msra.mxu0 %v1917
    %2065 = vmatpush.msra.mxu0 %v1916
    %2066 = vmatpush.msra.mxu0 %v1915
    %2067 = vmatmul.f32.gmra.mxu0 %v2034
    %v2068 = vpop.f32.mrf.mxu0
    %v2069 = vadd.f32 0.0, %v2068
    %2070 = vmatmul.f32.gmra.mxu0 %v2037
    %v2071 = vpop.f32.mrf.mxu0
    %v2072 = vadd.f32 0.0, %v2071
    %2073 = vmatmul.f32.gmra.mxu0 %v2040
    %v2074 = vpop.f32.mrf.mxu0
    %v2075 = vadd.f32 0.0, %v2074
    %2076 = vmatmul.f32.gmra.mxu0 %v2043
    %v2077 = vpop.f32.mrf.mxu0
    %v2078 = vadd.f32 0.0, %v2077
    %2079 = vmatmul.f32.gmra.mxu0 %v2046
    %v2080 = vpop.f32.mrf.mxu0
    %v2081 = vadd.f32 0.0, %v2080
    %2082 = vmatmul.f32.gmra.mxu0 %v2049
    %v2083 = vpop.f32.mrf.mxu0
    %v2084 = vadd.f32 0.0, %v2083
    %2085 = vdwg.mxu0
    %v2086 = vadd.f32 %v1757, %v2069
    %v2087 = vadd.f32 %v1758, %v2072
    %v2088 = vadd.f32 %v1759, %v2075
    %v2089 = vadd.f32 %v1760, %v2078
    %v2090 = vadd.f32 %v1761, %v2081
    %v2091 = vadd.f32 %v1762, %v2084
    %v2092 = vld [vmem:[%s4 + $0xb] sm:$0x1]
    %v2093 = vperm.slane %v2092, 0
    %v2094 = vadd.f32 %v2086, %v2093
    %v2095 = vadd.f32 %v2087, %v2093
    %v2096 = vadd.f32 %v2088, %v2093
    %v2097 = vadd.f32 %v2089, %v2093
    %v2098 = vadd.f32 %v2090, %v2093
    %v2099 = vadd.f32 %v2091, %v2093
    %v2100 = vld [vmem:[%s4 + $0xc] sm:$0x1]
    %v2101 = vld [vmem:[%s4 + $0xd] sm:$0x1]
    %v2102 = vsel %vm395, %v2094, 0.0
    %2103 = vadd.xlane.f32.xlu0 %v2102
    %v2104 = vpop.xlane.xlu0 %2103
    %v2105 = vsel %vm395, %v2095, 0.0
    %2106 = vadd.xlane.f32.xlu0 %v2105
    %v2107 = vpop.xlane.xlu0 %2106
    %v2108 = vsel %vm395, %v2096, 0.0
    %2109 = vadd.xlane.f32.xlu0 %v2108
    %v2110 = vpop.xlane.xlu0 %2109
    %v2111 = vsel %vm395, %v2097, 0.0
    %2112 = vadd.xlane.f32.xlu0 %v2111
    %v2113 = vpop.xlane.xlu0 %2112
    %v2114 = vsel %vm395, %v2098, 0.0
    %2115 = vadd.xlane.f32.xlu0 %v2114
    %v2116 = vpop.xlane.xlu0 %2115
    %v2117 = vsel %vm395, %v2099, 0.0
    %2118 = vadd.xlane.f32.xlu0 %v2117
    %v2119 = vpop.xlane.xlu0 %2118
    %v2120 = vmul.f32 %v2104, %v420
    %v2121 = vmul.f32 %v2107, %v420
    %v2122 = vmul.f32 %v2110, %v420
    %v2123 = vmul.f32 %v2113, %v420
    %v2124 = vmul.f32 %v2116, %v420
    %v2125 = vmul.f32 %v2119, %v420
    %v2126 = vsub.f32 %v2094, %v2120
    %v2127 = vsub.f32 %v2095, %v2121
    %v2128 = vsub.f32 %v2096, %v2122
    %v2129 = vsub.f32 %v2097, %v2123
    %v2130 = vsub.f32 %v2098, %v2124
    %v2131 = vsub.f32 %v2099, %v2125
    %v2132 = vmul.f32 %v2126, %v2126
    %v2133 = vmul.f32 %v2127, %v2127
    %v2134 = vmul.f32 %v2128, %v2128
    %v2135 = vmul.f32 %v2129, %v2129
    %v2136 = vmul.f32 %v2130, %v2130
    %v2137 = vmul.f32 %v2131, %v2131
    %v2138 = vsel %vm395, %v2132, 0.0
    %2139 = vadd.xlane.f32.xlu0 %v2138
    %v2140 = vpop.xlane.xlu0 %2139
    %v2141 = vsel %vm395, %v2133, 0.0
    %2142 = vadd.xlane.f32.xlu0 %v2141
    %v2143 = vpop.xlane.xlu0 %2142
    %v2144 = vsel %vm395, %v2134, 0.0
    %2145 = vadd.xlane.f32.xlu0 %v2144
    %v2146 = vpop.xlane.xlu0 %2145
    %v2147 = vsel %vm395, %v2135, 0.0
    %2148 = vadd.xlane.f32.xlu0 %v2147
    %v2149 = vpop.xlane.xlu0 %2148
    %v2150 = vsel %vm395, %v2136, 0.0
    %2151 = vadd.xlane.f32.xlu0 %v2150
    %v2152 = vpop.xlane.xlu0 %2151
    %v2153 = vsel %vm395, %v2137, 0.0
    %2154 = vadd.xlane.f32.xlu0 %v2153
    %v2155 = vpop.xlane.xlu0 %2154
    %v2156 = vmul.f32 %v2140, %v420
    %v2157 = vmul.f32 %v2143, %v420
    %v2158 = vmul.f32 %v2146, %v420
    %v2159 = vmul.f32 %v2149, %v420
    %v2160 = vmul.f32 %v2152, %v420
    %v2161 = vmul.f32 %v2155, %v420
    %v2162 = vadd.f32 %v2156, 1e-05
    %v2163 = vadd.f32 %v2157, 1e-05
    %v2164 = vadd.f32 %v2158, 1e-05
    %v2165 = vadd.f32 %v2159, 1e-05
    %v2166 = vadd.f32 %v2160, 1e-05
    %v2167 = vadd.f32 %v2161, 1e-05
    %v2168 = vrsqrt.pop %v2162
    %v2169 = vmul.f32 %v2168, %v2162
    %v2170 = vmul.f32 %v2169, %v2168
    %v2171 = vmul.f32 0.5, %v2170
    %v2172 = vsub.f32 1.5, %v2171
    %v2173 = vmul.f32 %v2168, %v2172
    %vm2174 = vweird.f32 %v2162
    %vm2175 = vweird.f32 %v2168
    %vm2176 = vmor %vm2174, %vm2175
    %v2177 = vsel %vm2176, %v2168, %v2173
    %v2178 = vrsqrt.pop %v2163
    %v2179 = vmul.f32 %v2178, %v2163
    %v2180 = vmul.f32 %v2179, %v2178
    %v2181 = vmul.f32 0.5, %v2180
    %v2182 = vsub.f32 1.5, %v2181
    %v2183 = vmul.f32 %v2178, %v2182
    %vm2184 = vweird.f32 %v2163
    %vm2185 = vweird.f32 %v2178
    %vm2186 = vmor %vm2184, %vm2185
    %v2187 = vsel %vm2186, %v2178, %v2183
    %v2188 = vrsqrt.pop %v2164
    %v2189 = vmul.f32 %v2188, %v2164
    %v2190 = vmul.f32 %v2189, %v2188
    %v2191 = vmul.f32 0.5, %v2190
    %v2192 = vsub.f32 1.5, %v2191
    %v2193 = vmul.f32 %v2188, %v2192
    %vm2194 = vweird.f32 %v2164
    %vm2195 = vweird.f32 %v2188
    %vm2196 = vmor %vm2194, %vm2195
    %v2197 = vsel %vm2196, %v2188, %v2193
    %v2198 = vrsqrt.pop %v2165
    %v2199 = vmul.f32 %v2198, %v2165
    %v2200 = vmul.f32 %v2199, %v2198
    %v2201 = vmul.f32 0.5, %v2200
    %v2202 = vsub.f32 1.5, %v2201
    %v2203 = vmul.f32 %v2198, %v2202
    %vm2204 = vweird.f32 %v2165
    %vm2205 = vweird.f32 %v2198
    %vm2206 = vmor %vm2204, %vm2205
    %v2207 = vsel %vm2206, %v2198, %v2203
    %v2208 = vrsqrt.pop %v2166
    %v2209 = vmul.f32 %v2208, %v2166
    %v2210 = vmul.f32 %v2209, %v2208
    %v2211 = vmul.f32 0.5, %v2210
    %v2212 = vsub.f32 1.5, %v2211
    %v2213 = vmul.f32 %v2208, %v2212
    %vm2214 = vweird.f32 %v2166
    %vm2215 = vweird.f32 %v2208
    %vm2216 = vmor %vm2214, %vm2215
    %v2217 = vsel %vm2216, %v2208, %v2213
    %v2218 = vrsqrt.pop %v2167
    %v2219 = vmul.f32 %v2218, %v2167
    %v2220 = vmul.f32 %v2219, %v2218
    %v2221 = vmul.f32 0.5, %v2220
    %v2222 = vsub.f32 1.5, %v2221
    %v2223 = vmul.f32 %v2218, %v2222
    %vm2224 = vweird.f32 %v2167
    %vm2225 = vweird.f32 %v2218
    %vm2226 = vmor %vm2224, %vm2225
    %v2227 = vsel %vm2226, %v2218, %v2223
    %v2228 = vmul.f32 %v2126, %v2177
    %v2229 = vmul.f32 %v2127, %v2187
    %v2230 = vmul.f32 %v2128, %v2197
    %v2231 = vmul.f32 %v2129, %v2207
    %v2232 = vmul.f32 %v2130, %v2217
    %v2233 = vmul.f32 %v2131, %v2227
    %v2234 = vperm.slane %v2100, 0
    %v2235 = vmul.f32 %v2228, %v2234
    %v2236 = vmul.f32 %v2229, %v2234
    %v2237 = vmul.f32 %v2230, %v2234
    %v2238 = vmul.f32 %v2231, %v2234
    %v2239 = vmul.f32 %v2232, %v2234
    %v2240 = vmul.f32 %v2233, %v2234
    %v2241 = vperm.slane %v2101, 0
    %v2242 = vadd.f32 %v2235, %v2241
    %v2243 = vadd.f32 %v2236, %v2241
    %v2244 = vadd.f32 %v2237, %v2241
    %v2245 = vadd.f32 %v2238, %v2241
    %v2246 = vadd.f32 %v2239, %v2241
    %v2247 = vadd.f32 %v2240, %v2241
    %2252 = vrot.lane.b32.xlu0 %v1911, 64
    %v2253 = vpop.permute.xlu0 %2252
    %2254 = vrot.lane.b32.xlu0 %v1912, 64
    %v2255 = vpop.permute.xlu0 %2254
    %2256 = vrot.lane.b32.xlu0 %v1913, 64
    %v2257 = vpop.permute.xlu0 %2256
    %2258 = vrot.lane.b32.xlu0 %v1914, 64
    %v2259 = vpop.permute.xlu0 %2258
    %v2265 = vsel %vm395, %v2242, 0
    %v2268 = vsel %vm395, %v2243, 0
    %v2271 = vsel %vm395, %v2244, 0
    %v2274 = vsel %vm395, %v2245, 0
    %v2277 = vsel %vm395, %v2246, 0
    %v2280 = vsel %vm395, %v2247, 0
    %2282 = vmatpush.msra.mxu0 0.0
    %2283 = vmatpush.msra.mxu0 0.0
    %2284 = vmatpush.msra.mxu0 0.0
    %2285 = vmatpush.msra.mxu0 0.0
    %2286 = vmatpush.msra.mxu0 0.0
    %2287 = vmatpush.msra.mxu0 0.0
    %2288 = vmatpush.msra.mxu0 0.0
    %2289 = vmatpush.msra.mxu0 0.0
    %2290 = vmatpush.msra.mxu0 0.0
    %2291 = vmatpush.msra.mxu0 0.0
    %2292 = vmatpush.msra.mxu0 0.0
    %2293 = vmatpush.msra.mxu0 0.0
    %2294 = vmatpush.msra.mxu0 %v2259
    %2295 = vmatpush.msra.mxu0 %v2257
    %2296 = vmatpush.msra.mxu0 %v2255
    %2297 = vmatpush.msra.mxu0 %v2253
    %2298 = vmatmul.f32.gmra.mxu0 %v2265
    %v2299 = vpop.f32.mrf.mxu0
    %v2300 = vadd.f32 0.0, %v2299
    %2301 = vmatmul.f32.gmra.mxu0 %v2268
    %v2302 = vpop.f32.mrf.mxu0
    %v2303 = vadd.f32 0.0, %v2302
    %2304 = vmatmul.f32.gmra.mxu0 %v2271
    %v2305 = vpop.f32.mrf.mxu0
    %v2306 = vadd.f32 0.0, %v2305
    %2307 = vmatmul.f32.gmra.mxu0 %v2274
    %v2308 = vpop.f32.mrf.mxu0
    %v2309 = vadd.f32 0.0, %v2308
    %2310 = vmatmul.f32.gmra.mxu0 %v2277
    %v2311 = vpop.f32.mrf.mxu0
    %v2312 = vadd.f32 0.0, %v2311
    %2313 = vmatmul.f32.gmra.mxu0 %v2280
    %v2314 = vpop.f32.mrf.mxu0
    %v2315 = vadd.f32 0.0, %v2314
    %2316 = vdwg.mxu0
    %2317 = vrot.lane.b32.xlu0 %v1911, 32
    %v2318 = vpop.permute.xlu0 %2317
    %2319 = vrot.lane.b32.xlu0 %v1912, 32
    %v2320 = vpop.permute.xlu0 %2319
    %2321 = vrot.lane.b32.xlu0 %v1913, 32
    %v2322 = vpop.permute.xlu0 %2321
    %2323 = vrot.lane.b32.xlu0 %v1914, 32
    %v2324 = vpop.permute.xlu0 %2323
    %2329 = vmatpush.msra.mxu0 0.0
    %2330 = vmatpush.msra.mxu0 0.0
    %2331 = vmatpush.msra.mxu0 0.0
    %2332 = vmatpush.msra.mxu0 0.0
    %2333 = vmatpush.msra.mxu0 0.0
    %2334 = vmatpush.msra.mxu0 0.0
    %2335 = vmatpush.msra.mxu0 0.0
    %2336 = vmatpush.msra.mxu0 0.0
    %2337 = vmatpush.msra.mxu0 0.0
    %2338 = vmatpush.msra.mxu0 0.0
    %2339 = vmatpush.msra.mxu0 0.0
    %2340 = vmatpush.msra.mxu0 0.0
    %2341 = vmatpush.msra.mxu0 %v2324
    %2342 = vmatpush.msra.mxu0 %v2322
    %2343 = vmatpush.msra.mxu0 %v2320
    %2344 = vmatpush.msra.mxu0 %v2318
    %2345 = vmatmul.f32.gmra.mxu0 %v2265
    %v2346 = vpop.f32.mrf.mxu0
    %v2347 = vadd.f32 0.0, %v2346
    %2348 = vmatmul.f32.gmra.mxu0 %v2268
    %v2349 = vpop.f32.mrf.mxu0
    %v2350 = vadd.f32 0.0, %v2349
    %2351 = vmatmul.f32.gmra.mxu0 %v2271
    %v2352 = vpop.f32.mrf.mxu0
    %v2353 = vadd.f32 0.0, %v2352
    %2354 = vmatmul.f32.gmra.mxu0 %v2274
    %v2355 = vpop.f32.mrf.mxu0
    %v2356 = vadd.f32 0.0, %v2355
    %2357 = vmatmul.f32.gmra.mxu0 %v2277
    %v2358 = vpop.f32.mrf.mxu0
    %v2359 = vadd.f32 0.0, %v2358
    %2360 = vmatmul.f32.gmra.mxu0 %v2280
    %v2361 = vpop.f32.mrf.mxu0
    %v2362 = vadd.f32 0.0, %v2361
    %2363 = vdwg.mxu0
    %v2364 = vld [vmem:[%s2 + $0x10] sm:$0xff]
    %v2365 = vld [vmem:[%s2 + $0x30] sm:$0xff]
    %v2366 = vld [vmem:[%s2 + $0x50] sm:$0xff]
    %v2367 = vld [vmem:[%s2 + $0x70] sm:$0xff]
    %2368 = vmatpush.msra.mxu0 0.0
    %2369 = vmatpush.msra.mxu0 0.0
    %2370 = vmatpush.msra.mxu0 0.0
    %2371 = vmatpush.msra.mxu0 0.0
    %2372 = vmatpush.msra.mxu0 0.0
    %2373 = vmatpush.msra.mxu0 0.0
    %2374 = vmatpush.msra.mxu0 0.0
    %2375 = vmatpush.msra.mxu0 0.0
    %2376 = vmatpush.msra.mxu0 0.0
    %2377 = vmatpush.msra.mxu0 0.0
    %2378 = vmatpush.msra.mxu0 0.0
    %2379 = vmatpush.msra.mxu0 0.0
    %2380 = vmatpush.msra.mxu0 %v2367
    %2381 = vmatpush.msra.mxu0 %v2366
    %2382 = vmatpush.msra.mxu0 %v2365
    %2383 = vmatpush.msra.mxu0 %v2364
    %2384 = vmatmul.f32.gmra.mxu0 %v2265
    %v2385 = vpop.f32.mrf.mxu0
    %v2386 = vadd.f32 0.0, %v2385
    %2387 = vmatmul.f32.gmra.mxu0 %v2268
    %v2388 = vpop.f32.mrf.mxu0
    %v2389 = vadd.f32 0.0, %v2388
    %2390 = vmatmul.f32.gmra.mxu0 %v2271
    %v2391 = vpop.f32.mrf.mxu0
    %v2392 = vadd.f32 0.0, %v2391
    %2393 = vmatmul.f32.gmra.mxu0 %v2274
    %v2394 = vpop.f32.mrf.mxu0
    %v2395 = vadd.f32 0.0, %v2394
    %2396 = vmatmul.f32.gmra.mxu0 %v2277
    %v2397 = vpop.f32.mrf.mxu0
    %v2398 = vadd.f32 0.0, %v2397
    %2399 = vmatmul.f32.gmra.mxu0 %v2280
    %v2400 = vpop.f32.mrf.mxu0
    %v2401 = vadd.f32 0.0, %v2400
    %2402 = vdwg.mxu0
    %v2403 = vmul.f32 %v2300, %v26
    %v2404 = vmul.f32 %v2303, %v26
    %v2405 = vmul.f32 %v2306, %v26
    %v2406 = vmul.f32 %v2309, %v26
    %v2407 = vmul.f32 %v2312, %v26
    %v2408 = vmul.f32 %v2315, %v26
    %v2410 = vsel %vm395, %v2403, 0
    %v2413 = vsel %vm395, %v2404, 0
    %v2416 = vsel %vm395, %v2405, 0
    %v2419 = vsel %vm395, %v2406, 0
    %v2422 = vsel %vm395, %v2407, 0
    %v2425 = vsel %vm395, %v2408, 0
    %v2428 = vsel %vm395, %v2347, 0
    %v2431 = vsel %vm395, %v2350, 0
    %v2434 = vsel %vm395, %v2353, 0
    %v2437 = vsel %vm395, %v2356, 0
    %v2440 = vsel %vm395, %v2359, 0
    %v2443 = vsel %vm395, %v2362, 0
    %2445 = vmatpush.xpose.msra.mxu0 0.0
    %2446 = vmatpush.xpose.msra.mxu0 0.0
    %2447 = vmatpush.xpose.msra.mxu0 0.0
    %2448 = vmatpush.xpose.msra.mxu0 0.0
    %2449 = vmatpush.xpose.msra.mxu0 0.0
    %2450 = vmatpush.xpose.msra.mxu0 0.0
    %2451 = vmatpush.xpose.msra.mxu0 0.0
    %2452 = vmatpush.xpose.msra.mxu0 0.0
    %2453 = vmatpush.xpose.msra.mxu0 0.0
    %2454 = vmatpush.xpose.msra.mxu0 0.0
    %2455 = vmatpush.xpose.msra.mxu0 %v2443
    %2456 = vmatpush.xpose.msra.mxu0 %v2440
    %2457 = vmatpush.xpose.msra.mxu0 %v2437
    %2458 = vmatpush.xpose.msra.mxu0 %v2434
    %2459 = vmatpush.xpose.msra.mxu0 %v2431
    %2460 = vmatpush.xpose.msra.mxu0 %v2428
    %2461 = vmatmul.f32.gmra.mxu0 %v2410
    %v2462 = vpop.f32.mrf.mxu0
    %v2463 = vadd.f32 0.0, %v2462
    %2464 = vmatmul.f32.gmra.mxu0 %v2413
    %v2465 = vpop.f32.mrf.mxu0
    %v2466 = vadd.f32 0.0, %v2465
    %2467 = vmatmul.f32.gmra.mxu0 %v2416
    %v2468 = vpop.f32.mrf.mxu0
    %v2469 = vadd.f32 0.0, %v2468
    %2470 = vmatmul.f32.gmra.mxu0 %v2419
    %v2471 = vpop.f32.mrf.mxu0
    %v2472 = vadd.f32 0.0, %v2471
    %2473 = vmatmul.f32.gmra.mxu0 %v2422
    %v2474 = vpop.f32.mrf.mxu0
    %v2475 = vadd.f32 0.0, %v2474
    %2476 = vmatmul.f32.gmra.mxu0 %v2425
    %v2477 = vpop.f32.mrf.mxu0
    %v2478 = vadd.f32 0.0, %v2477
    %2479 = vdwg.mxu0
    %v2480 = vmul.f32 %v2463, 0.35355338
    %v2481 = vmul.f32 %v2466, 0.35355338
    %v2482 = vmul.f32 %v2469, 0.35355338
    %v2483 = vmul.f32 %v2472, 0.35355338
    %v2484 = vmul.f32 %v2475, 0.35355338
    %v2485 = vmul.f32 %v2478, 0.35355338
    %v2486 = vadd.f32 %v2480, %v116
    %v2487 = vadd.f32 %v2481, %v117
    %v2488 = vadd.f32 %v2482, %v118
    %v2489 = vadd.f32 %v2483, %v119
    %v2490 = vadd.f32 %v2484, %v120
    %v2491 = vadd.f32 %v2485, %v121
    %v2492 = vsel %vm178, %v2486, -inf
    %2493 = vmax.xlane.f32.xlu0 %v2492
    %v2494 = vpop.xlane.xlu0 %2493
    %v2495 = vsel %vm178, %v2487, -inf
    %2496 = vmax.xlane.f32.xlu0 %v2495
    %v2497 = vpop.xlane.xlu0 %2496
    %v2498 = vsel %vm178, %v2488, -inf
    %2499 = vmax.xlane.f32.xlu0 %v2498
    %v2500 = vpop.xlane.xlu0 %2499
    %v2501 = vsel %vm178, %v2489, -inf
    %2502 = vmax.xlane.f32.xlu0 %v2501
    %v2503 = vpop.xlane.xlu0 %2502
    %v2504 = vsel %vm178, %v2490, -inf
    %2505 = vmax.xlane.f32.xlu0 %v2504
    %v2506 = vpop.xlane.xlu0 %2505
    %v2507 = vsel %vm178, %v2491, -inf
    %2508 = vmax.xlane.f32.xlu0 %v2507
    %v2509 = vpop.xlane.xlu0 %2508
    %v2510 = vsub.f32 %v2486, %v2494
    %v2511 = vsub.f32 %v2487, %v2497
    %v2512 = vsub.f32 %v2488, %v2500
    %v2513 = vsub.f32 %v2489, %v2503
    %v2514 = vsub.f32 %v2490, %v2506
    %v2515 = vsub.f32 %v2491, %v2509
    %v2516 = vmul.f32 %v2510, 1.442695
    %v2517 = vpow.pop %v2516
    %v2518 = vmul.f32 %v2511, 1.442695
    %v2519 = vpow.pop %v2518
    %v2520 = vmul.f32 %v2512, 1.442695
    %v2521 = vpow.pop %v2520
    %v2522 = vmul.f32 %v2513, 1.442695
    %v2523 = vpow.pop %v2522
    %v2524 = vmul.f32 %v2514, 1.442695
    %v2525 = vpow.pop %v2524
    %v2526 = vmul.f32 %v2515, 1.442695
    %v2527 = vpow.pop %v2526
    %v2528 = vsel %vm178, %v2517, 0.0
    %2529 = vadd.xlane.f32.xlu0 %v2528
    %v2530 = vpop.xlane.xlu0 %2529
    %v2531 = vsel %vm178, %v2519, 0.0
    %2532 = vadd.xlane.f32.xlu0 %v2531
    %v2533 = vpop.xlane.xlu0 %2532
    %v2534 = vsel %vm178, %v2521, 0.0
    %2535 = vadd.xlane.f32.xlu0 %v2534
    %v2536 = vpop.xlane.xlu0 %2535
    %v2537 = vsel %vm178, %v2523, 0.0
    %2538 = vadd.xlane.f32.xlu0 %v2537
    %v2539 = vpop.xlane.xlu0 %2538
    %v2540 = vsel %vm178, %v2525, 0.0
    %2541 = vadd.xlane.f32.xlu0 %v2540
    %v2542 = vpop.xlane.xlu0 %2541
    %v2543 = vsel %vm178, %v2527, 0.0
    %2544 = vadd.xlane.f32.xlu0 %v2543
    %v2545 = vpop.xlane.xlu0 %2544
    %v2546 = vrcp.pop %v2530
    %v2547 = vrcp.pop %v2533
    %v2548 = vrcp.pop %v2536
    %v2549 = vrcp.pop %v2539
    %v2550 = vrcp.pop %v2542
    %v2551 = vrcp.pop %v2545
    %v2552 = vmul.f32 %v2517, %v2546
    %v2553 = vmul.f32 %v2519, %v2547
    %v2554 = vmul.f32 %v2521, %v2548
    %v2555 = vmul.f32 %v2523, %v2549
    %v2556 = vmul.f32 %v2525, %v2550
    %v2557 = vmul.f32 %v2527, %v2551
    %v2558 = vmul.f32 %v2386, %v26
    %v2559 = vmul.f32 %v2389, %v26
    %v2560 = vmul.f32 %v2392, %v26
    %v2561 = vmul.f32 %v2395, %v26
    %v2562 = vmul.f32 %v2398, %v26
    %v2563 = vmul.f32 %v2401, %v26
    %v2564 = vmul.f32 %v2300, %v30
    %v2565 = vmul.f32 %v2303, %v30
    %v2566 = vmul.f32 %v2306, %v30
    %v2567 = vmul.f32 %v2309, %v30
    %v2568 = vmul.f32 %v2312, %v30
    %v2569 = vmul.f32 %v2315, %v30
    %v2571 = vsel %vm395, %v2564, 0
    %v2574 = vsel %vm395, %v2565, 0
    %v2577 = vsel %vm395, %v2566, 0
    %v2580 = vsel %vm395, %v2567, 0
    %v2583 = vsel %vm395, %v2568, 0
    %v2586 = vsel %vm395, %v2569, 0
    %2588 = vmatpush.xpose.msra.mxu0 0.0
    %2589 = vmatpush.xpose.msra.mxu0 0.0
    %2590 = vmatpush.xpose.msra.mxu0 0.0
    %2591 = vmatpush.xpose.msra.mxu0 0.0
    %2592 = vmatpush.xpose.msra.mxu0 0.0
    %2593 = vmatpush.xpose.msra.mxu0 0.0
    %2594 = vmatpush.xpose.msra.mxu0 0.0
    %2595 = vmatpush.xpose.msra.mxu0 0.0
    %2596 = vmatpush.xpose.msra.mxu0 0.0
    %2597 = vmatpush.xpose.msra.mxu0 0.0
    %2598 = vmatpush.xpose.msra.mxu0 %v2443
    %2599 = vmatpush.xpose.msra.mxu0 %v2440
    %2600 = vmatpush.xpose.msra.mxu0 %v2437
    %2601 = vmatpush.xpose.msra.mxu0 %v2434
    %2602 = vmatpush.xpose.msra.mxu0 %v2431
    %2603 = vmatpush.xpose.msra.mxu0 %v2428
    %2604 = vmatmul.f32.gmra.mxu0 %v2571
    %v2605 = vpop.f32.mrf.mxu0
    %v2606 = vadd.f32 0.0, %v2605
    %2607 = vmatmul.f32.gmra.mxu0 %v2574
    %v2608 = vpop.f32.mrf.mxu0
    %v2609 = vadd.f32 0.0, %v2608
    %2610 = vmatmul.f32.gmra.mxu0 %v2577
    %v2611 = vpop.f32.mrf.mxu0
    %v2612 = vadd.f32 0.0, %v2611
    %2613 = vmatmul.f32.gmra.mxu0 %v2580
    %v2614 = vpop.f32.mrf.mxu0
    %v2615 = vadd.f32 0.0, %v2614
    %2616 = vmatmul.f32.gmra.mxu0 %v2583
    %v2617 = vpop.f32.mrf.mxu0
    %v2618 = vadd.f32 0.0, %v2617
    %2619 = vmatmul.f32.gmra.mxu0 %v2586
    %v2620 = vpop.f32.mrf.mxu0
    %v2621 = vadd.f32 0.0, %v2620
    %2622 = vdwg.mxu0
    %v2623 = vmul.f32 %v2606, 0.35355338
    %v2624 = vmul.f32 %v2609, 0.35355338
    %v2625 = vmul.f32 %v2612, 0.35355338
    %v2626 = vmul.f32 %v2615, 0.35355338
    %v2627 = vmul.f32 %v2618, 0.35355338
    %v2628 = vmul.f32 %v2621, 0.35355338
    %v2629 = vadd.f32 %v2623, %v116
    %v2630 = vadd.f32 %v2624, %v117
    %v2631 = vadd.f32 %v2625, %v118
    %v2632 = vadd.f32 %v2626, %v119
    %v2633 = vadd.f32 %v2627, %v120
    %v2634 = vadd.f32 %v2628, %v121
    %v2635 = vsel %vm178, %v2629, -inf
    %2636 = vmax.xlane.f32.xlu0 %v2635
    %v2637 = vpop.xlane.xlu0 %2636
    %v2638 = vsel %vm178, %v2630, -inf
    %2639 = vmax.xlane.f32.xlu0 %v2638
    %v2640 = vpop.xlane.xlu0 %2639
    %v2641 = vsel %vm178, %v2631, -inf
    %2642 = vmax.xlane.f32.xlu0 %v2641
    %v2643 = vpop.xlane.xlu0 %2642
    %v2644 = vsel %vm178, %v2632, -inf
    %2645 = vmax.xlane.f32.xlu0 %v2644
    %v2646 = vpop.xlane.xlu0 %2645
    %v2647 = vsel %vm178, %v2633, -inf
    %2648 = vmax.xlane.f32.xlu0 %v2647
    %v2649 = vpop.xlane.xlu0 %2648
    %v2650 = vsel %vm178, %v2634, -inf
    %2651 = vmax.xlane.f32.xlu0 %v2650
    %v2652 = vpop.xlane.xlu0 %2651
    %v2653 = vsub.f32 %v2629, %v2637
    %v2654 = vsub.f32 %v2630, %v2640
    %v2655 = vsub.f32 %v2631, %v2643
    %v2656 = vsub.f32 %v2632, %v2646
    %v2657 = vsub.f32 %v2633, %v2649
    %v2658 = vsub.f32 %v2634, %v2652
    %v2659 = vmul.f32 %v2653, 1.442695
    %v2660 = vpow.pop %v2659
    %v2661 = vmul.f32 %v2654, 1.442695
    %v2662 = vpow.pop %v2661
    %v2663 = vmul.f32 %v2655, 1.442695
    %v2664 = vpow.pop %v2663
    %v2665 = vmul.f32 %v2656, 1.442695
    %v2666 = vpow.pop %v2665
    %v2667 = vmul.f32 %v2657, 1.442695
    %v2668 = vpow.pop %v2667
    %v2669 = vmul.f32 %v2658, 1.442695
    %v2670 = vpow.pop %v2669
    %v2671 = vsel %vm178, %v2660, 0.0
    %2672 = vadd.xlane.f32.xlu0 %v2671
    %v2673 = vpop.xlane.xlu0 %2672
    %v2674 = vsel %vm178, %v2662, 0.0
    %2675 = vadd.xlane.f32.xlu0 %v2674
    %v2676 = vpop.xlane.xlu0 %2675
    %v2677 = vsel %vm178, %v2664, 0.0
    %2678 = vadd.xlane.f32.xlu0 %v2677
    %v2679 = vpop.xlane.xlu0 %2678
    %v2680 = vsel %vm178, %v2666, 0.0
    %2681 = vadd.xlane.f32.xlu0 %v2680
    %v2682 = vpop.xlane.xlu0 %2681
    %v2683 = vsel %vm178, %v2668, 0.0
    %2684 = vadd.xlane.f32.xlu0 %v2683
    %v2685 = vpop.xlane.xlu0 %2684
    %v2686 = vsel %vm178, %v2670, 0.0
    %2687 = vadd.xlane.f32.xlu0 %v2686
    %v2688 = vpop.xlane.xlu0 %2687
    %v2689 = vrcp.pop %v2673
    %v2690 = vrcp.pop %v2676
    %v2691 = vrcp.pop %v2679
    %v2692 = vrcp.pop %v2682
    %v2693 = vrcp.pop %v2685
    %v2694 = vrcp.pop %v2688
    %v2695 = vmul.f32 %v2660, %v2689
    %v2696 = vmul.f32 %v2662, %v2690
    %v2697 = vmul.f32 %v2664, %v2691
    %v2698 = vmul.f32 %v2666, %v2692
    %v2699 = vmul.f32 %v2668, %v2693
    %v2700 = vmul.f32 %v2670, %v2694
    %v2701 = vmul.f32 %v2386, %v30
    %v2702 = vmul.f32 %v2389, %v30
    %v2703 = vmul.f32 %v2392, %v30
    %v2704 = vmul.f32 %v2395, %v30
    %v2705 = vmul.f32 %v2398, %v30
    %v2706 = vmul.f32 %v2401, %v30
    %v2708 = vsel %vm178, %v2695, 0
    %v2711 = vsel %vm178, %v2696, 0
    %v2714 = vsel %vm178, %v2697, 0
    %v2717 = vsel %vm178, %v2698, 0
    %v2720 = vsel %vm178, %v2699, 0
    %v2723 = vsel %vm178, %v2700, 0
    %2725 = vmatpush.msra.mxu0 0.0
    %2726 = vmatpush.msra.mxu0 0.0
    %2727 = vmatpush.msra.mxu0 0.0
    %2728 = vmatpush.msra.mxu0 0.0
    %2729 = vmatpush.msra.mxu0 0.0
    %2730 = vmatpush.msra.mxu0 0.0
    %2731 = vmatpush.msra.mxu0 0.0
    %2732 = vmatpush.msra.mxu0 0.0
    %2733 = vmatpush.msra.mxu0 0.0
    %2734 = vmatpush.msra.mxu0 0.0
    %2735 = vmatpush.msra.mxu0 %v2706
    %2736 = vmatpush.msra.mxu0 %v2705
    %2737 = vmatpush.msra.mxu0 %v2704
    %2738 = vmatpush.msra.mxu0 %v2703
    %2739 = vmatpush.msra.mxu0 %v2702
    %2740 = vmatpush.msra.mxu0 %v2701
    %2741 = vmatmul.f32.gmra.mxu0 %v2708
    %v2742 = vpop.f32.mrf.mxu0
    %v2743 = vadd.f32 0.0, %v2742
    %2744 = vmatmul.f32.gmra.mxu0 %v2711
    %v2745 = vpop.f32.mrf.mxu0
    %v2746 = vadd.f32 0.0, %v2745
    %2747 = vmatmul.f32.gmra.mxu0 %v2714
    %v2748 = vpop.f32.mrf.mxu0
    %v2749 = vadd.f32 0.0, %v2748
    %2750 = vmatmul.f32.gmra.mxu0 %v2717
    %v2751 = vpop.f32.mrf.mxu0
    %v2752 = vadd.f32 0.0, %v2751
    %2753 = vmatmul.f32.gmra.mxu0 %v2720
    %v2754 = vpop.f32.mrf.mxu0
    %v2755 = vadd.f32 0.0, %v2754
    %2756 = vmatmul.f32.gmra.mxu0 %v2723
    %v2757 = vpop.f32.mrf.mxu0
    %v2758 = vadd.f32 0.0, %v2757
    %2759 = vdwg.mxu0
    %v2761 = vsel %vm178, %v2552, 0
    %v2764 = vsel %vm178, %v2553, 0
    %v2767 = vsel %vm178, %v2554, 0
    %v2770 = vsel %vm178, %v2555, 0
    %v2773 = vsel %vm178, %v2556, 0
    %v2776 = vsel %vm178, %v2557, 0
    %2778 = vmatpush.msra.mxu0 0.0
    %2779 = vmatpush.msra.mxu0 0.0
    %2780 = vmatpush.msra.mxu0 0.0
    %2781 = vmatpush.msra.mxu0 0.0
    %2782 = vmatpush.msra.mxu0 0.0
    %2783 = vmatpush.msra.mxu0 0.0
    %2784 = vmatpush.msra.mxu0 0.0
    %2785 = vmatpush.msra.mxu0 0.0
    %2786 = vmatpush.msra.mxu0 0.0
    %2787 = vmatpush.msra.mxu0 0.0
    %2788 = vmatpush.msra.mxu0 %v2563
    %2789 = vmatpush.msra.mxu0 %v2562
    %2790 = vmatpush.msra.mxu0 %v2561
    %2791 = vmatpush.msra.mxu0 %v2560
    %2792 = vmatpush.msra.mxu0 %v2559
    %2793 = vmatpush.msra.mxu0 %v2558
    %2794 = vmatmul.f32.gmra.mxu0 %v2761
    %v2795 = vpop.f32.mrf.mxu0
    %v2796 = vadd.f32 %v2743, %v2795
    %2797 = vmatmul.f32.gmra.mxu0 %v2764
    %v2798 = vpop.f32.mrf.mxu0
    %v2799 = vadd.f32 %v2746, %v2798
    %2800 = vmatmul.f32.gmra.mxu0 %v2767
    %v2801 = vpop.f32.mrf.mxu0
    %v2802 = vadd.f32 %v2749, %v2801
    %2803 = vmatmul.f32.gmra.mxu0 %v2770
    %v2804 = vpop.f32.mrf.mxu0
    %v2805 = vadd.f32 %v2752, %v2804
    %2806 = vmatmul.f32.gmra.mxu0 %v2773
    %v2807 = vpop.f32.mrf.mxu0
    %v2808 = vadd.f32 %v2755, %v2807
    %2809 = vmatmul.f32.gmra.mxu0 %v2776
    %v2810 = vpop.f32.mrf.mxu0
    %v2811 = vadd.f32 %v2758, %v2810
    %2812 = vdwg.mxu0
    %v2813 = vmul.f32 %v2300, %v34
    %v2814 = vmul.f32 %v2303, %v34
    %v2815 = vmul.f32 %v2306, %v34
    %v2816 = vmul.f32 %v2309, %v34
    %v2817 = vmul.f32 %v2312, %v34
    %v2818 = vmul.f32 %v2315, %v34
    %v2820 = vsel %vm395, %v2813, 0
    %v2823 = vsel %vm395, %v2814, 0
    %v2826 = vsel %vm395, %v2815, 0
    %v2829 = vsel %vm395, %v2816, 0
    %v2832 = vsel %vm395, %v2817, 0
    %v2835 = vsel %vm395, %v2818, 0
    %2837 = vmatpush.xpose.msra.mxu0 0.0
    %2838 = vmatpush.xpose.msra.mxu0 0.0
    %2839 = vmatpush.xpose.msra.mxu0 0.0
    %2840 = vmatpush.xpose.msra.mxu0 0.0
    %2841 = vmatpush.xpose.msra.mxu0 0.0
    %2842 = vmatpush.xpose.msra.mxu0 0.0
    %2843 = vmatpush.xpose.msra.mxu0 0.0
    %2844 = vmatpush.xpose.msra.mxu0 0.0
    %2845 = vmatpush.xpose.msra.mxu0 0.0
    %2846 = vmatpush.xpose.msra.mxu0 0.0
    %2847 = vmatpush.xpose.msra.mxu0 %v2443
    %2848 = vmatpush.xpose.msra.mxu0 %v2440
    %2849 = vmatpush.xpose.msra.mxu0 %v2437
    %2850 = vmatpush.xpose.msra.mxu0 %v2434
    %2851 = vmatpush.xpose.msra.mxu0 %v2431
    %2852 = vmatpush.xpose.msra.mxu0 %v2428
    %2853 = vmatmul.f32.gmra.mxu0 %v2820
    %v2854 = vpop.f32.mrf.mxu0
    %v2855 = vadd.f32 0.0, %v2854
    %2856 = vmatmul.f32.gmra.mxu0 %v2823
    %v2857 = vpop.f32.mrf.mxu0
    %v2858 = vadd.f32 0.0, %v2857
    %2859 = vmatmul.f32.gmra.mxu0 %v2826
    %v2860 = vpop.f32.mrf.mxu0
    %v2861 = vadd.f32 0.0, %v2860
    %2862 = vmatmul.f32.gmra.mxu0 %v2829
    %v2863 = vpop.f32.mrf.mxu0
    %v2864 = vadd.f32 0.0, %v2863
    %2865 = vmatmul.f32.gmra.mxu0 %v2832
    %v2866 = vpop.f32.mrf.mxu0
    %v2867 = vadd.f32 0.0, %v2866
    %2868 = vmatmul.f32.gmra.mxu0 %v2835
    %v2869 = vpop.f32.mrf.mxu0
    %v2870 = vadd.f32 0.0, %v2869
    %2871 = vdwg.mxu0
    %v2872 = vmul.f32 %v2855, 0.35355338
    %v2873 = vmul.f32 %v2858, 0.35355338
    %v2874 = vmul.f32 %v2861, 0.35355338
    %v2875 = vmul.f32 %v2864, 0.35355338
    %v2876 = vmul.f32 %v2867, 0.35355338
    %v2877 = vmul.f32 %v2870, 0.35355338
    %v2878 = vadd.f32 %v2872, %v116
    %v2879 = vadd.f32 %v2873, %v117
    %v2880 = vadd.f32 %v2874, %v118
    %v2881 = vadd.f32 %v2875, %v119
    %v2882 = vadd.f32 %v2876, %v120
    %v2883 = vadd.f32 %v2877, %v121
    %v2884 = vsel %vm178, %v2878, -inf
    %2885 = vmax.xlane.f32.xlu0 %v2884
    %v2886 = vpop.xlane.xlu0 %2885
    %v2887 = vsel %vm178, %v2879, -inf
    %2888 = vmax.xlane.f32.xlu0 %v2887
    %v2889 = vpop.xlane.xlu0 %2888
    %v2890 = vsel %vm178, %v2880, -inf
    %2891 = vmax.xlane.f32.xlu0 %v2890
    %v2892 = vpop.xlane.xlu0 %2891
    %v2893 = vsel %vm178, %v2881, -inf
    %2894 = vmax.xlane.f32.xlu0 %v2893
    %v2895 = vpop.xlane.xlu0 %2894
    %v2896 = vsel %vm178, %v2882, -inf
    %2897 = vmax.xlane.f32.xlu0 %v2896
    %v2898 = vpop.xlane.xlu0 %2897
    %v2899 = vsel %vm178, %v2883, -inf
    %2900 = vmax.xlane.f32.xlu0 %v2899
    %v2901 = vpop.xlane.xlu0 %2900
    %v2902 = vsub.f32 %v2878, %v2886
    %v2903 = vsub.f32 %v2879, %v2889
    %v2904 = vsub.f32 %v2880, %v2892
    %v2905 = vsub.f32 %v2881, %v2895
    %v2906 = vsub.f32 %v2882, %v2898
    %v2907 = vsub.f32 %v2883, %v2901
    %v2908 = vmul.f32 %v2902, 1.442695
    %v2909 = vpow.pop %v2908
    %v2910 = vmul.f32 %v2903, 1.442695
    %v2911 = vpow.pop %v2910
    %v2912 = vmul.f32 %v2904, 1.442695
    %v2913 = vpow.pop %v2912
    %v2914 = vmul.f32 %v2905, 1.442695
    %v2915 = vpow.pop %v2914
    %v2916 = vmul.f32 %v2906, 1.442695
    %v2917 = vpow.pop %v2916
    %v2918 = vmul.f32 %v2907, 1.442695
    %v2919 = vpow.pop %v2918
    %v2920 = vsel %vm178, %v2909, 0.0
    %2921 = vadd.xlane.f32.xlu0 %v2920
    %v2922 = vpop.xlane.xlu0 %2921
    %v2923 = vsel %vm178, %v2911, 0.0
    %2924 = vadd.xlane.f32.xlu0 %v2923
    %v2925 = vpop.xlane.xlu0 %2924
    %v2926 = vsel %vm178, %v2913, 0.0
    %2927 = vadd.xlane.f32.xlu0 %v2926
    %v2928 = vpop.xlane.xlu0 %2927
    %v2929 = vsel %vm178, %v2915, 0.0
    %2930 = vadd.xlane.f32.xlu0 %v2929
    %v2931 = vpop.xlane.xlu0 %2930
    %v2932 = vsel %vm178, %v2917, 0.0
    %2933 = vadd.xlane.f32.xlu0 %v2932
    %v2934 = vpop.xlane.xlu0 %2933
    %v2935 = vsel %vm178, %v2919, 0.0
    %2936 = vadd.xlane.f32.xlu0 %v2935
    %v2937 = vpop.xlane.xlu0 %2936
    %v2938 = vrcp.pop %v2922
    %v2939 = vrcp.pop %v2925
    %v2940 = vrcp.pop %v2928
    %v2941 = vrcp.pop %v2931
    %v2942 = vrcp.pop %v2934
    %v2943 = vrcp.pop %v2937
    %v2944 = vmul.f32 %v2909, %v2938
    %v2945 = vmul.f32 %v2911, %v2939
    %v2946 = vmul.f32 %v2913, %v2940
    %v2947 = vmul.f32 %v2915, %v2941
    %v2948 = vmul.f32 %v2917, %v2942
    %v2949 = vmul.f32 %v2919, %v2943
    %v2950 = vmul.f32 %v2386, %v34
    %v2951 = vmul.f32 %v2389, %v34
    %v2952 = vmul.f32 %v2392, %v34
    %v2953 = vmul.f32 %v2395, %v34
    %v2954 = vmul.f32 %v2398, %v34
    %v2955 = vmul.f32 %v2401, %v34
    %v2957 = vsel %vm178, %v2944, 0
    %v2960 = vsel %vm178, %v2945, 0
    %v2963 = vsel %vm178, %v2946, 0
    %v2966 = vsel %vm178, %v2947, 0
    %v2969 = vsel %vm178, %v2948, 0
    %v2972 = vsel %vm178, %v2949, 0
    %2974 = vmatpush.msra.mxu0 0.0
    %2975 = vmatpush.msra.mxu0 0.0
    %2976 = vmatpush.msra.mxu0 0.0
    %2977 = vmatpush.msra.mxu0 0.0
    %2978 = vmatpush.msra.mxu0 0.0
    %2979 = vmatpush.msra.mxu0 0.0
    %2980 = vmatpush.msra.mxu0 0.0
    %2981 = vmatpush.msra.mxu0 0.0
    %2982 = vmatpush.msra.mxu0 0.0
    %2983 = vmatpush.msra.mxu0 0.0
    %2984 = vmatpush.msra.mxu0 %v2955
    %2985 = vmatpush.msra.mxu0 %v2954
    %2986 = vmatpush.msra.mxu0 %v2953
    %2987 = vmatpush.msra.mxu0 %v2952
    %2988 = vmatpush.msra.mxu0 %v2951
    %2989 = vmatpush.msra.mxu0 %v2950
    %2990 = vmatmul.f32.gmra.mxu0 %v2957
    %v2991 = vpop.f32.mrf.mxu0
    %v2992 = vadd.f32 0.0, %v2991
    %2993 = vmatmul.f32.gmra.mxu0 %v2960
    %v2994 = vpop.f32.mrf.mxu0
    %v2995 = vadd.f32 0.0, %v2994
    %2996 = vmatmul.f32.gmra.mxu0 %v2963
    %v2997 = vpop.f32.mrf.mxu0
    %v2998 = vadd.f32 0.0, %v2997
    %2999 = vmatmul.f32.gmra.mxu0 %v2966
    %v3000 = vpop.f32.mrf.mxu0
    %v3001 = vadd.f32 0.0, %v3000
    %3002 = vmatmul.f32.gmra.mxu0 %v2969
    %v3003 = vpop.f32.mrf.mxu0
    %v3004 = vadd.f32 0.0, %v3003
    %3005 = vmatmul.f32.gmra.mxu0 %v2972
    %v3006 = vpop.f32.mrf.mxu0
    %v3007 = vadd.f32 0.0, %v3006
    %3008 = vdwg.mxu0
    %v3009 = vadd.f32 %v2796, %v2992
    %v3010 = vadd.f32 %v2799, %v2995
    %v3011 = vadd.f32 %v2802, %v2998
    %v3012 = vadd.f32 %v2805, %v3001
    %v3013 = vadd.f32 %v2808, %v3004
    %v3014 = vadd.f32 %v2811, %v3007
    %v3015 = vmul.f32 %v2300, %v38
    %v3016 = vmul.f32 %v2303, %v38
    %v3017 = vmul.f32 %v2306, %v38
    %v3018 = vmul.f32 %v2309, %v38
    %v3019 = vmul.f32 %v2312, %v38
    %v3020 = vmul.f32 %v2315, %v38
    %v3022 = vsel %vm395, %v3015, 0
    %v3025 = vsel %vm395, %v3016, 0
    %v3028 = vsel %vm395, %v3017, 0
    %v3031 = vsel %vm395, %v3018, 0
    %v3034 = vsel %vm395, %v3019, 0
    %v3037 = vsel %vm395, %v3020, 0
    %3039 = vmatpush.xpose.msra.mxu0 0.0
    %3040 = vmatpush.xpose.msra.mxu0 0.0
    %3041 = vmatpush.xpose.msra.mxu0 0.0
    %3042 = vmatpush.xpose.msra.mxu0 0.0
    %3043 = vmatpush.xpose.msra.mxu0 0.0
    %3044 = vmatpush.xpose.msra.mxu0 0.0
    %3045 = vmatpush.xpose.msra.mxu0 0.0
    %3046 = vmatpush.xpose.msra.mxu0 0.0
    %3047 = vmatpush.xpose.msra.mxu0 0.0
    %3048 = vmatpush.xpose.msra.mxu0 0.0
    %3049 = vmatpush.xpose.msra.mxu0 %v2443
    %3050 = vmatpush.xpose.msra.mxu0 %v2440
    %3051 = vmatpush.xpose.msra.mxu0 %v2437
    %3052 = vmatpush.xpose.msra.mxu0 %v2434
    %3053 = vmatpush.xpose.msra.mxu0 %v2431
    %3054 = vmatpush.xpose.msra.mxu0 %v2428
    %3055 = vmatmul.f32.gmra.mxu0 %v3022
    %v3056 = vpop.f32.mrf.mxu0
    %v3057 = vadd.f32 0.0, %v3056
    %3058 = vmatmul.f32.gmra.mxu0 %v3025
    %v3059 = vpop.f32.mrf.mxu0
    %v3060 = vadd.f32 0.0, %v3059
    %3061 = vmatmul.f32.gmra.mxu0 %v3028
    %v3062 = vpop.f32.mrf.mxu0
    %v3063 = vadd.f32 0.0, %v3062
    %3064 = vmatmul.f32.gmra.mxu0 %v3031
    %v3065 = vpop.f32.mrf.mxu0
    %v3066 = vadd.f32 0.0, %v3065
    %3067 = vmatmul.f32.gmra.mxu0 %v3034
    %v3068 = vpop.f32.mrf.mxu0
    %v3069 = vadd.f32 0.0, %v3068
    %3070 = vmatmul.f32.gmra.mxu0 %v3037
    %v3071 = vpop.f32.mrf.mxu0
    %v3072 = vadd.f32 0.0, %v3071
    %3073 = vdwg.mxu0
    %v3074 = vmul.f32 %v3057, 0.35355338
    %v3075 = vmul.f32 %v3060, 0.35355338
    %v3076 = vmul.f32 %v3063, 0.35355338
    %v3077 = vmul.f32 %v3066, 0.35355338
    %v3078 = vmul.f32 %v3069, 0.35355338
    %v3079 = vmul.f32 %v3072, 0.35355338
    %v3080 = vadd.f32 %v3074, %v116
    %v3081 = vadd.f32 %v3075, %v117
    %v3082 = vadd.f32 %v3076, %v118
    %v3083 = vadd.f32 %v3077, %v119
    %v3084 = vadd.f32 %v3078, %v120
    %v3085 = vadd.f32 %v3079, %v121
    %v3086 = vsel %vm178, %v3080, -inf
    %3087 = vmax.xlane.f32.xlu0 %v3086
    %v3088 = vpop.xlane.xlu0 %3087
    %v3089 = vsel %vm178, %v3081, -inf
    %3090 = vmax.xlane.f32.xlu0 %v3089
    %v3091 = vpop.xlane.xlu0 %3090
    %v3092 = vsel %vm178, %v3082, -inf
    %3093 = vmax.xlane.f32.xlu0 %v3092
    %v3094 = vpop.xlane.xlu0 %3093
    %v3095 = vsel %vm178, %v3083, -inf
    %3096 = vmax.xlane.f32.xlu0 %v3095
    %v3097 = vpop.xlane.xlu0 %3096
    %v3098 = vsel %vm178, %v3084, -inf
    %3099 = vmax.xlane.f32.xlu0 %v3098
    %v3100 = vpop.xlane.xlu0 %3099
    %v3101 = vsel %vm178, %v3085, -inf
    %3102 = vmax.xlane.f32.xlu0 %v3101
    %v3103 = vpop.xlane.xlu0 %3102
    %v3104 = vsub.f32 %v3080, %v3088
    %v3105 = vsub.f32 %v3081, %v3091
    %v3106 = vsub.f32 %v3082, %v3094
    %v3107 = vsub.f32 %v3083, %v3097
    %v3108 = vsub.f32 %v3084, %v3100
    %v3109 = vsub.f32 %v3085, %v3103
    %v3110 = vmul.f32 %v3104, 1.442695
    %v3111 = vpow.pop %v3110
    %v3112 = vmul.f32 %v3105, 1.442695
    %v3113 = vpow.pop %v3112
    %v3114 = vmul.f32 %v3106, 1.442695
    %v3115 = vpow.pop %v3114
    %v3116 = vmul.f32 %v3107, 1.442695
    %v3117 = vpow.pop %v3116
    %v3118 = vmul.f32 %v3108, 1.442695
    %v3119 = vpow.pop %v3118
    %v3120 = vmul.f32 %v3109, 1.442695
    %v3121 = vpow.pop %v3120
    %v3122 = vsel %vm178, %v3111, 0.0
    %3123 = vadd.xlane.f32.xlu0 %v3122
    %v3124 = vpop.xlane.xlu0 %3123
    %v3125 = vsel %vm178, %v3113, 0.0
    %3126 = vadd.xlane.f32.xlu0 %v3125
    %v3127 = vpop.xlane.xlu0 %3126
    %v3128 = vsel %vm178, %v3115, 0.0
    %3129 = vadd.xlane.f32.xlu0 %v3128
    %v3130 = vpop.xlane.xlu0 %3129
    %v3131 = vsel %vm178, %v3117, 0.0
    %3132 = vadd.xlane.f32.xlu0 %v3131
    %v3133 = vpop.xlane.xlu0 %3132
    %v3134 = vsel %vm178, %v3119, 0.0
    %3135 = vadd.xlane.f32.xlu0 %v3134
    %v3136 = vpop.xlane.xlu0 %3135
    %v3137 = vsel %vm178, %v3121, 0.0
    %3138 = vadd.xlane.f32.xlu0 %v3137
    %v3139 = vpop.xlane.xlu0 %3138
    %v3140 = vrcp.pop %v3124
    %v3141 = vrcp.pop %v3127
    %v3142 = vrcp.pop %v3130
    %v3143 = vrcp.pop %v3133
    %v3144 = vrcp.pop %v3136
    %v3145 = vrcp.pop %v3139
    %v3146 = vmul.f32 %v3111, %v3140
    %v3147 = vmul.f32 %v3113, %v3141
    %v3148 = vmul.f32 %v3115, %v3142
    %v3149 = vmul.f32 %v3117, %v3143
    %v3150 = vmul.f32 %v3119, %v3144
    %v3151 = vmul.f32 %v3121, %v3145
    %v3152 = vmul.f32 %v2386, %v38
    %v3153 = vmul.f32 %v2389, %v38
    %v3154 = vmul.f32 %v2392, %v38
    %v3155 = vmul.f32 %v2395, %v38
    %v3156 = vmul.f32 %v2398, %v38
    %v3157 = vmul.f32 %v2401, %v38
    %v3159 = vsel %vm178, %v3146, 0
    %v3162 = vsel %vm178, %v3147, 0
    %v3165 = vsel %vm178, %v3148, 0
    %v3168 = vsel %vm178, %v3149, 0
    %v3171 = vsel %vm178, %v3150, 0
    %v3174 = vsel %vm178, %v3151, 0
    %3176 = vmatpush.msra.mxu0 0.0
    %3177 = vmatpush.msra.mxu0 0.0
    %3178 = vmatpush.msra.mxu0 0.0
    %3179 = vmatpush.msra.mxu0 0.0
    %3180 = vmatpush.msra.mxu0 0.0
    %3181 = vmatpush.msra.mxu0 0.0
    %3182 = vmatpush.msra.mxu0 0.0
    %3183 = vmatpush.msra.mxu0 0.0
    %3184 = vmatpush.msra.mxu0 0.0
    %3185 = vmatpush.msra.mxu0 0.0
    %3186 = vmatpush.msra.mxu0 %v3157
    %3187 = vmatpush.msra.mxu0 %v3156
    %3188 = vmatpush.msra.mxu0 %v3155
    %3189 = vmatpush.msra.mxu0 %v3154
    %3190 = vmatpush.msra.mxu0 %v3153
    %3191 = vmatpush.msra.mxu0 %v3152
    %3192 = vmatmul.f32.gmra.mxu0 %v3159
    %v3193 = vpop.f32.mrf.mxu0
    %v3194 = vadd.f32 0.0, %v3193
    %3195 = vmatmul.f32.gmra.mxu0 %v3162
    %v3196 = vpop.f32.mrf.mxu0
    %v3197 = vadd.f32 0.0, %v3196
    %3198 = vmatmul.f32.gmra.mxu0 %v3165
    %v3199 = vpop.f32.mrf.mxu0
    %v3200 = vadd.f32 0.0, %v3199
    %3201 = vmatmul.f32.gmra.mxu0 %v3168
    %v3202 = vpop.f32.mrf.mxu0
    %v3203 = vadd.f32 0.0, %v3202
    %3204 = vmatmul.f32.gmra.mxu0 %v3171
    %v3205 = vpop.f32.mrf.mxu0
    %v3206 = vadd.f32 0.0, %v3205
    %3207 = vmatmul.f32.gmra.mxu0 %v3174
    %v3208 = vpop.f32.mrf.mxu0
    %v3209 = vadd.f32 0.0, %v3208
    %3210 = vdwg.mxu0
    %v3211 = vadd.f32 %v3009, %v3194
    %v3212 = vadd.f32 %v3010, %v3197
    %v3213 = vadd.f32 %v3011, %v3200
    %v3214 = vadd.f32 %v3012, %v3203
    %v3215 = vadd.f32 %v3013, %v3206
    %v3216 = vadd.f32 %v3014, %v3209
    %3221 = vrot.lane.b32.xlu0 %v2364, 96
    %v3222 = vpop.permute.xlu0 %3221
    %3223 = vrot.lane.b32.xlu0 %v2365, 96
    %v3224 = vpop.permute.xlu0 %3223
    %3225 = vrot.lane.b32.xlu0 %v2366, 96
    %v3226 = vpop.permute.xlu0 %3225
    %3227 = vrot.lane.b32.xlu0 %v2367, 96
    %v3228 = vpop.permute.xlu0 %3227
    %v3234 = vsel %vm395, %v3211, 0
    %v3237 = vsel %vm395, %v3212, 0
    %v3240 = vsel %vm395, %v3213, 0
    %v3243 = vsel %vm395, %v3214, 0
    %v3246 = vsel %vm395, %v3215, 0
    %v3249 = vsel %vm395, %v3216, 0
    %3251 = vmatpush.msra.mxu0 0.0
    %3252 = vmatpush.msra.mxu0 0.0
    %3253 = vmatpush.msra.mxu0 0.0
    %3254 = vmatpush.msra.mxu0 0.0
    %3255 = vmatpush.msra.mxu0 0.0
    %3256 = vmatpush.msra.mxu0 0.0
    %3257 = vmatpush.msra.mxu0 0.0
    %3258 = vmatpush.msra.mxu0 0.0
    %3259 = vmatpush.msra.mxu0 0.0
    %3260 = vmatpush.msra.mxu0 0.0
    %3261 = vmatpush.msra.mxu0 0.0
    %3262 = vmatpush.msra.mxu0 0.0
    %3263 = vmatpush.msra.mxu0 %v3228
    %3264 = vmatpush.msra.mxu0 %v3226
    %3265 = vmatpush.msra.mxu0 %v3224
    %3266 = vmatpush.msra.mxu0 %v3222
    %3267 = vmatmul.f32.gmra.mxu0 %v3234
    %v3268 = vpop.f32.mrf.mxu0
    %v3269 = vadd.f32 0.0, %v3268
    %3270 = vmatmul.f32.gmra.mxu0 %v3237
    %v3271 = vpop.f32.mrf.mxu0
    %v3272 = vadd.f32 0.0, %v3271
    %3273 = vmatmul.f32.gmra.mxu0 %v3240
    %v3274 = vpop.f32.mrf.mxu0
    %v3275 = vadd.f32 0.0, %v3274
    %3276 = vmatmul.f32.gmra.mxu0 %v3243
    %v3277 = vpop.f32.mrf.mxu0
    %v3278 = vadd.f32 0.0, %v3277
    %3279 = vmatmul.f32.gmra.mxu0 %v3246
    %v3280 = vpop.f32.mrf.mxu0
    %v3281 = vadd.f32 0.0, %v3280
    %3282 = vmatmul.f32.gmra.mxu0 %v3249
    %v3283 = vpop.f32.mrf.mxu0
    %v3284 = vadd.f32 0.0, %v3283
    %3285 = vdwg.mxu0
    %v3286 = vadd.f32 %v2094, %v3269
    %v3287 = vadd.f32 %v2095, %v3272
    %v3288 = vadd.f32 %v2096, %v3275
    %v3289 = vadd.f32 %v2097, %v3278
    %v3290 = vadd.f32 %v2098, %v3281
    %v3291 = vadd.f32 %v2099, %v3284
    %v3292 = vld [vmem:[%s4 + $0xe] sm:$0x1]
    %v3293 = vperm.slane %v3292, 0
    %v3294 = vadd.f32 %v3286, %v3293
    %v3295 = vadd.f32 %v3287, %v3293
    %v3296 = vadd.f32 %v3288, %v3293
    %v3297 = vadd.f32 %v3289, %v3293
    %v3298 = vadd.f32 %v3290, %v3293
    %v3299 = vadd.f32 %v3291, %v3293
    %v3300 = vld [vmem:[%s4 + $0xf] sm:$0x1]
    %v3301 = vld [vmem:[%s4 + $0x10] sm:$0x1]
    %v3302 = vsel %vm395, %v3294, 0.0
    %3303 = vadd.xlane.f32.xlu0 %v3302
    %v3304 = vpop.xlane.xlu0 %3303
    %v3305 = vsel %vm395, %v3295, 0.0
    %3306 = vadd.xlane.f32.xlu0 %v3305
    %v3307 = vpop.xlane.xlu0 %3306
    %v3308 = vsel %vm395, %v3296, 0.0
    %3309 = vadd.xlane.f32.xlu0 %v3308
    %v3310 = vpop.xlane.xlu0 %3309
    %v3311 = vsel %vm395, %v3297, 0.0
    %3312 = vadd.xlane.f32.xlu0 %v3311
    %v3313 = vpop.xlane.xlu0 %3312
    %v3314 = vsel %vm395, %v3298, 0.0
    %3315 = vadd.xlane.f32.xlu0 %v3314
    %v3316 = vpop.xlane.xlu0 %3315
    %v3317 = vsel %vm395, %v3299, 0.0
    %3318 = vadd.xlane.f32.xlu0 %v3317
    %v3319 = vpop.xlane.xlu0 %3318
    %v3320 = vmul.f32 %v3304, %v420
    %v3321 = vmul.f32 %v3307, %v420
    %v3322 = vmul.f32 %v3310, %v420
    %v3323 = vmul.f32 %v3313, %v420
    %v3324 = vmul.f32 %v3316, %v420
    %v3325 = vmul.f32 %v3319, %v420
    %v3326 = vsub.f32 %v3294, %v3320
    %v3327 = vsub.f32 %v3295, %v3321
    %v3328 = vsub.f32 %v3296, %v3322
    %v3329 = vsub.f32 %v3297, %v3323
    %v3330 = vsub.f32 %v3298, %v3324
    %v3331 = vsub.f32 %v3299, %v3325
    %v3332 = vmul.f32 %v3326, %v3326
    %v3333 = vmul.f32 %v3327, %v3327
    %v3334 = vmul.f32 %v3328, %v3328
    %v3335 = vmul.f32 %v3329, %v3329
    %v3336 = vmul.f32 %v3330, %v3330
    %v3337 = vmul.f32 %v3331, %v3331
    %v3338 = vsel %vm395, %v3332, 0.0
    %3339 = vadd.xlane.f32.xlu0 %v3338
    %v3340 = vpop.xlane.xlu0 %3339
    %v3341 = vsel %vm395, %v3333, 0.0
    %3342 = vadd.xlane.f32.xlu0 %v3341
    %v3343 = vpop.xlane.xlu0 %3342
    %v3344 = vsel %vm395, %v3334, 0.0
    %3345 = vadd.xlane.f32.xlu0 %v3344
    %v3346 = vpop.xlane.xlu0 %3345
    %v3347 = vsel %vm395, %v3335, 0.0
    %3348 = vadd.xlane.f32.xlu0 %v3347
    %v3349 = vpop.xlane.xlu0 %3348
    %v3350 = vsel %vm395, %v3336, 0.0
    %3351 = vadd.xlane.f32.xlu0 %v3350
    %v3352 = vpop.xlane.xlu0 %3351
    %v3353 = vsel %vm395, %v3337, 0.0
    %3354 = vadd.xlane.f32.xlu0 %v3353
    %v3355 = vpop.xlane.xlu0 %3354
    %v3356 = vmul.f32 %v3340, %v420
    %v3357 = vmul.f32 %v3343, %v420
    %v3358 = vmul.f32 %v3346, %v420
    %v3359 = vmul.f32 %v3349, %v420
    %v3360 = vmul.f32 %v3352, %v420
    %v3361 = vmul.f32 %v3355, %v420
    %v3362 = vadd.f32 %v3356, 1e-05
    %v3363 = vadd.f32 %v3357, 1e-05
    %v3364 = vadd.f32 %v3358, 1e-05
    %v3365 = vadd.f32 %v3359, 1e-05
    %v3366 = vadd.f32 %v3360, 1e-05
    %v3367 = vadd.f32 %v3361, 1e-05
    %v3368 = vrsqrt.pop %v3362
    %v3369 = vmul.f32 %v3368, %v3362
    %v3370 = vmul.f32 %v3369, %v3368
    %v3371 = vmul.f32 0.5, %v3370
    %v3372 = vsub.f32 1.5, %v3371
    %v3373 = vmul.f32 %v3368, %v3372
    %vm3374 = vweird.f32 %v3362
    %vm3375 = vweird.f32 %v3368
    %vm3376 = vmor %vm3374, %vm3375
    %v3377 = vsel %vm3376, %v3368, %v3373
    %v3378 = vrsqrt.pop %v3363
    %v3379 = vmul.f32 %v3378, %v3363
    %v3380 = vmul.f32 %v3379, %v3378
    %v3381 = vmul.f32 0.5, %v3380
    %v3382 = vsub.f32 1.5, %v3381
    %v3383 = vmul.f32 %v3378, %v3382
    %vm3384 = vweird.f32 %v3363
    %vm3385 = vweird.f32 %v3378
    %vm3386 = vmor %vm3384, %vm3385
    %v3387 = vsel %vm3386, %v3378, %v3383
    %v3388 = vrsqrt.pop %v3364
    %v3389 = vmul.f32 %v3388, %v3364
    %v3390 = vmul.f32 %v3389, %v3388
    %v3391 = vmul.f32 0.5, %v3390
    %v3392 = vsub.f32 1.5, %v3391
    %v3393 = vmul.f32 %v3388, %v3392
    %vm3394 = vweird.f32 %v3364
    %vm3395 = vweird.f32 %v3388
    %vm3396 = vmor %vm3394, %vm3395
    %v3397 = vsel %vm3396, %v3388, %v3393
    %v3398 = vrsqrt.pop %v3365
    %v3399 = vmul.f32 %v3398, %v3365
    %v3400 = vmul.f32 %v3399, %v3398
    %v3401 = vmul.f32 0.5, %v3400
    %v3402 = vsub.f32 1.5, %v3401
    %v3403 = vmul.f32 %v3398, %v3402
    %vm3404 = vweird.f32 %v3365
    %vm3405 = vweird.f32 %v3398
    %vm3406 = vmor %vm3404, %vm3405
    %v3407 = vsel %vm3406, %v3398, %v3403
    %v3408 = vrsqrt.pop %v3366
    %v3409 = vmul.f32 %v3408, %v3366
    %v3410 = vmul.f32 %v3409, %v3408
    %v3411 = vmul.f32 0.5, %v3410
    %v3412 = vsub.f32 1.5, %v3411
    %v3413 = vmul.f32 %v3408, %v3412
    %vm3414 = vweird.f32 %v3366
    %vm3415 = vweird.f32 %v3408
    %vm3416 = vmor %vm3414, %vm3415
    %v3417 = vsel %vm3416, %v3408, %v3413
    %v3418 = vrsqrt.pop %v3367
    %v3419 = vmul.f32 %v3418, %v3367
    %v3420 = vmul.f32 %v3419, %v3418
    %v3421 = vmul.f32 0.5, %v3420
    %v3422 = vsub.f32 1.5, %v3421
    %v3423 = vmul.f32 %v3418, %v3422
    %vm3424 = vweird.f32 %v3367
    %vm3425 = vweird.f32 %v3418
    %vm3426 = vmor %vm3424, %vm3425
    %v3427 = vsel %vm3426, %v3418, %v3423
    %v3428 = vmul.f32 %v3326, %v3377
    %v3429 = vmul.f32 %v3327, %v3387
    %v3430 = vmul.f32 %v3328, %v3397
    %v3431 = vmul.f32 %v3329, %v3407
    %v3432 = vmul.f32 %v3330, %v3417
    %v3433 = vmul.f32 %v3331, %v3427
    %v3434 = vperm.slane %v3300, 0
    %v3435 = vmul.f32 %v3428, %v3434
    %v3436 = vmul.f32 %v3429, %v3434
    %v3437 = vmul.f32 %v3430, %v3434
    %v3438 = vmul.f32 %v3431, %v3434
    %v3439 = vmul.f32 %v3432, %v3434
    %v3440 = vmul.f32 %v3433, %v3434
    %v3441 = vperm.slane %v3301, 0
    %v3442 = vadd.f32 %v3435, %v3441
    %v3443 = vadd.f32 %v3436, %v3441
    %v3444 = vadd.f32 %v3437, %v3441
    %v3445 = vadd.f32 %v3438, %v3441
    %v3446 = vadd.f32 %v3439, %v3441
    %v3447 = vadd.f32 %v3440, %v3441
    %v3448 = vld [vmem:[%s3 + $0x70] sm:$0xff]
    %v3449 = vld [vmem:[%s3 + $0x78] sm:$0xff]
    %v3450 = vld [vmem:[%s3 + $0x80] sm:$0xff]
    %v3451 = vld [vmem:[%s3 + $0x88] sm:$0xff]
    %v3452 = vld [vmem:[%s3 + $0x90] sm:$0xff]
    %v3453 = vld [vmem:[%s3 + $0x98] sm:$0xff]
    %v3454 = vld [vmem:[%s3 + $0xa0] sm:$0xff]
    %v3455 = vld [vmem:[%s3 + $0xa8] sm:$0xff]
    %v3456 = vld [vmem:[%s4 + $0x11] sm:$0x1]
    %v3457 = vperm.slane %v3456, 0
    %3458 = vrot.lane.b32.xlu0 %v2364, 64
    %v3459 = vpop.permute.xlu0 %3458
    %3460 = vrot.lane.b32.xlu0 %v2365, 64
    %v3461 = vpop.permute.xlu0 %3460
    %3462 = vrot.lane.b32.xlu0 %v2366, 64
    %v3463 = vpop.permute.xlu0 %3462
    %3464 = vrot.lane.b32.xlu0 %v2367, 64
    %v3465 = vpop.permute.xlu0 %3464
    %v3471 = vsel %vm395, %v3442, 0
    %v3474 = vsel %vm395, %v3443, 0
    %v3477 = vsel %vm395, %v3444, 0
    %v3480 = vsel %vm395, %v3445, 0
    %v3483 = vsel %vm395, %v3446, 0
    %v3486 = vsel %vm395, %v3447, 0
    %3488 = vmatpush.msra.mxu0 0.0
    %3489 = vmatpush.msra.mxu0 0.0
    %3490 = vmatpush.msra.mxu0 0.0
    %3491 = vmatpush.msra.mxu0 0.0
    %3492 = vmatpush.msra.mxu0 0.0
    %3493 = vmatpush.msra.mxu0 0.0
    %3494 = vmatpush.msra.mxu0 0.0
    %3495 = vmatpush.msra.mxu0 0.0
    %3496 = vmatpush.msra.mxu0 0.0
    %3497 = vmatpush.msra.mxu0 0.0
    %3498 = vmatpush.msra.mxu0 0.0
    %3499 = vmatpush.msra.mxu0 0.0
    %3500 = vmatpush.msra.mxu0 %v3465
    %3501 = vmatpush.msra.mxu0 %v3463
    %3502 = vmatpush.msra.mxu0 %v3461
    %3503 = vmatpush.msra.mxu0 %v3459
    %3504 = vmatmul.f32.gmra.mxu0 %v3471
    %v3505 = vpop.f32.mrf.mxu0
    %v3506 = vadd.f32 %v3457, %v3505
    %3507 = vmatmul.f32.gmra.mxu0 %v3474
    %v3508 = vpop.f32.mrf.mxu0
    %v3509 = vadd.f32 %v3457, %v3508
    %3510 = vmatmul.f32.gmra.mxu0 %v3477
    %v3511 = vpop.f32.mrf.mxu0
    %v3512 = vadd.f32 %v3457, %v3511
    %3513 = vmatmul.f32.gmra.mxu0 %v3480
    %v3514 = vpop.f32.mrf.mxu0
    %v3515 = vadd.f32 %v3457, %v3514
    %3516 = vmatmul.f32.gmra.mxu0 %v3483
    %v3517 = vpop.f32.mrf.mxu0
    %v3518 = vadd.f32 %v3457, %v3517
    %3519 = vmatmul.f32.gmra.mxu0 %v3486
    %v3520 = vpop.f32.mrf.mxu0
    %v3521 = vadd.f32 %v3457, %v3520
    %3522 = vdwg.mxu0
    %v3523 = vmul.f32 %v3506, 0.5
    %v3524 = vmul.f32 %v3509, 0.5
    %v3525 = vmul.f32 %v3512, 0.5
    %v3526 = vmul.f32 %v3515, 0.5
    %v3527 = vmul.f32 %v3518, 0.5
    %v3528 = vmul.f32 %v3521, 0.5
    %v3529 = vmul.f32 %v3506, %v3506
    %v3530 = vmul.f32 %v3509, %v3509
    %v3531 = vmul.f32 %v3512, %v3512
    %v3532 = vmul.f32 %v3515, %v3515
    %v3533 = vmul.f32 %v3518, %v3518
    %v3534 = vmul.f32 %v3521, %v3521
    %v3535 = vmul.f32 %v3529, %v3506
    %v3536 = vmul.f32 %v3530, %v3509
    %v3537 = vmul.f32 %v3531, %v3512
    %v3538 = vmul.f32 %v3532, %v3515
    %v3539 = vmul.f32 %v3533, %v3518
    %v3540 = vmul.f32 %v3534, %v3521
    %v3541 = vmul.f32 %v3535, 0.044715
    %v3542 = vmul.f32 %v3536, 0.044715
    %v3543 = vmul.f32 %v3537, 0.044715
    %v3544 = vmul.f32 %v3538, 0.044715
    %v3545 = vmul.f32 %v3539, 0.044715
    %v3546 = vmul.f32 %v3540, 0.044715
    %v3547 = vadd.f32 %v3506, %v3541
    %v3548 = vadd.f32 %v3509, %v3542
    %v3549 = vadd.f32 %v3512, %v3543
    %v3550 = vadd.f32 %v3515, %v3544
    %v3551 = vadd.f32 %v3518, %v3545
    %v3552 = vadd.f32 %v3521, %v3546
    %v3553 = vmul.f32 %v3547, 0.7978846
    %v3554 = vmul.f32 %v3548, 0.7978846
    %v3555 = vmul.f32 %v3549, 0.7978846
    %v3556 = vmul.f32 %v3550, 0.7978846
    %v3557 = vmul.f32 %v3551, 0.7978846
    %v3558 = vmul.f32 %v3552, 0.7978846
    %v3559 = vtanh.pop %v3553
    %v3560 = vtanh.pop %v3554
    %v3561 = vtanh.pop %v3555
    %v3562 = vtanh.pop %v3556
    %v3563 = vtanh.pop %v3557
    %v3564 = vtanh.pop %v3558
    %v3565 = vadd.f32 %v3559, 1.0
    %v3566 = vadd.f32 %v3560, 1.0
    %v3567 = vadd.f32 %v3561, 1.0
    %v3568 = vadd.f32 %v3562, 1.0
    %v3569 = vadd.f32 %v3563, 1.0
    %v3570 = vadd.f32 %v3564, 1.0
    %v3571 = vmul.f32 %v3523, %v3565
    %v3572 = vmul.f32 %v3524, %v3566
    %v3573 = vmul.f32 %v3525, %v3567
    %v3574 = vmul.f32 %v3526, %v3568
    %v3575 = vmul.f32 %v3527, %v3569
    %v3576 = vmul.f32 %v3528, %v3570
    %v3578 = vsel %vm2032, %v3571, 0
    %v3581 = vsel %vm2032, %v3572, 0
    %v3584 = vsel %vm2032, %v3573, 0
    %v3587 = vsel %vm2032, %v3574, 0
    %v3590 = vsel %vm2032, %v3575, 0
    %v3593 = vsel %vm2032, %v3576, 0
    %3595 = vmatpush.msra.mxu0 0.0
    %3596 = vmatpush.msra.mxu0 0.0
    %3597 = vmatpush.msra.mxu0 0.0
    %3598 = vmatpush.msra.mxu0 0.0
    %3599 = vmatpush.msra.mxu0 0.0
    %3600 = vmatpush.msra.mxu0 0.0
    %3601 = vmatpush.msra.mxu0 0.0
    %3602 = vmatpush.msra.mxu0 0.0
    %3603 = vmatpush.msra.mxu0 %v3455
    %3604 = vmatpush.msra.mxu0 %v3454
    %3605 = vmatpush.msra.mxu0 %v3453
    %3606 = vmatpush.msra.mxu0 %v3452
    %3607 = vmatpush.msra.mxu0 %v3451
    %3608 = vmatpush.msra.mxu0 %v3450
    %3609 = vmatpush.msra.mxu0 %v3449
    %3610 = vmatpush.msra.mxu0 %v3448
    %3611 = vmatmul.f32.gmra.mxu0 %v3578
    %v3612 = vpop.f32.mrf.mxu0
    %v3613 = vadd.f32 0.0, %v3612
    %3614 = vmatmul.f32.gmra.mxu0 %v3581
    %v3615 = vpop.f32.mrf.mxu0
    %3616 = vmatmul.f32.gmra.mxu0 %v3584
    %v3617 = vpop.f32.mrf.mxu0
    %3618 = vmatmul.f32.gmra.mxu0 %v3587
    %v3619 = vpop.f32.mrf.mxu0
    %v3620 = vadd.f32 0.0, %v3619
    %3621 = vmatmul.f32.gmra.mxu0 %v3590
    %v3622 = vpop.f32.mrf.mxu0
    %3623 = vmatmul.f32.gmra.mxu0 %v3593
    %v3624 = vpop.f32.mrf.mxu0
    %3625 = vdwg.mxu0
    %v3626 = vadd.f32 %v3294, %v3613
    %v3627 = vadd.f32 %v3297, %v3620
    %v3628 = vld [vmem:[%s4 + $0x12] sm:$0x1]
    %v3629 = vperm.slane %v3628, 0
    %v3630 = vadd.f32 %v3626, %v3629
    %v3631 = vadd.f32 %v3627, %v3629
    %v3633 = vrot.slane %v3631, 7
    %vm3635 = vcmask 1040384
    %v3636 = vsel %vm3635, %v3630, %v3633
    %v3637 = vld [vmem:[%s4 + $0x13] sm:$0x1]
    %v3638 = vld [vmem:[%s4 + $0x14] sm:$0x1]
    %vm3639 = vcmask 254976
    %v3640 = vsel %vm3639, %v3636, 0.0
    %3641 = vadd.xlane.f32.xlu0 %v3640
    %v3642 = vpop.xlane.xlu0 %3641
    %v3643 = vmul.f32 %v3642, %v420
    %v3644 = vsub.f32 %v3636, %v3643
    %v3645 = vmul.f32 %v3644, %v3644
    %v3646 = vsel %vm3639, %v3645, 0.0
    %3647 = vadd.xlane.f32.xlu0 %v3646
    %v3648 = vpop.xlane.xlu0 %3647
    %v3649 = vmul.f32 %v3648, %v420
    %v3650 = vadd.f32 %v3649, 1e-05
    %v3651 = vrsqrt.pop %v3650
    %v3652 = vmul.f32 %v3651, %v3650
    %v3653 = vmul.f32 %v3652, %v3651
    %v3654 = vmul.f32 0.5, %v3653
    %v3655 = vsub.f32 1.5, %v3654
    %v3656 = vmul.f32 %v3651, %v3655
    %vm3657 = vweird.f32 %v3650
    %vm3658 = vweird.f32 %v3651
    %vm3659 = vmor %vm3657, %vm3658
    %v3660 = vsel %vm3659, %v3651, %v3656
    %v3661 = vmul.f32 %v3644, %v3660
    %v3662 = vperm.slane %v3637, 0
    %v3663 = vmul.f32 %v3661, %v3662
    %v3664 = vperm.slane %v3638, 0
    %v3665 = vadd.f32 %v3663, %v3664
    %v3666 = vld [vmem:[%s2 + $0x18] sm:$0xff]
    %v3667 = vld [vmem:[%s2 + $0x38] sm:$0xff]
    %v3668 = vld [vmem:[%s2 + $0x58] sm:$0xff]
    %v3669 = vld [vmem:[%s2 + $0x78] sm:$0xff]
    %v3670 = vld [vmem:[%s4 + $0x15] sm:$0x1]
    %v3671 = vperm.slane %v3670, 0
    %v3673 = vsel %vm395, %v3665, 0
    %3675 = vmatpush.msra.mxu0 0.0
    %3676 = vmatpush.msra.mxu0 0.0
    %3677 = vmatpush.msra.mxu0 0.0
    %3678 = vmatpush.msra.mxu0 0.0
    %3679 = vmatpush.msra.mxu0 0.0
    %3680 = vmatpush.msra.mxu0 0.0
    %3681 = vmatpush.msra.mxu0 0.0
    %3682 = vmatpush.msra.mxu0 0.0
    %3683 = vmatpush.msra.mxu0 0.0
    %3684 = vmatpush.msra.mxu0 0.0
    %3685 = vmatpush.msra.mxu0 0.0
    %3686 = vmatpush.msra.mxu0 0.0
    %3687 = vmatpush.msra.mxu0 %v3669
    %3688 = vmatpush.msra.mxu0 %v3668
    %3689 = vmatpush.msra.mxu0 %v3667
    %3690 = vmatpush.msra.mxu0 %v3666
    %3691 = vmatmul.f32.gmra.mxu0 %v3673
    %v3692 = vpop.f32.mrf.mxu0
    %v3693 = vadd.f32 %v3671, %v3692
    %3694 = vdwg.mxu0
    %3695 = vst [vmem:[#allocation2] sm:$0x3] %v3693
    // Predicated region
    $region22: #{vit_forward.1} parent=1 // pred_check
      _
    $region23: #{vit_forward.1} parent=1 // pred_check_branch
      %3697 = sbr.rel (0) target = $region25
    $region24: #{vit_forward.1} parent=1 // pred_region
      %3699 = vsyncadd [#allocation3], 0
      %s3701 = sshll.u32 [#allocation2], 4
      %s3702 = int_to_ptr.vmem [resolvable:$true] %s3701
      %s3703 = sshll.u32 %s5, 4
      %s3704 = int_to_ptr.hbm [resolvable:$true] %s3703
      %3706 = dma.vmem_to_hbm [thread:$0]  %s3702, 32, %s3704, [#allocation3]
    $region25: #{vit_forward.1} parent=1 // pred_fallthru
      _
    // Predicated region
    $region26: #{vit_forward.1} parent=1 // pred_check
      _
    $region27: #{vit_forward.1} parent=1 // pred_check_branch
      %3708 = sbr.rel (0) target = $region29
    $region28: #{vit_forward.1} parent=1 // pred_region
      %3710 = dma.done [#allocation3], 32
    $region29: #{vit_forward.1} parent=1 // pred_fallthru
      _
    %3711 = vsyncpa [#allocation3], 1

</llo_original>
